<compile_context>
chip_gen: v5e
topology: v5e:2x2
jax: 0.10.0
libtpu: 0.0.40
codegen_flags: <defaults>
</compile_context>

<pallas_src>
import math
from functools import partial

import jax
import jax.numpy as jnp
from jax.experimental import pallas as pl
from jax.experimental.pallas import tpu as pltpu

_MM_DTYPE = jnp.bfloat16  # MXU input dtype (f32 accumulation)
_LN_EPS = 1e-5


# ----------------------------------------------------------------------------
# In-kernel helpers
# ----------------------------------------------------------------------------
def _mm(a, b):
    """a @ b with bf16 MXU inputs and f32 accumulation."""
    return jax.lax.dot_general(
        a.astype(_MM_DTYPE), b.astype(_MM_DTYPE),
        dimension_numbers=(((1,), (0,)), ((), ())),
        preferred_element_type=jnp.float32)


def _mm_t(a, b):
    """a @ b.T (contract last dims of both), bf16 in / f32 out."""
    return jax.lax.dot_general(
        a.astype(_MM_DTYPE), b.astype(_MM_DTYPE),
        dimension_numbers=(((1,), (1,)), ((), ())),
        preferred_element_type=jnp.float32)


def _layer_norm(x, g, b, eps=_LN_EPS):
    mu = jnp.mean(x, axis=-1, keepdims=True)
    xc = x - mu
    var = jnp.mean(xc * xc, axis=-1, keepdims=True)
    return xc * jax.lax.rsqrt(var + eps) * g + b


def _softplus(x):
    # stable softplus using only exp/log/abs/max (VPU/EUP friendly)
    return jnp.maximum(x, 0.0) + jnp.log(1.0 + jnp.exp(-jnp.abs(x)))


def _attend(q, k, v, num_heads, head_dim):
    """Multi-head attention (q pre-scaled); heads concatenated to (rows, E)."""
    heads = []
    for hh in range(num_heads):
        sl = slice(hh * head_dim, (hh + 1) * head_dim)
        s = _mm_t(q[:, sl], k[:, sl])                          # (rows, keys)
        s = s - jnp.max(s, axis=-1, keepdims=True)
        p = jnp.exp(s)
        p = p * pl.reciprocal(jnp.sum(p, axis=-1, keepdims=True), approx=True)
        heads.append(_mm(p, v[:, sl]))                         # (rows, dh)
    return jnp.concatenate(heads, axis=-1)                     # (rows, E)


# ----------------------------------------------------------------------------
# Fused encoder kernel: one batch item per grid step.
# Emits the decoder cross-attention K/V cache (bf16) for every decoder layer.
# ----------------------------------------------------------------------------
def _encoder_kernel(
    x_ref,
    ei_w_ref, ei_b_ref,
    sa_w_ref, sa_b_ref, sao_w_ref, sao_b_ref,
    ln1_g_ref, ln1_b_ref,
    w1_ref, b1_ref, w2_ref, b2_ref,
    ln2_g_ref, ln2_b_ref,
    ng_ref, nb_ref,
    ca_kv_w_ref, ca_kv_b_ref,
    kv_ref,
    *, d_model, num_heads):

    E = d_model
    nh = num_heads
    dh = E // nh
    inv_sqrt_dh = 1.0 / math.sqrt(dh)
    n_enc_layers = sa_w_ref.shape[0]
    n_dec_layers = ca_kv_w_ref.shape[0]

    h = _mm(x_ref[0], ei_w_ref[...]) + ei_b_ref[...]            # (C, E)

    # TODO(synk): unrolled Python loop is fine for small layer counts; switch
    # to lax.fori_loop over the stacked weight refs for deep stacks to bound
    # vreg live ranges.
    for l in range(n_enc_layers):
        qkv = _mm(h, sa_w_ref[l]) + sa_b_ref[l]                 # (C, 3E)
        q = qkv[:, :E] * inv_sqrt_dh
        k = qkv[:, E:2 * E]
        v = qkv[:, 2 * E:]
        attn = _attend(q, k, v, nh, dh)                         # (C, E)
        a = _mm(attn, sao_w_ref[l]) + sao_b_ref[l]
        h = _layer_norm(h + a, ln1_g_ref[l], ln1_b_ref[l])

        f = jnp.maximum(_mm(h, w1_ref[l]) + b1_ref[l], 0.0)
        f = _mm(f, w2_ref[l]) + b2_ref[l]
        h = _layer_norm(h + f, ln2_g_ref[l], ln2_b_ref[l])

    h = _layer_norm(h, ng_ref[...], nb_ref[...])                # encoder memory

    # Pre-compute decoder cross-attention K/V for every decoder layer so the
    # sampling decoder never touches the memory or the K/V weights again.
    for l in range(n_dec_layers):
        kv_ref[0, l] = (_mm(h, ca_kv_w_ref[l]) + ca_kv_b_ref[l]).astype(kv_ref.dtype)


# ----------------------------------------------------------------------------
# Fused autoregressive sampling-decoder kernel, grid = (N, prediction_length)
# ----------------------------------------------------------------------------
def _decoder_kernel(
    # per-item / per-step data
    kv_ref, scale_ref, hist0_ref, const_ref, eps_ref,
    # resident weights
    di_w_lags_ref,
    sa_v_w_ref, sa_v_b_ref, sao_w_ref, sao_b_ref,
    ca_q_w_ref, ca_q_b_ref, cao_w_ref, cao_b_ref,
    ln1_g_ref, ln1_b_ref, ln2_g_ref, ln2_b_ref, ln3_g_ref, ln3_b_ref,
    w1_ref, b1_ref, w2_ref, b2_ref,
    dn_g_ref, dn_b_ref, head_w_ref, head_b_ref,
    # output + scratch
    out_ref, hist_ref,
    *, d_model, num_heads, num_samples, history_length, prediction_length,
    lags_seq):

    E = d_model
    nh = num_heads
    dh = E // nh
    inv_sqrt_dh = 1.0 / math.sqrt(dh)
    n_layers = sa_v_w_ref.shape[0]
    S = num_samples
    H = history_length
    P = prediction_length
    HP = H + P
    p = pl.program_id(1)

    # one-time per batch item: seed the running history (shared across samples)
    @pl.when(p == 0)
    def _init():
        hist_ref[...] = jnp.broadcast_to(hist0_ref[0], (S, HP))

    hist = hist_ref[...]                                        # (S, HP)
    scale = scale_ref[0]                                        # (1, 1)

    # lagged target values for this step via exact in-kernel one-hot selects
    # (no per-step selector DMAs, no dynamic minor-dim slicing).
    lane = jax.lax.broadcasted_iota(jnp.int32, (S, HP), 1)
    lag_w = di_w_lags_ref[...]                                  # (n_lags, E) f32
    h_lags = None
    for i, lag in enumerate(lags_seq):
        m = (lane == (H + p - lag)).astype(jnp.float32)         # (S, HP)
        val = jnp.sum(hist * m, axis=1, keepdims=True)          # (S, 1)
        term = val * lag_w[i:i + 1, :]                          # (S, E)
        h_lags = term if h_lags is None else h_lags + term

    # decoder-input projection: lag part in-kernel, time/static part host-precomputed
    h = h_lags / scale + const_ref[0, 0]                        # (S, E)

    for l in range(n_layers):
        # target length is 1 in the sampling loop -> softmax over a single key
        # is exactly 1, so self-attention reduces to the value projection.
        v = _mm(h, sa_v_w_ref[l]) + sa_v_b_ref[l]
        sa = _mm(v, sao_w_ref[l]) + sao_b_ref[l]
        h = _layer_norm(h + sa, ln1_g_ref[l], ln1_b_ref[l])

        # cross-attention against this item's cached encoder K/V (bf16)
        q = (_mm(h, ca_q_w_ref[l]) + ca_q_b_ref[l]) * inv_sqrt_dh
        kv = kv_ref[0, l]                                       # (C, 2E) bf16
        attn = _attend(q, kv[:, :E], kv[:, E:], nh, dh)         # (S, E)
        ca = _mm(attn, cao_w_ref[l]) + cao_b_ref[l]
        h = _layer_norm(h + ca, ln2_g_ref[l], ln2_b_ref[l])

        # position-wise feed-forward (relu)
        f = jnp.maximum(_mm(h, w1_ref[l]) + b1_ref[l], 0.0)
        f = _mm(f, w2_ref[l]) + b2_ref[l]
        h = _layer_norm(h + f, ln3_g_ref[l], ln3_b_ref[l])

    h = _layer_norm(h, dn_g_ref[...], dn_b_ref[...])

    # fused Gaussian head: [mu | raw_sigma] -> sample = (mu + sigma*eps)*scale
    head = _mm(h, head_w_ref[...]) + head_b_ref[...]            # (S, 2)
    mu = head[:, 0:1]
    sigma = _softplus(head[:, 1:2])
    sample = (mu + sigma * eps_ref[0, 0]) * scale               # (S, 1)

    # append the new sample to the running history (VMEM-only one-hot column
    # update; avoids dynamic lane-dim stores for cross-version compile safety)
    col = jax.lax.broadcasted_iota(jnp.int32, (S, HP), 1)
    hist_new = jnp.where(col == H + p, sample, hist)
    hist_ref[...] = hist_new

    # lane-dense HBM writeback: emit all P samples once per batch item
    @pl.when(p == P - 1)
    def _emit():
        out_ref[0] = hist_new[:, H:].astype(out_ref.dtype)


# ----------------------------------------------------------------------------
# Parameter packing (stack per-layer weights; matmul weights pre-cast to bf16)
# ----------------------------------------------------------------------------
def _bf16(x):
    return x.astype(jnp.bfloat16)


def _pack_encoder(params):
    enc, dec = params["encoder"], params["decoder"]
    E = params["enc_in_w"].shape[1]
    el, dl = enc["layers"], dec["layers"]
    stk = lambda layers, f: jnp.stack([f(lp) for lp in layers])
    return (
        _bf16(params["enc_in_w"]), params["enc_in_b"],
        _bf16(stk(el, lambda p: p["self_attn"]["in_w"])),
        stk(el, lambda p: p["self_attn"]["in_b"]),
        _bf16(stk(el, lambda p: p["self_attn"]["out_w"])),
        stk(el, lambda p: p["self_attn"]["out_b"]),
        stk(el, lambda p: p["ln1_g"]), stk(el, lambda p: p["ln1_b"]),
        _bf16(stk(el, lambda p: p["w1"])), stk(el, lambda p: p["b1"]),
        _bf16(stk(el, lambda p: p["w2"])), stk(el, lambda p: p["b2"]),
        stk(el, lambda p: p["ln2_g"]), stk(el, lambda p: p["ln2_b"]),
        enc["norm_g"], enc["norm_b"],
        # decoder cross-attn K/V columns (only used to build the K/V cache)
        _bf16(stk(dl, lambda p: p["cross_attn"]["in_w"][:, E:])),
        stk(dl, lambda p: p["cross_attn"]["in_b"][:, E:]),
    )


def _pack_decoder(params, di_w_lags):
    dec = params["decoder"]
    E = params["dec_in_w"].shape[1]
    dl = dec["layers"]
    stk = lambda f: jnp.stack([f(lp) for lp in dl])
    return (
        di_w_lags,                                                       # f32
        _bf16(stk(lambda p: p["self_attn"]["in_w"][:, 2 * E:])),         # V cols only
        stk(lambda p: p["self_attn"]["in_b"][:, 2 * E:]),
        _bf16(stk(lambda p: p["self_attn"]["out_w"])),
        stk(lambda p: p["self_attn"]["out_b"]),
        _bf16(stk(lambda p: p["cross_attn"]["in_w"][:, :E])),            # Q cols only
        stk(lambda p: p["cross_attn"]["in_b"][:, :E]),
        _bf16(stk(lambda p: p["cross_attn"]["out_w"])),
        stk(lambda p: p["cross_attn"]["out_b"]),
        stk(lambda p: p["ln1_g"]), stk(lambda p: p["ln1_b"]),
        stk(lambda p: p["ln2_g"]), stk(lambda p: p["ln2_b"]),
        stk(lambda p: p["ln3_g"]), stk(lambda p: p["ln3_b"]),
        _bf16(stk(lambda p: p["w1"])), stk(lambda p: p["b1"]),
        _bf16(stk(lambda p: p["w2"])), stk(lambda p: p["b2"]),
        dec["norm_g"], dec["norm_b"],
        _bf16(jnp.concatenate([params["proj_mu_w"], params["proj_sigma_w"]], axis=1)),
        jnp.concatenate([params["proj_mu_b"], params["proj_sigma_b"]], axis=1),
    )


def _vmem_limit(arrays, out_bytes=0, scratch_bytes=0):
    total = sum(int(a.size) * a.dtype.itemsize for a in arrays)
    total += int(out_bytes) + int(scratch_bytes)
    # double-buffer margin + compiler headroom, clamped to be v7x-safe (64 MiB)
    return int(min(max(2 * total + (4 << 20), 32 << 20), 64 << 20))


# ----------------------------------------------------------------------------
# Kernel wrappers
# ----------------------------------------------------------------------------
def run_encoder(inputs, params, cfg):
    """inputs: (N, C, input_size) -> decoder cross-attn K/V cache
    (N, n_dec_layers, C, 2*d_model) in bf16."""
    N, C, I = inputs.shape
    E = cfg["d_model"]
    Ld = cfg["num_decoder_layers"]
    weights = _pack_encoder(params)

    def resident(a):
        nd = a.ndim
        return pl.BlockSpec(a.shape, lambda n, _nd=nd: (0,) * _nd)

    out_bytes = N * Ld * C * 2 * E * 2
    return pl.pallas_call(
        partial(_encoder_kernel, d_model=E, num_heads=cfg["num_heads"]),
        grid=(N,),
        out_shape=jax.ShapeDtypeStruct((N, Ld, C, 2 * E), jnp.bfloat16),
        in_specs=[pl.BlockSpec((1, C, I), lambda n: (n, 0, 0))]
                 + [resident(w) for w in weights],
        out_specs=pl.BlockSpec((1, Ld, C, 2 * E), lambda n: (n, 0, 0, 0)),
        compiler_params=pltpu.CompilerParams(
            dimension_semantics=("parallel",),
            vmem_limit_bytes=_vmem_limit((inputs,) + tuple(weights),
                                         out_bytes=out_bytes)),
    )(inputs, *weights)


def run_sampling_decoder(params, cfg, key, kv, static_feat, past_target,
                         time_feat, scale):
    N = past_target.shape[0]
    S = cfg["num_parallel_samples"]
    P = cfg["prediction_length"]
    H = cfg["history_length"]
    C = cfg["context_length"]
    E = cfg["d_model"]
    Ld = cfg["num_decoder_layers"]
    Ft = time_feat.shape[-1]
    n_lags = len(cfg["lags_seq"])

    # --- tiny host-side (XLA) prep -------------------------------------------
    # split the decoder-input Linear by feature group; precompute the per-step
    # constant part (time features + static features + bias) on the host.
    di_w = params["dec_in_w"]
    di_w_lags = di_w[:n_lags]                                   # (n_lags, E)
    di_w_tf = di_w[n_lags:n_lags + Ft]
    di_w_st = di_w[n_lags + Ft:]
    dec_const = (jnp.einsum("npf,fe->npe", time_feat, di_w_tf)
                 + (static_feat @ di_w_st)[:, None, :]
                 + params["dec_in_b"]).reshape(N, P, 1, E)      # (N, P, 1, E)

    scale_in = scale.reshape(N, 1, 1)
    hist0 = jnp.concatenate(
        [past_target, jnp.zeros((N, P), jnp.float32)], axis=1).reshape(N, 1, H + P)
    eps = jax.random.normal(key, (N, P, S, 1), jnp.float32)

    weights = _pack_decoder(params, di_w_lags)

    def resident(a):
        nd = a.ndim
        return pl.BlockSpec(a.shape, lambda n, p, _nd=nd: (0,) * _nd)

    in_specs = [
        pl.BlockSpec((1, Ld, C, 2 * E), lambda n, p: (n, 0, 0, 0)),   # kv cache
        pl.BlockSpec((1, 1, 1), lambda n, p: (n, 0, 0)),              # scale
        pl.BlockSpec((1, 1, H + P), lambda n, p: (n, 0, 0)),          # history seed
        pl.BlockSpec((1, 1, 1, E), lambda n, p: (n, p, 0, 0)),        # per-step const
        pl.BlockSpec((1, 1, S, 1), lambda n, p: (n, p, 0, 0)),        # per-step noise
    ] + [resident(w) for w in weights]

    samples = pl.pallas_call(
        partial(_decoder_kernel, d_model=E, num_heads=cfg["num_heads"],
                num_samples=S, history_length=H, prediction_length=P,
                lags_seq=tuple(cfg["lags_seq"])),
        grid=(N, P),
        out_shape=jax.ShapeDtypeStruct((N, S, P), jnp.float32),
        in_specs=in_specs,
        out_specs=pl.BlockSpec((1, S, P), lambda n, p: (n, 0, 0)),
        scratch_shapes=[pltpu.VMEM((S, H + P), jnp.float32)],
        compiler_params=pltpu.CompilerParams(
            dimension_semantics=("parallel", "arbitrary"),
            vmem_limit_bytes=_vmem_limit(
                (kv, scale_in, hist0, dec_const, eps) + tuple(weights),
                out_bytes=N * S * P * 4,
                scratch_bytes=S * (H + P) * 4)),
    )(kv, scale_in, hist0, dec_const, eps, *weights)
    return samples                                               # (N, S, P)


# ----------------------------------------------------------------------------
# Model glue (plain XLA; sub-vreg sized)
# ----------------------------------------------------------------------------
def get_lagged_subsequences(sequence, sequence_length, indices, subsequences_length=1):
    assert max(indices) + subsequences_length <= sequence_length
    lagged = []
    for lag_index in indices:
        begin = sequence_length - lag_index - subsequences_length
        end = sequence_length - lag_index
        lagged.append(sequence[:, begin:end, ...])
    return jnp.stack(lagged, axis=-1)


def feature_embedder(feat_static_cat, tables):
    outs = []
    for i, tbl in enumerate(tables):
        idx = feat_static_cat[:, i].astype(jnp.int32)
        outs.append(jnp.take(tbl, idx, axis=0))
    return jnp.concatenate(outs, axis=-1)


def mean_scaler(data, observed, minimum_scale=1e-10):
    """pts MeanScaler(keepdim=True) on (N, T) inputs -> (N, 1) scale."""
    num_observed = jnp.sum(observed, axis=1, keepdims=True)
    sum_observed = jnp.sum(jnp.abs(data) * observed, axis=1, keepdims=True)
    total_observed = jnp.sum(num_observed, axis=0, keepdims=True)
    default_scale = jnp.sum(sum_observed, axis=0, keepdims=True) / jnp.maximum(
        total_observed, 1.0)
    scale = sum_observed / jnp.maximum(num_observed, 1.0)
    scale = jnp.where(sum_observed > 0.0, scale, default_scale)
    return jnp.maximum(scale, minimum_scale)


def create_network_input(params, cfg, feat_static_cat, feat_static_real,
                         past_time_feat, past_target, past_observed_values):
    C = cfg["context_length"]
    H = cfg["history_length"]
    time_feat = past_time_feat[:, H - C:, :]
    lags = get_lagged_subsequences(past_target, H, cfg["lags_seq"], C)      # (N,C,I)
    scale = mean_scaler(past_target[:, -C:], past_observed_values[:, -C:])  # (N,1)
    embedded_cat = feature_embedder(feat_static_cat, params["embed_tables"])
    static_feat = jnp.concatenate(
        [embedded_cat, feat_static_real, jnp.log(scale)], axis=1)
    repeated_static_feat = jnp.broadcast_to(
        static_feat[:, None, :], (static_feat.shape[0], C, static_feat.shape[1]))
    lags_scaled = lags / scale[:, :, None]
    inputs = jnp.concatenate([lags_scaled, time_feat, repeated_static_feat], axis=-1)
    return inputs, scale, static_feat


def forward(params, cfg, key, feat_static_cat, feat_static_real, past_time_feat,
            past_target, past_observed_values, future_time_feat):
    inputs, scale, static_feat = create_network_input(
        params, cfg, feat_static_cat, feat_static_real,
        past_time_feat, past_target, past_observed_values)
    kv = run_encoder(inputs, params, cfg)          # (N, Ld, C, 2E) bf16 K/V cache
    return run_sampling_decoder(
        params, cfg, key, kv, static_feat, past_target, future_time_feat, scale)


# ----------------------------------------------------------------------------
# Deterministic parameter initialization
# ----------------------------------------------------------------------------
class _KeyGen:
    def __init__(self, key):
        self.key = key

    def __call__(self):
        self.key, sub = jax.random.split(self.key)
        return sub


def _dense_init(kg, din, dout):
    w = jax.random.normal(kg(), (din, dout), jnp.float32) * (1.0 / math.sqrt(din))
    b = jax.random.normal(kg(), (1, dout), jnp.float32) * 0.01
    return w, b


def _mha_init(kg, e):
    in_w = jax.random.normal(kg(), (e, 3 * e), jnp.float32) * (1.0 / math.sqrt(e))
    in_b = jnp.zeros((1, 3 * e), jnp.float32)
    out_w, out_b = _dense_init(kg, e, e)
    return {"in_w": in_w, "in_b": in_b, "out_w": out_w, "out_b": out_b}


def _ln_init(e):
    return jnp.ones((1, e), jnp.float32), jnp.zeros((1, e), jnp.float32)


def _enc_layer_init(kg, e, ff):
    w1, b1 = _dense_init(kg, e, ff)
    w2, b2 = _dense_init(kg, ff, e)
    g1, be1 = _ln_init(e)
    g2, be2 = _ln_init(e)
    return {"self_attn": _mha_init(kg, e), "w1": w1, "b1": b1, "w2": w2, "b2": b2,
            "ln1_g": g1, "ln1_b": be1, "ln2_g": g2, "ln2_b": be2}


def _dec_layer_init(kg, e, ff):
    p = _enc_layer_init(kg, e, ff)
    p["cross_attn"] = _mha_init(kg, e)
    p["ln3_g"], p["ln3_b"] = _ln_init(e)
    return p


def init_params(key, cfg):
    kg = _KeyGen(key)
    e = cfg["d_model"]
    ff = cfg["dim_feedforward_scale"] * e
    params = {}
    params["embed_tables"] = [
        jax.random.normal(kg(), (card, dim), jnp.float32) * 0.1
        for card, dim in zip(cfg["cardinality"], cfg["embedding_dimension"])
    ]
    params["enc_in_w"], params["enc_in_b"] = _dense_init(kg, cfg["input_size"], e)
    params["dec_in_w"], params["dec_in_b"] = _dense_init(kg, cfg["input_size"], e)
    eng, enb = _ln_init(e)
    dng, dnb = _ln_init(e)
    params["encoder"] = {
        "layers": [_enc_layer_init(kg, e, ff) for _ in range(cfg["num_encoder_layers"])],
        "norm_g": eng, "norm_b": enb,
    }
    params["decoder"] = {
        "layers": [_dec_layer_init(kg, e, ff) for _ in range(cfg["num_decoder_layers"])],
        "norm_g": dng, "norm_b": dnb,
    }
    params["proj_mu_w"], params["proj_mu_b"] = _dense_init(kg, e, 1)
    params["proj_sigma_w"], params["proj_sigma_b"] = _dense_init(kg, e, 1)
    return params


# ----------------------------------------------------------------------------
# Main
# ----------------------------------------------------------------------------
if __name__ == "__main__":
    # TODO(synk): distr_output is abstract in the spec -> Gaussian head chosen;
    # dropout (rate=0 at inference) and the unused tgt_mask buffer are omitted.
    cfg = dict(
        context_length=8,
        prediction_length=4,
        lags_seq=[1, 2, 3],
        num_time_features=2,
        cardinality=[3],
        embedding_dimension=[2],
        d_model=16,
        num_heads=2,
        dim_feedforward_scale=2,
        num_encoder_layers=2,
        num_decoder_layers=2,
        num_parallel_samples=3,
    )
    cfg["history_length"] = cfg["context_length"] + max(cfg["lags_seq"])      # 11
    static_dim = sum(cfg["embedding_dimension"]) + 1 + 1                      # emb + real + log(scale)
    cfg["input_size"] = len(cfg["lags_seq"]) + cfg["num_time_features"] + static_dim  # 9

    key = jax.random.PRNGKey(0)
    k_param, k_in, k_sample = jax.random.split(key, 3)
    params = init_params(k_param, cfg)

    N = 2
    H = cfg["history_length"]
    P = cfg["prediction_length"]
    Ft = cfg["num_time_features"]
    ks = jax.random.split(k_in, 6)
    feat_static_cat = jax.random.randint(ks[0], (N, 1), 0, cfg["cardinality"][0])
    feat_static_real = jax.random.normal(ks[1], (N, 1), jnp.float32)
    past_time_feat = jax.random.normal(ks[2], (N, H, Ft), jnp.float32)
    past_target = jnp.abs(jax.random.normal(ks[3], (N, H), jnp.float32)) + 1.0
    past_observed_values = (
        jax.random.uniform(ks[4], (N, H)) > 0.1
    ).astype(jnp.float32)
    future_time_feat = jax.random.normal(ks[5], (N, P, Ft), jnp.float32)

    fwd = jax.jit(partial(forward, params, cfg))
    samples = fwd(
        k_sample,
        feat_static_cat, feat_static_real, past_time_feat,
        past_target, past_observed_values, future_time_feat,
    )
    samples = jax.block_until_ready(samples)
    assert samples.shape == (N, cfg["num_parallel_samples"], P), samples.shape
    assert bool(jnp.all(jnp.isfinite(samples)))
    print("KERNEL_OK")
</pallas_src>

<mosaic_0001>
module attributes {stable_mosaic.version = 11 : i64} {
  func.func @_encoder_kernel(%arg0: i32, %arg1: memref<1x8x9xf32, #tpu.memory_space<vmem>>, %arg2: memref<9x16xbf16, #tpu.memory_space<vmem>>, %arg3: memref<1x16xf32, #tpu.memory_space<vmem>>, %arg4: memref<2x16x48xbf16, #tpu.memory_space<vmem>>, %arg5: memref<2x1x48xf32, #tpu.memory_space<vmem>>, %arg6: memref<2x16x16xbf16, #tpu.memory_space<vmem>>, %arg7: memref<2x1x16xf32, #tpu.memory_space<vmem>>, %arg8: memref<2x1x16xf32, #tpu.memory_space<vmem>>, %arg9: memref<2x1x16xf32, #tpu.memory_space<vmem>>, %arg10: memref<2x16x32xbf16, #tpu.memory_space<vmem>>, %arg11: memref<2x1x32xf32, #tpu.memory_space<vmem>>, %arg12: memref<2x32x16xbf16, #tpu.memory_space<vmem>>, %arg13: memref<2x1x16xf32, #tpu.memory_space<vmem>>, %arg14: memref<2x1x16xf32, #tpu.memory_space<vmem>>, %arg15: memref<2x1x16xf32, #tpu.memory_space<vmem>>, %arg16: memref<1x16xf32, #tpu.memory_space<vmem>>, %arg17: memref<1x16xf32, #tpu.memory_space<vmem>>, %arg18: memref<2x16x32xbf16, #tpu.memory_space<vmem>>, %arg19: memref<2x1x32xf32, #tpu.memory_space<vmem>>, %arg20: memref<1x2x8x32xbf16, #tpu.memory_space<vmem>>) attributes {dimension_semantics = [#tpu.dimension_semantics<parallel>], iteration_bounds = array<i64: 2>, scalar_prefetch = 0 : i64, scratch_operands = 0 : i64, tpu.core_type = #tpu.core_type<tc>, window_params = [{transform_indices = @transform_0, window_bounds = array<i64: 1, 8, 9>}, {pipeline_mode = #tpu.pipeline_mode<synchronous>, transform_indices = @transform_1, window_bounds = array<i64: 9, 16>}, {pipeline_mode = #tpu.pipeline_mode<synchronous>, transform_indices = @transform_2, window_bounds = array<i64: 1, 16>}, {pipeline_mode = #tpu.pipeline_mode<synchronous>, transform_indices = @transform_3, window_bounds = array<i64: 2, 16, 48>}, {pipeline_mode = #tpu.pipeline_mode<synchronous>, transform_indices = @transform_4, window_bounds = array<i64: 2, 1, 48>}, {pipeline_mode = #tpu.pipeline_mode<synchronous>, transform_indices = @transform_5, window_bounds = array<i64: 2, 16, 16>}, {pipeline_mode = #tpu.pipeline_mode<synchronous>, transform_indices = @transform_6, window_bounds = array<i64: 2, 1, 16>}, {pipeline_mode = #tpu.pipeline_mode<synchronous>, transform_indices = @transform_7, window_bounds = array<i64: 2, 1, 16>}, {pipeline_mode = #tpu.pipeline_mode<synchronous>, transform_indices = @transform_8, window_bounds = array<i64: 2, 1, 16>}, {pipeline_mode = #tpu.pipeline_mode<synchronous>, transform_indices = @transform_9, window_bounds = array<i64: 2, 16, 32>}, {pipeline_mode = #tpu.pipeline_mode<synchronous>, transform_indices = @transform_10, window_bounds = array<i64: 2, 1, 32>}, {pipeline_mode = #tpu.pipeline_mode<synchronous>, transform_indices = @transform_11, window_bounds = array<i64: 2, 32, 16>}, {pipeline_mode = #tpu.pipeline_mode<synchronous>, transform_indices = @transform_12, window_bounds = array<i64: 2, 1, 16>}, {pipeline_mode = #tpu.pipeline_mode<synchronous>, transform_indices = @transform_13, window_bounds = array<i64: 2, 1, 16>}, {pipeline_mode = #tpu.pipeline_mode<synchronous>, transform_indices = @transform_14, window_bounds = array<i64: 2, 1, 16>}, {pipeline_mode = #tpu.pipeline_mode<synchronous>, transform_indices = @transform_15, window_bounds = array<i64: 1, 16>}, {pipeline_mode = #tpu.pipeline_mode<synchronous>, transform_indices = @transform_16, window_bounds = array<i64: 1, 16>}, {pipeline_mode = #tpu.pipeline_mode<synchronous>, transform_indices = @transform_17, window_bounds = array<i64: 2, 16, 32>}, {pipeline_mode = #tpu.pipeline_mode<synchronous>, transform_indices = @transform_18, window_bounds = array<i64: 2, 1, 32>}, {transform_indices = @transform_19, window_bounds = array<i64: 1, 2, 8, 32>}]} {
    %c0 = arith.constant 0 : index
    %c0_0 = arith.constant 0 : index
    %c0_1 = arith.constant 0 : index
    %0 = vector.load %arg1[%c0, %c0_0, %c0_1] : memref<1x8x9xf32, #tpu.memory_space<vmem>>, vector<1x8x9xf32>
    %1 = vector.shape_cast %0 : vector<1x8x9xf32> to vector<8x9xf32>
    %c0_2 = arith.constant 0 : index
    %c0_3 = arith.constant 0 : index
    %2 = vector.load %arg2[%c0_2, %c0_3] : memref<9x16xbf16, #tpu.memory_space<vmem>>, vector<9x16xbf16>
    %3 = arith.truncf %1 : vector<8x9xf32> to vector<8x9xbf16>
    %cst = arith.constant dense<0.000000e+00> : vector<8x16xf32>
    %4 = tpu.matmul %3, %2, %cst {dimension_numbers = #tpu.dot_dimension_numbers<[1], [0], [0], [1], [0, 0, 1, 1], [], []>} : vector<8x9xbf16>, vector<9x16xbf16>, vector<8x16xf32> -> vector<8x16xf32>
    %c0_4 = arith.constant 0 : index
    %c0_5 = arith.constant 0 : index
    %5 = vector.load %arg3[%c0_4, %c0_5] : memref<1x16xf32, #tpu.memory_space<vmem>>, vector<1x16xf32>
    %6 = vector.broadcast %5 : vector<1x16xf32> to vector<8x16xf32>
    %7 = arith.addf %4, %6 : vector<8x16xf32>
    %c0_6 = arith.constant 0 : index
    %c0_7 = arith.constant 0 : index
    %c0_8 = arith.constant 0 : index
    %8 = vector.load %arg4[%c0_6, %c0_7, %c0_8] : memref<2x16x48xbf16, #tpu.memory_space<vmem>>, vector<1x16x48xbf16>
    %9 = vector.shape_cast %8 : vector<1x16x48xbf16> to vector<16x48xbf16>
    %10 = arith.truncf %7 : vector<8x16xf32> to vector<8x16xbf16>
    %cst_9 = arith.constant dense<0.000000e+00> : vector<8x48xf32>
    %11 = tpu.matmul %10, %9, %cst_9 {dimension_numbers = #tpu.dot_dimension_numbers<[1], [0], [0], [1], [0, 0, 1, 1], [], []>} : vector<8x16xbf16>, vector<16x48xbf16>, vector<8x48xf32> -> vector<8x48xf32>
    %c0_10 = arith.constant 0 : index
    %c0_11 = arith.constant 0 : index
    %c0_12 = arith.constant 0 : index
    %12 = vector.load %arg5[%c0_10, %c0_11, %c0_12] : memref<2x1x48xf32, #tpu.memory_space<vmem>>, vector<1x1x48xf32>
    %13 = vector.shape_cast %12 : vector<1x1x48xf32> to vector<1x48xf32>
    %14 = vector.broadcast %13 : vector<1x48xf32> to vector<8x48xf32>
    %15 = arith.addf %11, %14 : vector<8x48xf32>
    %16 = vector.extract_strided_slice %15 {offsets = [0, 0], sizes = [8, 16], strides = [1, 1]} : vector<8x48xf32> to vector<8x16xf32>
    %cst_13 = arith.constant 0.353553385 : f32
    %17 = vector.broadcast %cst_13 : f32 to vector<8x16xf32>
    %18 = arith.mulf %16, %17 : vector<8x16xf32>
    %19 = vector.extract_strided_slice %15 {offsets = [0, 16], sizes = [8, 16], strides = [1, 1]} : vector<8x48xf32> to vector<8x16xf32>
    %20 = vector.extract_strided_slice %15 {offsets = [0, 32], sizes = [8, 16], strides = [1, 1]} : vector<8x48xf32> to vector<8x16xf32>
    %21 = vector.extract_strided_slice %18 {offsets = [0, 0], sizes = [8, 8], strides = [1, 1]} : vector<8x16xf32> to vector<8x8xf32>
    %22 = vector.extract_strided_slice %19 {offsets = [0, 0], sizes = [8, 8], strides = [1, 1]} : vector<8x16xf32> to vector<8x8xf32>
    %23 = arith.truncf %21 : vector<8x8xf32> to vector<8x8xbf16>
    %24 = arith.truncf %22 : vector<8x8xf32> to vector<8x8xbf16>
    %cst_14 = arith.constant dense<0.000000e+00> : vector<8x8xf32>
    %25 = tpu.matmul %23, %24, %cst_14 {dimension_numbers = #tpu.dot_dimension_numbers<[1], [1], [0], [0], [0, 0, 1, 0], [], []>} : vector<8x8xbf16>, vector<8x8xbf16>, vector<8x8xf32> -> vector<8x8xf32>
    %cst_15 = arith.constant dense<0xFF800000> : vector<8xf32>
    %26 = vector.multi_reduction <maximumf>, %25, %cst_15 [1] : vector<8x8xf32> to vector<8xf32>
    %27 = vector.shape_cast %26 : vector<8xf32> to vector<8x1xf32>
    %28 = vector.broadcast %27 : vector<8x1xf32> to vector<8x8xf32>
    %29 = arith.subf %25, %28 : vector<8x8xf32>
    %30 = math.exp %29 : vector<8x8xf32>
    %cst_16 = arith.constant dense<0.000000e+00> : vector<8xf32>
    %31 = vector.multi_reduction <add>, %30, %cst_16 [1] : vector<8x8xf32> to vector<8xf32>
    %32 = vector.shape_cast %31 : vector<8xf32> to vector<8x1xf32>
    %33 = tpu.reciprocal %32 {approx = true} : vector<8x1xf32> -> vector<8x1xf32>
    %34 = vector.broadcast %33 : vector<8x1xf32> to vector<8x8xf32>
    %35 = arith.mulf %30, %34 : vector<8x8xf32>
    %36 = vector.extract_strided_slice %20 {offsets = [0, 0], sizes = [8, 8], strides = [1, 1]} : vector<8x16xf32> to vector<8x8xf32>
    %37 = arith.truncf %35 : vector<8x8xf32> to vector<8x8xbf16>
    %38 = arith.truncf %36 : vector<8x8xf32> to vector<8x8xbf16>
    %cst_17 = arith.constant dense<0.000000e+00> : vector<8x8xf32>
    %39 = tpu.matmul %37, %38, %cst_17 {dimension_numbers = #tpu.dot_dimension_numbers<[1], [0], [0], [1], [0, 0, 1, 1], [], []>} : vector<8x8xbf16>, vector<8x8xbf16>, vector<8x8xf32> -> vector<8x8xf32>
    %40 = vector.extract_strided_slice %18 {offsets = [0, 8], sizes = [8, 8], strides = [1, 1]} : vector<8x16xf32> to vector<8x8xf32>
    %41 = vector.extract_strided_slice %19 {offsets = [0, 8], sizes = [8, 8], strides = [1, 1]} : vector<8x16xf32> to vector<8x8xf32>
    %42 = arith.truncf %40 : vector<8x8xf32> to vector<8x8xbf16>
    %43 = arith.truncf %41 : vector<8x8xf32> to vector<8x8xbf16>
    %cst_18 = arith.constant dense<0.000000e+00> : vector<8x8xf32>
    %44 = tpu.matmul %42, %43, %cst_18 {dimension_numbers = #tpu.dot_dimension_numbers<[1], [1], [0], [0], [0, 0, 1, 0], [], []>} : vector<8x8xbf16>, vector<8x8xbf16>, vector<8x8xf32> -> vector<8x8xf32>
    %cst_19 = arith.constant dense<0xFF800000> : vector<8xf32>
    %45 = vector.multi_reduction <maximumf>, %44, %cst_19 [1] : vector<8x8xf32> to vector<8xf32>
    %46 = vector.shape_cast %45 : vector<8xf32> to vector<8x1xf32>
    %47 = vector.broadcast %46 : vector<8x1xf32> to vector<8x8xf32>
    %48 = arith.subf %44, %47 : vector<8x8xf32>
    %49 = math.exp %48 : vector<8x8xf32>
    %cst_20 = arith.constant dense<0.000000e+00> : vector<8xf32>
    %50 = vector.multi_reduction <add>, %49, %cst_20 [1] : vector<8x8xf32> to vector<8xf32>
    %51 = vector.shape_cast %50 : vector<8xf32> to vector<8x1xf32>
    %52 = tpu.reciprocal %51 {approx = true} : vector<8x1xf32> -> vector<8x1xf32>
    %53 = vector.broadcast %52 : vector<8x1xf32> to vector<8x8xf32>
    %54 = arith.mulf %49, %53 : vector<8x8xf32>
    %55 = vector.extract_strided_slice %20 {offsets = [0, 8], sizes = [8, 8], strides = [1, 1]} : vector<8x16xf32> to vector<8x8xf32>
    %56 = arith.truncf %54 : vector<8x8xf32> to vector<8x8xbf16>
    %57 = arith.truncf %55 : vector<8x8xf32> to vector<8x8xbf16>
    %cst_21 = arith.constant dense<0.000000e+00> : vector<8x8xf32>
    %58 = tpu.matmul %56, %57, %cst_21 {dimension_numbers = #tpu.dot_dimension_numbers<[1], [0], [0], [1], [0, 0, 1, 1], [], []>} : vector<8x8xbf16>, vector<8x8xbf16>, vector<8x8xf32> -> vector<8x8xf32>
    %59 = tpu.concatenate %39, %58 in 1 : vector<8x8xf32>, vector<8x8xf32> -> vector<8x16xf32>
    %c0_22 = arith.constant 0 : index
    %c0_23 = arith.constant 0 : index
    %c0_24 = arith.constant 0 : index
    %60 = vector.load %arg6[%c0_22, %c0_23, %c0_24] : memref<2x16x16xbf16, #tpu.memory_space<vmem>>, vector<1x16x16xbf16>
    %61 = vector.shape_cast %60 : vector<1x16x16xbf16> to vector<16x16xbf16>
    %62 = arith.truncf %59 : vector<8x16xf32> to vector<8x16xbf16>
    %cst_25 = arith.constant dense<0.000000e+00> : vector<8x16xf32>
    %63 = tpu.matmul %62, %61, %cst_25 {dimension_numbers = #tpu.dot_dimension_numbers<[1], [0], [0], [1], [0, 0, 1, 1], [], []>} : vector<8x16xbf16>, vector<16x16xbf16>, vector<8x16xf32> -> vector<8x16xf32>
    %c0_26 = arith.constant 0 : index
    %c0_27 = arith.constant 0 : index
    %c0_28 = arith.constant 0 : index
    %64 = vector.load %arg7[%c0_26, %c0_27, %c0_28] : memref<2x1x16xf32, #tpu.memory_space<vmem>>, vector<1x1x16xf32>
    %65 = vector.shape_cast %64 : vector<1x1x16xf32> to vector<1x16xf32>
    %66 = vector.broadcast %65 : vector<1x16xf32> to vector<8x16xf32>
    %67 = arith.addf %63, %66 : vector<8x16xf32>
    %68 = arith.addf %7, %67 : vector<8x16xf32>
    %c0_29 = arith.constant 0 : index
    %c0_30 = arith.constant 0 : index
    %c0_31 = arith.constant 0 : index
    %69 = vector.load %arg8[%c0_29, %c0_30, %c0_31] : memref<2x1x16xf32, #tpu.memory_space<vmem>>, vector<1x1x16xf32>
    %70 = vector.shape_cast %69 : vector<1x1x16xf32> to vector<1x16xf32>
    %c0_32 = arith.constant 0 : index
    %c0_33 = arith.constant 0 : index
    %c0_34 = arith.constant 0 : index
    %71 = vector.load %arg9[%c0_32, %c0_33, %c0_34] : memref<2x1x16xf32, #tpu.memory_space<vmem>>, vector<1x1x16xf32>
    %72 = vector.shape_cast %71 : vector<1x1x16xf32> to vector<1x16xf32>
    %cst_35 = arith.constant dense<0.000000e+00> : vector<8xf32>
    %73 = vector.multi_reduction <add>, %68, %cst_35 [1] : vector<8x16xf32> to vector<8xf32>
    %74 = vector.shape_cast %73 : vector<8xf32> to vector<8x1xf32>
    %cst_36 = arith.constant 1.600000e+01 : f32
    %75 = vector.broadcast %cst_36 : f32 to vector<8x1xf32>
    %76 = arith.divf %74, %75 : vector<8x1xf32>
    %77 = vector.broadcast %76 : vector<8x1xf32> to vector<8x16xf32>
    %78 = arith.subf %68, %77 : vector<8x16xf32>
    %79 = arith.mulf %78, %78 : vector<8x16xf32>
    %cst_37 = arith.constant dense<0.000000e+00> : vector<8xf32>
    %80 = vector.multi_reduction <add>, %79, %cst_37 [1] : vector<8x16xf32> to vector<8xf32>
    %81 = vector.shape_cast %80 : vector<8xf32> to vector<8x1xf32>
    %cst_38 = arith.constant 1.600000e+01 : f32
    %82 = vector.broadcast %cst_38 : f32 to vector<8x1xf32>
    %83 = arith.divf %81, %82 : vector<8x1xf32>
    %cst_39 = arith.constant 9.99999974E-6 : f32
    %84 = vector.broadcast %cst_39 : f32 to vector<8x1xf32>
    %85 = arith.addf %83, %84 : vector<8x1xf32>
    %86 = math.rsqrt %85 : vector<8x1xf32>
    %87 = vector.broadcast %86 : vector<8x1xf32> to vector<8x16xf32>
    %88 = arith.mulf %78, %87 : vector<8x16xf32>
    %89 = vector.broadcast %70 : vector<1x16xf32> to vector<8x16xf32>
    %90 = arith.mulf %88, %89 : vector<8x16xf32>
    %91 = vector.broadcast %72 : vector<1x16xf32> to vector<8x16xf32>
    %92 = arith.addf %90, %91 : vector<8x16xf32>
    %c0_40 = arith.constant 0 : index
    %c0_41 = arith.constant 0 : index
    %c0_42 = arith.constant 0 : index
    %93 = vector.load %arg10[%c0_40, %c0_41, %c0_42] : memref<2x16x32xbf16, #tpu.memory_space<vmem>>, vector<1x16x32xbf16>
    %94 = vector.shape_cast %93 : vector<1x16x32xbf16> to vector<16x32xbf16>
    %95 = arith.truncf %92 : vector<8x16xf32> to vector<8x16xbf16>
    %cst_43 = arith.constant dense<0.000000e+00> : vector<8x32xf32>
    %96 = tpu.matmul %95, %94, %cst_43 {dimension_numbers = #tpu.dot_dimension_numbers<[1], [0], [0], [1], [0, 0, 1, 1], [], []>} : vector<8x16xbf16>, vector<16x32xbf16>, vector<8x32xf32> -> vector<8x32xf32>
    %c0_44 = arith.constant 0 : index
    %c0_45 = arith.constant 0 : index
    %c0_46 = arith.constant 0 : index
    %97 = vector.load %arg11[%c0_44, %c0_45, %c0_46] : memref<2x1x32xf32, #tpu.memory_space<vmem>>, vector<1x1x32xf32>
    %98 = vector.shape_cast %97 : vector<1x1x32xf32> to vector<1x32xf32>
    %99 = vector.broadcast %98 : vector<1x32xf32> to vector<8x32xf32>
    %100 = arith.addf %96, %99 : vector<8x32xf32>
    %cst_47 = arith.constant 0.000000e+00 : f32
    %101 = vector.broadcast %cst_47 : f32 to vector<8x32xf32>
    %102 = arith.maximumf %100, %101 : vector<8x32xf32>
    %c0_48 = arith.constant 0 : index
    %c0_49 = arith.constant 0 : index
    %c0_50 = arith.constant 0 : index
    %103 = vector.load %arg12[%c0_48, %c0_49, %c0_50] : memref<2x32x16xbf16, #tpu.memory_space<vmem>>, vector<1x32x16xbf16>
    %104 = vector.shape_cast %103 : vector<1x32x16xbf16> to vector<32x16xbf16>
    %105 = arith.truncf %102 : vector<8x32xf32> to vector<8x32xbf16>
    %cst_51 = arith.constant dense<0.000000e+00> : vector<8x16xf32>
    %106 = tpu.matmul %105, %104, %cst_51 {dimension_numbers = #tpu.dot_dimension_numbers<[1], [0], [0], [1], [0, 0, 1, 1], [], []>} : vector<8x32xbf16>, vector<32x16xbf16>, vector<8x16xf32> -> vector<8x16xf32>
    %c0_52 = arith.constant 0 : index
    %c0_53 = arith.constant 0 : index
    %c0_54 = arith.constant 0 : index
    %107 = vector.load %arg13[%c0_52, %c0_53, %c0_54] : memref<2x1x16xf32, #tpu.memory_space<vmem>>, vector<1x1x16xf32>
    %108 = vector.shape_cast %107 : vector<1x1x16xf32> to vector<1x16xf32>
    %109 = vector.broadcast %108 : vector<1x16xf32> to vector<8x16xf32>
    %110 = arith.addf %106, %109 : vector<8x16xf32>
    %111 = arith.addf %92, %110 : vector<8x16xf32>
    %c0_55 = arith.constant 0 : index
    %c0_56 = arith.constant 0 : index
    %c0_57 = arith.constant 0 : index
    %112 = vector.load %arg14[%c0_55, %c0_56, %c0_57] : memref<2x1x16xf32, #tpu.memory_space<vmem>>, vector<1x1x16xf32>
    %113 = vector.shape_cast %112 : vector<1x1x16xf32> to vector<1x16xf32>
    %c0_58 = arith.constant 0 : index
    %c0_59 = arith.constant 0 : index
    %c0_60 = arith.constant 0 : index
    %114 = vector.load %arg15[%c0_58, %c0_59, %c0_60] : memref<2x1x16xf32, #tpu.memory_space<vmem>>, vector<1x1x16xf32>
    %115 = vector.shape_cast %114 : vector<1x1x16xf32> to vector<1x16xf32>
    %cst_61 = arith.constant dense<0.000000e+00> : vector<8xf32>
    %116 = vector.multi_reduction <add>, %111, %cst_61 [1] : vector<8x16xf32> to vector<8xf32>
    %117 = vector.shape_cast %116 : vector<8xf32> to vector<8x1xf32>
    %cst_62 = arith.constant 1.600000e+01 : f32
    %118 = vector.broadcast %cst_62 : f32 to vector<8x1xf32>
    %119 = arith.divf %117, %118 : vector<8x1xf32>
    %120 = vector.broadcast %119 : vector<8x1xf32> to vector<8x16xf32>
    %121 = arith.subf %111, %120 : vector<8x16xf32>
    %122 = arith.mulf %121, %121 : vector<8x16xf32>
    %cst_63 = arith.constant dense<0.000000e+00> : vector<8xf32>
    %123 = vector.multi_reduction <add>, %122, %cst_63 [1] : vector<8x16xf32> to vector<8xf32>
    %124 = vector.shape_cast %123 : vector<8xf32> to vector<8x1xf32>
    %cst_64 = arith.constant 1.600000e+01 : f32
    %125 = vector.broadcast %cst_64 : f32 to vector<8x1xf32>
    %126 = arith.divf %124, %125 : vector<8x1xf32>
    %cst_65 = arith.constant 9.99999974E-6 : f32
    %127 = vector.broadcast %cst_65 : f32 to vector<8x1xf32>
    %128 = arith.addf %126, %127 : vector<8x1xf32>
    %129 = math.rsqrt %128 : vector<8x1xf32>
    %130 = vector.broadcast %129 : vector<8x1xf32> to vector<8x16xf32>
    %131 = arith.mulf %121, %130 : vector<8x16xf32>
    %132 = vector.broadcast %113 : vector<1x16xf32> to vector<8x16xf32>
    %133 = arith.mulf %131, %132 : vector<8x16xf32>
    %134 = vector.broadcast %115 : vector<1x16xf32> to vector<8x16xf32>
    %135 = arith.addf %133, %134 : vector<8x16xf32>
    %c1 = arith.constant 1 : index
    %c0_66 = arith.constant 0 : index
    %c0_67 = arith.constant 0 : index
    %136 = vector.load %arg4[%c1, %c0_66, %c0_67] : memref<2x16x48xbf16, #tpu.memory_space<vmem>>, vector<1x16x48xbf16>
    %137 = vector.shape_cast %136 : vector<1x16x48xbf16> to vector<16x48xbf16>
    %138 = arith.truncf %135 : vector<8x16xf32> to vector<8x16xbf16>
    %cst_68 = arith.constant dense<0.000000e+00> : vector<8x48xf32>
    %139 = tpu.matmul %138, %137, %cst_68 {dimension_numbers = #tpu.dot_dimension_numbers<[1], [0], [0], [1], [0, 0, 1, 1], [], []>} : vector<8x16xbf16>, vector<16x48xbf16>, vector<8x48xf32> -> vector<8x48xf32>
    %c1_69 = arith.constant 1 : index
    %c0_70 = arith.constant 0 : index
    %c0_71 = arith.constant 0 : index
    %140 = vector.load %arg5[%c1_69, %c0_70, %c0_71] : memref<2x1x48xf32, #tpu.memory_space<vmem>>, vector<1x1x48xf32>
    %141 = vector.shape_cast %140 : vector<1x1x48xf32> to vector<1x48xf32>
    %142 = vector.broadcast %141 : vector<1x48xf32> to vector<8x48xf32>
    %143 = arith.addf %139, %142 : vector<8x48xf32>
    %144 = vector.extract_strided_slice %143 {offsets = [0, 0], sizes = [8, 16], strides = [1, 1]} : vector<8x48xf32> to vector<8x16xf32>
    %cst_72 = arith.constant 0.353553385 : f32
    %145 = vector.broadcast %cst_72 : f32 to vector<8x16xf32>
    %146 = arith.mulf %144, %145 : vector<8x16xf32>
    %147 = vector.extract_strided_slice %143 {offsets = [0, 16], sizes = [8, 16], strides = [1, 1]} : vector<8x48xf32> to vector<8x16xf32>
    %148 = vector.extract_strided_slice %143 {offsets = [0, 32], sizes = [8, 16], strides = [1, 1]} : vector<8x48xf32> to vector<8x16xf32>
    %149 = vector.extract_strided_slice %146 {offsets = [0, 0], sizes = [8, 8], strides = [1, 1]} : vector<8x16xf32> to vector<8x8xf32>
    %150 = vector.extract_strided_slice %147 {offsets = [0, 0], sizes = [8, 8], strides = [1, 1]} : vector<8x16xf32> to vector<8x8xf32>
    %151 = arith.truncf %149 : vector<8x8xf32> to vector<8x8xbf16>
    %152 = arith.truncf %150 : vector<8x8xf32> to vector<8x8xbf16>
    %cst_73 = arith.constant dense<0.000000e+00> : vector<8x8xf32>
    %153 = tpu.matmul %151, %152, %cst_73 {dimension_numbers = #tpu.dot_dimension_numbers<[1], [1], [0], [0], [0, 0, 1, 0], [], []>} : vector<8x8xbf16>, vector<8x8xbf16>, vector<8x8xf32> -> vector<8x8xf32>
    %cst_74 = arith.constant dense<0xFF800000> : vector<8xf32>
    %154 = vector.multi_reduction <maximumf>, %153, %cst_74 [1] : vector<8x8xf32> to vector<8xf32>
    %155 = vector.shape_cast %154 : vector<8xf32> to vector<8x1xf32>
    %156 = vector.broadcast %155 : vector<8x1xf32> to vector<8x8xf32>
    %157 = arith.subf %153, %156 : vector<8x8xf32>
    %158 = math.exp %157 : vector<8x8xf32>
    %cst_75 = arith.constant dense<0.000000e+00> : vector<8xf32>
    %159 = vector.multi_reduction <add>, %158, %cst_75 [1] : vector<8x8xf32> to vector<8xf32>
    %160 = vector.shape_cast %159 : vector<8xf32> to vector<8x1xf32>
    %161 = tpu.reciprocal %160 {approx = true} : vector<8x1xf32> -> vector<8x1xf32>
    %162 = vector.broadcast %161 : vector<8x1xf32> to vector<8x8xf32>
    %163 = arith.mulf %158, %162 : vector<8x8xf32>
    %164 = vector.extract_strided_slice %148 {offsets = [0, 0], sizes = [8, 8], strides = [1, 1]} : vector<8x16xf32> to vector<8x8xf32>
    %165 = arith.truncf %163 : vector<8x8xf32> to vector<8x8xbf16>
    %166 = arith.truncf %164 : vector<8x8xf32> to vector<8x8xbf16>
    %cst_76 = arith.constant dense<0.000000e+00> : vector<8x8xf32>
    %167 = tpu.matmul %165, %166, %cst_76 {dimension_numbers = #tpu.dot_dimension_numbers<[1], [0], [0], [1], [0, 0, 1, 1], [], []>} : vector<8x8xbf16>, vector<8x8xbf16>, vector<8x8xf32> -> vector<8x8xf32>
    %168 = vector.extract_strided_slice %146 {offsets = [0, 8], sizes = [8, 8], strides = [1, 1]} : vector<8x16xf32> to vector<8x8xf32>
    %169 = vector.extract_strided_slice %147 {offsets = [0, 8], sizes = [8, 8], strides = [1, 1]} : vector<8x16xf32> to vector<8x8xf32>
    %170 = arith.truncf %168 : vector<8x8xf32> to vector<8x8xbf16>
    %171 = arith.truncf %169 : vector<8x8xf32> to vector<8x8xbf16>
    %cst_77 = arith.constant dense<0.000000e+00> : vector<8x8xf32>
    %172 = tpu.matmul %170, %171, %cst_77 {dimension_numbers = #tpu.dot_dimension_numbers<[1], [1], [0], [0], [0, 0, 1, 0], [], []>} : vector<8x8xbf16>, vector<8x8xbf16>, vector<8x8xf32> -> vector<8x8xf32>
    %cst_78 = arith.constant dense<0xFF800000> : vector<8xf32>
    %173 = vector.multi_reduction <maximumf>, %172, %cst_78 [1] : vector<8x8xf32> to vector<8xf32>
    %174 = vector.shape_cast %173 : vector<8xf32> to vector<8x1xf32>
    %175 = vector.broadcast %174 : vector<8x1xf32> to vector<8x8xf32>
    %176 = arith.subf %172, %175 : vector<8x8xf32>
    %177 = math.exp %176 : vector<8x8xf32>
    %cst_79 = arith.constant dense<0.000000e+00> : vector<8xf32>
    %178 = vector.multi_reduction <add>, %177, %cst_79 [1] : vector<8x8xf32> to vector<8xf32>
    %179 = vector.shape_cast %178 : vector<8xf32> to vector<8x1xf32>
    %180 = tpu.reciprocal %179 {approx = true} : vector<8x1xf32> -> vector<8x1xf32>
    %181 = vector.broadcast %180 : vector<8x1xf32> to vector<8x8xf32>
    %182 = arith.mulf %177, %181 : vector<8x8xf32>
    %183 = vector.extract_strided_slice %148 {offsets = [0, 8], sizes = [8, 8], strides = [1, 1]} : vector<8x16xf32> to vector<8x8xf32>
    %184 = arith.truncf %182 : vector<8x8xf32> to vector<8x8xbf16>
    %185 = arith.truncf %183 : vector<8x8xf32> to vector<8x8xbf16>
    %cst_80 = arith.constant dense<0.000000e+00> : vector<8x8xf32>
    %186 = tpu.matmul %184, %185, %cst_80 {dimension_numbers = #tpu.dot_dimension_numbers<[1], [0], [0], [1], [0, 0, 1, 1], [], []>} : vector<8x8xbf16>, vector<8x8xbf16>, vector<8x8xf32> -> vector<8x8xf32>
    %187 = tpu.concatenate %167, %186 in 1 : vector<8x8xf32>, vector<8x8xf32> -> vector<8x16xf32>
    %c1_81 = arith.constant 1 : index
    %c0_82 = arith.constant 0 : index
    %c0_83 = arith.constant 0 : index
    %188 = vector.load %arg6[%c1_81, %c0_82, %c0_83] : memref<2x16x16xbf16, #tpu.memory_space<vmem>>, vector<1x16x16xbf16>
    %189 = vector.shape_cast %188 : vector<1x16x16xbf16> to vector<16x16xbf16>
    %190 = arith.truncf %187 : vector<8x16xf32> to vector<8x16xbf16>
    %cst_84 = arith.constant dense<0.000000e+00> : vector<8x16xf32>
    %191 = tpu.matmul %190, %189, %cst_84 {dimension_numbers = #tpu.dot_dimension_numbers<[1], [0], [0], [1], [0, 0, 1, 1], [], []>} : vector<8x16xbf16>, vector<16x16xbf16>, vector<8x16xf32> -> vector<8x16xf32>
    %c1_85 = arith.constant 1 : index
    %c0_86 = arith.constant 0 : index
    %c0_87 = arith.constant 0 : index
    %192 = vector.load %arg7[%c1_85, %c0_86, %c0_87] : memref<2x1x16xf32, #tpu.memory_space<vmem>>, vector<1x1x16xf32>
    %193 = vector.shape_cast %192 : vector<1x1x16xf32> to vector<1x16xf32>
    %194 = vector.broadcast %193 : vector<1x16xf32> to vector<8x16xf32>
    %195 = arith.addf %191, %194 : vector<8x16xf32>
    %196 = arith.addf %135, %195 : vector<8x16xf32>
    %c1_88 = arith.constant 1 : index
    %c0_89 = arith.constant 0 : index
    %c0_90 = arith.constant 0 : index
    %197 = vector.load %arg8[%c1_88, %c0_89, %c0_90] : memref<2x1x16xf32, #tpu.memory_space<vmem>>, vector<1x1x16xf32>
    %198 = vector.shape_cast %197 : vector<1x1x16xf32> to vector<1x16xf32>
    %c1_91 = arith.constant 1 : index
    %c0_92 = arith.constant 0 : index
    %c0_93 = arith.constant 0 : index
    %199 = vector.load %arg9[%c1_91, %c0_92, %c0_93] : memref<2x1x16xf32, #tpu.memory_space<vmem>>, vector<1x1x16xf32>
    %200 = vector.shape_cast %199 : vector<1x1x16xf32> to vector<1x16xf32>
    %cst_94 = arith.constant dense<0.000000e+00> : vector<8xf32>
    %201 = vector.multi_reduction <add>, %196, %cst_94 [1] : vector<8x16xf32> to vector<8xf32>
    %202 = vector.shape_cast %201 : vector<8xf32> to vector<8x1xf32>
    %cst_95 = arith.constant 1.600000e+01 : f32
    %203 = vector.broadcast %cst_95 : f32 to vector<8x1xf32>
    %204 = arith.divf %202, %203 : vector<8x1xf32>
    %205 = vector.broadcast %204 : vector<8x1xf32> to vector<8x16xf32>
    %206 = arith.subf %196, %205 : vector<8x16xf32>
    %207 = arith.mulf %206, %206 : vector<8x16xf32>
    %cst_96 = arith.constant dense<0.000000e+00> : vector<8xf32>
    %208 = vector.multi_reduction <add>, %207, %cst_96 [1] : vector<8x16xf32> to vector<8xf32>
    %209 = vector.shape_cast %208 : vector<8xf32> to vector<8x1xf32>
    %cst_97 = arith.constant 1.600000e+01 : f32
    %210 = vector.broadcast %cst_97 : f32 to vector<8x1xf32>
    %211 = arith.divf %209, %210 : vector<8x1xf32>
    %cst_98 = arith.constant 9.99999974E-6 : f32
    %212 = vector.broadcast %cst_98 : f32 to vector<8x1xf32>
    %213 = arith.addf %211, %212 : vector<8x1xf32>
    %214 = math.rsqrt %213 : vector<8x1xf32>
    %215 = vector.broadcast %214 : vector<8x1xf32> to vector<8x16xf32>
    %216 = arith.mulf %206, %215 : vector<8x16xf32>
    %217 = vector.broadcast %198 : vector<1x16xf32> to vector<8x16xf32>
    %218 = arith.mulf %216, %217 : vector<8x16xf32>
    %219 = vector.broadcast %200 : vector<1x16xf32> to vector<8x16xf32>
    %220 = arith.addf %218, %219 : vector<8x16xf32>
    %c1_99 = arith.constant 1 : index
    %c0_100 = arith.constant 0 : index
    %c0_101 = arith.constant 0 : index
    %221 = vector.load %arg10[%c1_99, %c0_100, %c0_101] : memref<2x16x32xbf16, #tpu.memory_space<vmem>>, vector<1x16x32xbf16>
    %222 = vector.shape_cast %221 : vector<1x16x32xbf16> to vector<16x32xbf16>
    %223 = arith.truncf %220 : vector<8x16xf32> to vector<8x16xbf16>
    %cst_102 = arith.constant dense<0.000000e+00> : vector<8x32xf32>
    %224 = tpu.matmul %223, %222, %cst_102 {dimension_numbers = #tpu.dot_dimension_numbers<[1], [0], [0], [1], [0, 0, 1, 1], [], []>} : vector<8x16xbf16>, vector<16x32xbf16>, vector<8x32xf32> -> vector<8x32xf32>
    %c1_103 = arith.constant 1 : index
    %c0_104 = arith.constant 0 : index
    %c0_105 = arith.constant 0 : index
    %225 = vector.load %arg11[%c1_103, %c0_104, %c0_105] : memref<2x1x32xf32, #tpu.memory_space<vmem>>, vector<1x1x32xf32>
    %226 = vector.shape_cast %225 : vector<1x1x32xf32> to vector<1x32xf32>
    %227 = vector.broadcast %226 : vector<1x32xf32> to vector<8x32xf32>
    %228 = arith.addf %224, %227 : vector<8x32xf32>
    %cst_106 = arith.constant 0.000000e+00 : f32
    %229 = vector.broadcast %cst_106 : f32 to vector<8x32xf32>
    %230 = arith.maximumf %228, %229 : vector<8x32xf32>
    %c1_107 = arith.constant 1 : index
    %c0_108 = arith.constant 0 : index
    %c0_109 = arith.constant 0 : index
    %231 = vector.load %arg12[%c1_107, %c0_108, %c0_109] : memref<2x32x16xbf16, #tpu.memory_space<vmem>>, vector<1x32x16xbf16>
    %232 = vector.shape_cast %231 : vector<1x32x16xbf16> to vector<32x16xbf16>
    %233 = arith.truncf %230 : vector<8x32xf32> to vector<8x32xbf16>
    %cst_110 = arith.constant dense<0.000000e+00> : vector<8x16xf32>
    %234 = tpu.matmul %233, %232, %cst_110 {dimension_numbers = #tpu.dot_dimension_numbers<[1], [0], [0], [1], [0, 0, 1, 1], [], []>} : vector<8x32xbf16>, vector<32x16xbf16>, vector<8x16xf32> -> vector<8x16xf32>
    %c1_111 = arith.constant 1 : index
    %c0_112 = arith.constant 0 : index
    %c0_113 = arith.constant 0 : index
    %235 = vector.load %arg13[%c1_111, %c0_112, %c0_113] : memref<2x1x16xf32, #tpu.memory_space<vmem>>, vector<1x1x16xf32>
    %236 = vector.shape_cast %235 : vector<1x1x16xf32> to vector<1x16xf32>
    %237 = vector.broadcast %236 : vector<1x16xf32> to vector<8x16xf32>
    %238 = arith.addf %234, %237 : vector<8x16xf32>
    %239 = arith.addf %220, %238 : vector<8x16xf32>
    %c1_114 = arith.constant 1 : index
    %c0_115 = arith.constant 0 : index
    %c0_116 = arith.constant 0 : index
    %240 = vector.load %arg14[%c1_114, %c0_115, %c0_116] : memref<2x1x16xf32, #tpu.memory_space<vmem>>, vector<1x1x16xf32>
    %241 = vector.shape_cast %240 : vector<1x1x16xf32> to vector<1x16xf32>
    %c1_117 = arith.constant 1 : index
    %c0_118 = arith.constant 0 : index
    %c0_119 = arith.constant 0 : index
    %242 = vector.load %arg15[%c1_117, %c0_118, %c0_119] : memref<2x1x16xf32, #tpu.memory_space<vmem>>, vector<1x1x16xf32>
    %243 = vector.shape_cast %242 : vector<1x1x16xf32> to vector<1x16xf32>
    %cst_120 = arith.constant dense<0.000000e+00> : vector<8xf32>
    %244 = vector.multi_reduction <add>, %239, %cst_120 [1] : vector<8x16xf32> to vector<8xf32>
    %245 = vector.shape_cast %244 : vector<8xf32> to vector<8x1xf32>
    %cst_121 = arith.constant 1.600000e+01 : f32
    %246 = vector.broadcast %cst_121 : f32 to vector<8x1xf32>
    %247 = arith.divf %245, %246 : vector<8x1xf32>
    %248 = vector.broadcast %247 : vector<8x1xf32> to vector<8x16xf32>
    %249 = arith.subf %239, %248 : vector<8x16xf32>
    %250 = arith.mulf %249, %249 : vector<8x16xf32>
    %cst_122 = arith.constant dense<0.000000e+00> : vector<8xf32>
    %251 = vector.multi_reduction <add>, %250, %cst_122 [1] : vector<8x16xf32> to vector<8xf32>
    %252 = vector.shape_cast %251 : vector<8xf32> to vector<8x1xf32>
    %cst_123 = arith.constant 1.600000e+01 : f32
    %253 = vector.broadcast %cst_123 : f32 to vector<8x1xf32>
    %254 = arith.divf %252, %253 : vector<8x1xf32>
    %cst_124 = arith.constant 9.99999974E-6 : f32
    %255 = vector.broadcast %cst_124 : f32 to vector<8x1xf32>
    %256 = arith.addf %254, %255 : vector<8x1xf32>
    %257 = math.rsqrt %256 : vector<8x1xf32>
    %258 = vector.broadcast %257 : vector<8x1xf32> to vector<8x16xf32>
    %259 = arith.mulf %249, %258 : vector<8x16xf32>
    %260 = vector.broadcast %241 : vector<1x16xf32> to vector<8x16xf32>
    %261 = arith.mulf %259, %260 : vector<8x16xf32>
    %262 = vector.broadcast %243 : vector<1x16xf32> to vector<8x16xf32>
    %263 = arith.addf %261, %262 : vector<8x16xf32>
    %c0_125 = arith.constant 0 : index
    %c0_126 = arith.constant 0 : index
    %264 = vector.load %arg16[%c0_125, %c0_126] : memref<1x16xf32, #tpu.memory_space<vmem>>, vector<1x16xf32>
    %c0_127 = arith.constant 0 : index
    %c0_128 = arith.constant 0 : index
    %265 = vector.load %arg17[%c0_127, %c0_128] : memref<1x16xf32, #tpu.memory_space<vmem>>, vector<1x16xf32>
    %cst_129 = arith.constant dense<0.000000e+00> : vector<8xf32>
    %266 = vector.multi_reduction <add>, %263, %cst_129 [1] : vector<8x16xf32> to vector<8xf32>
    %267 = vector.shape_cast %266 : vector<8xf32> to vector<8x1xf32>
    %cst_130 = arith.constant 1.600000e+01 : f32
    %268 = vector.broadcast %cst_130 : f32 to vector<8x1xf32>
    %269 = arith.divf %267, %268 : vector<8x1xf32>
    %270 = vector.broadcast %269 : vector<8x1xf32> to vector<8x16xf32>
    %271 = arith.subf %263, %270 : vector<8x16xf32>
    %272 = arith.mulf %271, %271 : vector<8x16xf32>
    %cst_131 = arith.constant dense<0.000000e+00> : vector<8xf32>
    %273 = vector.multi_reduction <add>, %272, %cst_131 [1] : vector<8x16xf32> to vector<8xf32>
    %274 = vector.shape_cast %273 : vector<8xf32> to vector<8x1xf32>
    %cst_132 = arith.constant 1.600000e+01 : f32
    %275 = vector.broadcast %cst_132 : f32 to vector<8x1xf32>
    %276 = arith.divf %274, %275 : vector<8x1xf32>
    %cst_133 = arith.constant 9.99999974E-6 : f32
    %277 = vector.broadcast %cst_133 : f32 to vector<8x1xf32>
    %278 = arith.addf %276, %277 : vector<8x1xf32>
    %279 = math.rsqrt %278 : vector<8x1xf32>
    %280 = vector.broadcast %279 : vector<8x1xf32> to vector<8x16xf32>
    %281 = arith.mulf %271, %280 : vector<8x16xf32>
    %282 = vector.broadcast %264 : vector<1x16xf32> to vector<8x16xf32>
    %283 = arith.mulf %281, %282 : vector<8x16xf32>
    %284 = vector.broadcast %265 : vector<1x16xf32> to vector<8x16xf32>
    %285 = arith.addf %283, %284 : vector<8x16xf32>
    %c0_134 = arith.constant 0 : index
    %c0_135 = arith.constant 0 : index
    %c0_136 = arith.constant 0 : index
    %286 = vector.load %arg18[%c0_134, %c0_135, %c0_136] : memref<2x16x32xbf16, #tpu.memory_space<vmem>>, vector<1x16x32xbf16>
    %287 = vector.shape_cast %286 : vector<1x16x32xbf16> to vector<16x32xbf16>
    %288 = arith.truncf %285 : vector<8x16xf32> to vector<8x16xbf16>
    %cst_137 = arith.constant dense<0.000000e+00> : vector<8x32xf32>
    %289 = tpu.matmul %288, %287, %cst_137 {dimension_numbers = #tpu.dot_dimension_numbers<[1], [0], [0], [1], [0, 0, 1, 1], [], []>} : vector<8x16xbf16>, vector<16x32xbf16>, vector<8x32xf32> -> vector<8x32xf32>
    %c0_138 = arith.constant 0 : index
    %c0_139 = arith.constant 0 : index
    %c0_140 = arith.constant 0 : index
    %290 = vector.load %arg19[%c0_138, %c0_139, %c0_140] : memref<2x1x32xf32, #tpu.memory_space<vmem>>, vector<1x1x32xf32>
    %291 = vector.shape_cast %290 : vector<1x1x32xf32> to vector<1x32xf32>
    %292 = vector.broadcast %291 : vector<1x32xf32> to vector<8x32xf32>
    %293 = arith.addf %289, %292 : vector<8x32xf32>
    %294 = arith.truncf %293 : vector<8x32xf32> to vector<8x32xbf16>
    %c0_141 = arith.constant 0 : index
    %c0_142 = arith.constant 0 : index
    %c0_143 = arith.constant 0 : index
    %c0_144 = arith.constant 0 : index
    %295 = vector.load %arg20[%c0_141, %c0_142, %c0_143, %c0_144] : memref<1x2x8x32xbf16, #tpu.memory_space<vmem>>, vector<1x1x8x32xbf16>
    %296 = vector.shape_cast %295 : vector<1x1x8x32xbf16> to vector<8x32xbf16>
    %297 = vector.shape_cast %294 : vector<8x32xbf16> to vector<1x1x8x32xbf16>
    tpu.vector_store %arg20[%c0_141, %c0_142, %c0_143, %c0_144], %297 {strides = array<i32>} : memref<1x2x8x32xbf16, #tpu.memory_space<vmem>>, vector<1x1x8x32xbf16>,
    %c1_145 = arith.constant 1 : index
    %c0_146 = arith.constant 0 : index
    %c0_147 = arith.constant 0 : index
    %298 = vector.load %arg18[%c1_145, %c0_146, %c0_147] : memref<2x16x32xbf16, #tpu.memory_space<vmem>>, vector<1x16x32xbf16>
    %299 = vector.shape_cast %298 : vector<1x16x32xbf16> to vector<16x32xbf16>
    %300 = arith.truncf %285 : vector<8x16xf32> to vector<8x16xbf16>
    %cst_148 = arith.constant dense<0.000000e+00> : vector<8x32xf32>
    %301 = tpu.matmul %300, %299, %cst_148 {dimension_numbers = #tpu.dot_dimension_numbers<[1], [0], [0], [1], [0, 0, 1, 1], [], []>} : vector<8x16xbf16>, vector<16x32xbf16>, vector<8x32xf32> -> vector<8x32xf32>
    %c1_149 = arith.constant 1 : index
    %c0_150 = arith.constant 0 : index
    %c0_151 = arith.constant 0 : index
    %302 = vector.load %arg19[%c1_149, %c0_150, %c0_151] : memref<2x1x32xf32, #tpu.memory_space<vmem>>, vector<1x1x32xf32>
    %303 = vector.shape_cast %302 : vector<1x1x32xf32> to vector<1x32xf32>
    %304 = vector.broadcast %303 : vector<1x32xf32> to vector<8x32xf32>
    %305 = arith.addf %301, %304 : vector<8x32xf32>
    %306 = arith.truncf %305 : vector<8x32xf32> to vector<8x32xbf16>
    %c0_152 = arith.constant 0 : index
    %c1_153 = arith.constant 1 : index
    %c0_154 = arith.constant 0 : index
    %c0_155 = arith.constant 0 : index
    %307 = vector.load %arg20[%c0_152, %c1_153, %c0_154, %c0_155] : memref<1x2x8x32xbf16, #tpu.memory_space<vmem>>, vector<1x1x8x32xbf16>
    %308 = vector.shape_cast %307 : vector<1x1x8x32xbf16> to vector<8x32xbf16>
    %309 = vector.shape_cast %306 : vector<8x32xbf16> to vector<1x1x8x32xbf16>
    tpu.vector_store %arg20[%c0_152, %c1_153, %c0_154, %c0_155], %309 {strides = array<i32>} : memref<1x2x8x32xbf16, #tpu.memory_space<vmem>>, vector<1x1x8x32xbf16>,
    return
  }
  func.func @transform_0(%arg0: i32) -> (i32, i32, i32) {
    %c0_i32 = arith.constant 0 : i32
    %c0_i32_0 = arith.constant 0 : i32
    %c0_i32_1 = arith.constant 0 : i32
    return %arg0, %c0_i32, %c0_i32_0 : i32, i32, i32
  }
  func.func @transform_1(%arg0: i32) -> (i32, i32) {
    %c0_i32 = arith.constant 0 : i32
    %c0_i32_0 = arith.constant 0 : i32
    %c0_i32_1 = arith.constant 0 : i32
    return %c0_i32, %c0_i32_0 : i32, i32
  }
  func.func @transform_2(%arg0: i32) -> (i32, i32) {
    %c0_i32 = arith.constant 0 : i32
    %c0_i32_0 = arith.constant 0 : i32
    %c0_i32_1 = arith.constant 0 : i32
    return %c0_i32, %c0_i32_0 : i32, i32
  }
  func.func @transform_3(%arg0: i32) -> (i32, i32, i32) {
    %c0_i32 = arith.constant 0 : i32
    %c0_i32_0 = arith.constant 0 : i32
    %c0_i32_1 = arith.constant 0 : i32
    %c0_i32_2 = arith.constant 0 : i32
    return %c0_i32, %c0_i32_0, %c0_i32_1 : i32, i32, i32
  }
  func.func @transform_4(%arg0: i32) -> (i32, i32, i32) {
    %c0_i32 = arith.constant 0 : i32
    %c0_i32_0 = arith.constant 0 : i32
    %c0_i32_1 = arith.constant 0 : i32
    %c0_i32_2 = arith.constant 0 : i32
    return %c0_i32, %c0_i32_0, %c0_i32_1 : i32, i32, i32
  }
  func.func @transform_5(%arg0: i32) -> (i32, i32, i32) {
    %c0_i32 = arith.constant 0 : i32
    %c0_i32_0 = arith.constant 0 : i32
    %c0_i32_1 = arith.constant 0 : i32
    %c0_i32_2 = arith.constant 0 : i32
    return %c0_i32, %c0_i32_0, %c0_i32_1 : i32, i32, i32
  }
  func.func @transform_6(%arg0: i32) -> (i32, i32, i32) {
    %c0_i32 = arith.constant 0 : i32
    %c0_i32_0 = arith.constant 0 : i32
    %c0_i32_1 = arith.constant 0 : i32
    %c0_i32_2 = arith.constant 0 : i32
    return %c0_i32, %c0_i32_0, %c0_i32_1 : i32, i32, i32
  }
  func.func @transform_7(%arg0: i32) -> (i32, i32, i32) {
    %c0_i32 = arith.constant 0 : i32
    %c0_i32_0 = arith.constant 0 : i32
    %c0_i32_1 = arith.constant 0 : i32
    %c0_i32_2 = arith.constant 0 : i32
    return %c0_i32, %c0_i32_0, %c0_i32_1 : i32, i32, i32
  }
  func.func @transform_8(%arg0: i32) -> (i32, i32, i32) {
    %c0_i32 = arith.constant 0 : i32
    %c0_i32_0 = arith.constant 0 : i32
    %c0_i32_1 = arith.constant 0 : i32
    %c0_i32_2 = arith.constant 0 : i32
    return %c0_i32, %c0_i32_0, %c0_i32_1 : i32, i32, i32
  }
  func.func @transform_9(%arg0: i32) -> (i32, i32, i32) {
    %c0_i32 = arith.constant 0 : i32
    %c0_i32_0 = arith.constant 0 : i32
    %c0_i32_1 = arith.constant 0 : i32
    %c0_i32_2 = arith.constant 0 : i32
    return %c0_i32, %c0_i32_0, %c0_i32_1 : i32, i32, i32
  }
  func.func @transform_10(%arg0: i32) -> (i32, i32, i32) {
    %c0_i32 = arith.constant 0 : i32
    %c0_i32_0 = arith.constant 0 : i32
    %c0_i32_1 = arith.constant 0 : i32
    %c0_i32_2 = arith.constant 0 : i32
    return %c0_i32, %c0_i32_0, %c0_i32_1 : i32, i32, i32
  }
  func.func @transform_11(%arg0: i32) -> (i32, i32, i32) {
    %c0_i32 = arith.constant 0 : i32
    %c0_i32_0 = arith.constant 0 : i32
    %c0_i32_1 = arith.constant 0 : i32
    %c0_i32_2 = arith.constant 0 : i32
    return %c0_i32, %c0_i32_0, %c0_i32_1 : i32, i32, i32
  }
  func.func @transform_12(%arg0: i32) -> (i32, i32, i32) {
    %c0_i32 = arith.constant 0 : i32
    %c0_i32_0 = arith.constant 0 : i32
    %c0_i32_1 = arith.constant 0 : i32
    %c0_i32_2 = arith.constant 0 : i32
    return %c0_i32, %c0_i32_0, %c0_i32_1 : i32, i32, i32
  }
  func.func @transform_13(%arg0: i32) -> (i32, i32, i32) {
    %c0_i32 = arith.constant 0 : i32
    %c0_i32_0 = arith.constant 0 : i32
    %c0_i32_1 = arith.constant 0 : i32
    %c0_i32_2 = arith.constant 0 : i32
    return %c0_i32, %c0_i32_0, %c0_i32_1 : i32, i32, i32
  }
  func.func @transform_14(%arg0: i32) -> (i32, i32, i32) {
    %c0_i32 = arith.constant 0 : i32
    %c0_i32_0 = arith.constant 0 : i32
    %c0_i32_1 = arith.constant 0 : i32
    %c0_i32_2 = arith.constant 0 : i32
    return %c0_i32, %c0_i32_0, %c0_i32_1 : i32, i32, i32
  }
  func.func @transform_15(%arg0: i32) -> (i32, i32) {
    %c0_i32 = arith.constant 0 : i32
    %c0_i32_0 = arith.constant 0 : i32
    %c0_i32_1 = arith.constant 0 : i32
    return %c0_i32, %c0_i32_0 : i32, i32
  }
  func.func @transform_16(%arg0: i32) -> (i32, i32) {
    %c0_i32 = arith.constant 0 : i32
    %c0_i32_0 = arith.constant 0 : i32
    %c0_i32_1 = arith.constant 0 : i32
    return %c0_i32, %c0_i32_0 : i32, i32
  }
  func.func @transform_17(%arg0: i32) -> (i32, i32, i32) {
    %c0_i32 = arith.constant 0 : i32
    %c0_i32_0 = arith.constant 0 : i32
    %c0_i32_1 = arith.constant 0 : i32
    %c0_i32_2 = arith.constant 0 : i32
    return %c0_i32, %c0_i32_0, %c0_i32_1 : i32, i32, i32
  }
  func.func @transform_18(%arg0: i32) -> (i32, i32, i32) {
    %c0_i32 = arith.constant 0 : i32
    %c0_i32_0 = arith.constant 0 : i32
    %c0_i32_1 = arith.constant 0 : i32
    %c0_i32_2 = arith.constant 0 : i32
    return %c0_i32, %c0_i32_0, %c0_i32_1 : i32, i32, i32
  }
  func.func @transform_19(%arg0: i32) -> (i32, i32, i32, i32) {
    %c0_i32 = arith.constant 0 : i32
    %c0_i32_0 = arith.constant 0 : i32
    %c0_i32_1 = arith.constant 0 : i32
    %c0_i32_2 = arith.constant 0 : i32
    return %arg0, %c0_i32, %c0_i32_0, %c0_i32_1 : i32, i32, i32, i32
  }
}

module attributes {stable_mosaic.version = 11 : i64} {
  func.func @_decoder_kernel(%arg0: i32, %arg1: i32, %arg2: memref<1x2x8x32xbf16, #tpu.memory_space<vmem>>, %arg3: memref<1x1x1xf32, #tpu.memory_space<vmem>>, %arg4: memref<1x1x15xf32, #tpu.memory_space<vmem>>, %arg5: memref<1x1x1x16xf32, #tpu.memory_space<vmem>>, %arg6: memref<1x1x3x1xf32, #tpu.memory_space<vmem>>, %arg7: memref<3x16xf32, #tpu.memory_space<vmem>>, %arg8: memref<2x16x16xbf16, #tpu.memory_space<vmem>>, %arg9: memref<2x1x16xf32, #tpu.memory_space<vmem>>, %arg10: memref<2x16x16xbf16, #tpu.memory_space<vmem>>, %arg11: memref<2x1x16xf32, #tpu.memory_space<vmem>>, %arg12: memref<2x16x16xbf16, #tpu.memory_space<vmem>>, %arg13: memref<2x1x16xf32, #tpu.memory_space<vmem>>, %arg14: memref<2x16x16xbf16, #tpu.memory_space<vmem>>, %arg15: memref<2x1x16xf32, #tpu.memory_space<vmem>>, %arg16: memref<2x1x16xf32, #tpu.memory_space<vmem>>, %arg17: memref<2x1x16xf32, #tpu.memory_space<vmem>>, %arg18: memref<2x1x16xf32, #tpu.memory_space<vmem>>, %arg19: memref<2x1x16xf32, #tpu.memory_space<vmem>>, %arg20: memref<2x1x16xf32, #tpu.memory_space<vmem>>, %arg21: memref<2x1x16xf32, #tpu.memory_space<vmem>>, %arg22: memref<2x16x32xbf16, #tpu.memory_space<vmem>>, %arg23: memref<2x1x32xf32, #tpu.memory_space<vmem>>, %arg24: memref<2x32x16xbf16, #tpu.memory_space<vmem>>, %arg25: memref<2x1x16xf32, #tpu.memory_space<vmem>>, %arg26: memref<1x16xf32, #tpu.memory_space<vmem>>, %arg27: memref<1x16xf32, #tpu.memory_space<vmem>>, %arg28: memref<16x2xbf16, #tpu.memory_space<vmem>>, %arg29: memref<1x2xf32, #tpu.memory_space<vmem>>, %arg30: memref<1x3x4xf32, #tpu.memory_space<vmem>>, %arg31: memref<3x15xf32, #tpu.memory_space<vmem>>) attributes {dimension_semantics = [#tpu.dimension_semantics<parallel>, #tpu.dimension_semantics<arbitrary>], iteration_bounds = array<i64: 2, 4>, scalar_prefetch = 0 : i64, scratch_operands = 1 : i64, tpu.core_type = #tpu.core_type<tc>, window_params = [{transform_indices = @transform_0, window_bounds = array<i64: 1, 2, 8, 32>}, {transform_indices = @transform_1, window_bounds = array<i64: 1, 1, 1>}, {transform_indices = @transform_2, window_bounds = array<i64: 1, 1, 15>}, {transform_indices = @transform_3, window_bounds = array<i64: 1, 1, 1, 16>}, {transform_indices = @transform_4, window_bounds = array<i64: 1, 1, 3, 1>}, {pipeline_mode = #tpu.pipeline_mode<synchronous>, transform_indices = @transform_5, window_bounds = array<i64: 3, 16>}, {pipeline_mode = #tpu.pipeline_mode<synchronous>, transform_indices = @transform_6, window_bounds = array<i64: 2, 16, 16>}, {pipeline_mode = #tpu.pipeline_mode<synchronous>, transform_indices = @transform_7, window_bounds = array<i64: 2, 1, 16>}, {pipeline_mode = #tpu.pipeline_mode<synchronous>, transform_indices = @transform_8, window_bounds = array<i64: 2, 16, 16>}, {pipeline_mode = #tpu.pipeline_mode<synchronous>, transform_indices = @transform_9, window_bounds = array<i64: 2, 1, 16>}, {pipeline_mode = #tpu.pipeline_mode<synchronous>, transform_indices = @transform_10, window_bounds = array<i64: 2, 16, 16>}, {pipeline_mode = #tpu.pipeline_mode<synchronous>, transform_indices = @transform_11, window_bounds = array<i64: 2, 1, 16>}, {pipeline_mode = #tpu.pipeline_mode<synchronous>, transform_indices = @transform_12, window_bounds = array<i64: 2, 16, 16>}, {pipeline_mode = #tpu.pipeline_mode<synchronous>, transform_indices = @transform_13, window_bounds = array<i64: 2, 1, 16>}, {pipeline_mode = #tpu.pipeline_mode<synchronous>, transform_indices = @transform_14, window_bounds = array<i64: 2, 1, 16>}, {pipeline_mode = #tpu.pipeline_mode<synchronous>, transform_indices = @transform_15, window_bounds = array<i64: 2, 1, 16>}, {pipeline_mode = #tpu.pipeline_mode<synchronous>, transform_indices = @transform_16, window_bounds = array<i64: 2, 1, 16>}, {pipeline_mode = #tpu.pipeline_mode<synchronous>, transform_indices = @transform_17, window_bounds = array<i64: 2, 1, 16>}, {pipeline_mode = #tpu.pipeline_mode<synchronous>, transform_indices = @transform_18, window_bounds = array<i64: 2, 1, 16>}, {pipeline_mode = #tpu.pipeline_mode<synchronous>, transform_indices = @transform_19, window_bounds = array<i64: 2, 1, 16>}, {pipeline_mode = #tpu.pipeline_mode<synchronous>, transform_indices = @transform_20, window_bounds = array<i64: 2, 16, 32>}, {pipeline_mode = #tpu.pipeline_mode<synchronous>, transform_indices = @transform_21, window_bounds = array<i64: 2, 1, 32>}, {pipeline_mode = #tpu.pipeline_mode<synchronous>, transform_indices = @transform_22, window_bounds = array<i64: 2, 32, 16>}, {pipeline_mode = #tpu.pipeline_mode<synchronous>, transform_indices = @transform_23, window_bounds = array<i64: 2, 1, 16>}, {pipeline_mode = #tpu.pipeline_mode<synchronous>, transform_indices = @transform_24, window_bounds = array<i64: 1, 16>}, {pipeline_mode = #tpu.pipeline_mode<synchronous>, transform_indices = @transform_25, window_bounds = array<i64: 1, 16>}, {pipeline_mode = #tpu.pipeline_mode<synchronous>, transform_indices = @transform_26, window_bounds = array<i64: 16, 2>}, {pipeline_mode = #tpu.pipeline_mode<synchronous>, transform_indices = @transform_27, window_bounds = array<i64: 1, 2>}, {transform_indices = @transform_28, window_bounds = array<i64: 1, 3, 4>}]} {
    %c0_i32 = arith.constant 0 : i32
    %0 = arith.cmpi eq, %arg1, %c0_i32 : i32
    %1 = arith.extui %0 : i1 to i32
    %c0_i32_0 = arith.constant 0 : i32
    %2 = arith.cmpi ne, %1, %c0_i32_0 : i32
    scf.if %2 {
      %c0_218 = arith.constant 0 : index
      %c0_219 = arith.constant 0 : index
      %c0_220 = arith.constant 0 : index
      %444 = vector.load %arg4[%c0_218, %c0_219, %c0_220] : memref<1x1x15xf32, #tpu.memory_space<vmem>>, vector<1x1x15xf32>
      %445 = vector.shape_cast %444 : vector<1x1x15xf32> to vector<1x15xf32>
      %446 = vector.shape_cast %445 : vector<1x15xf32> to vector<1x15xf32>
      %447 = vector.broadcast %446 : vector<1x15xf32> to vector<3x15xf32>
      %c0_221 = arith.constant 0 : index
      %c0_222 = arith.constant 0 : index
      %448 = vector.load %arg31[%c0_221, %c0_222] : memref<3x15xf32, #tpu.memory_space<vmem>>, vector<3x15xf32>
      tpu.vector_store %arg31[%c0_221, %c0_222], %447 {strides = array<i32>} : memref<3x15xf32, #tpu.memory_space<vmem>>, vector<3x15xf32>,
    } else {
    }
    %c0 = arith.constant 0 : index
    %c0_1 = arith.constant 0 : index
    %3 = vector.load %arg31[%c0, %c0_1] : memref<3x15xf32, #tpu.memory_space<vmem>>, vector<3x15xf32>
    %c0_2 = arith.constant 0 : index
    %c0_3 = arith.constant 0 : index
    %c0_4 = arith.constant 0 : index
    %4 = vector.load %arg3[%c0_2, %c0_3, %c0_4] : memref<1x1x1xf32, #tpu.memory_space<vmem>>, vector<1x1x1xf32>
    %5 = vector.shape_cast %4 : vector<1x1x1xf32> to vector<1x1xf32>
    %6 = tpu.iota {dimensions = array<i32: 1>} : vector<3x15xi32>
    %c0_5 = arith.constant 0 : index
    %c0_6 = arith.constant 0 : index
    %7 = vector.load %arg7[%c0_5, %c0_6] : memref<3x16xf32, #tpu.memory_space<vmem>>, vector<3x16xf32>
    %c11_i32 = arith.constant 11 : i32
    %8 = arith.addi %c11_i32, %arg1 : i32
    %c1_i32 = arith.constant 1 : i32
    %9 = arith.subi %8, %c1_i32 : i32
    %10 = vector.broadcast %9 : i32 to vector<3x15xi32>
    %11 = arith.cmpi eq, %6, %10 : vector<3x15xi32>
    %12 = arith.extui %11 : vector<3x15xi1> to vector<3x15xi32>
    %13 = arith.sitofp %12 : vector<3x15xi32> to vector<3x15xf32>
    %14 = arith.mulf %3, %13 : vector<3x15xf32>
    %cst = arith.constant dense<0.000000e+00> : vector<3xf32>
    %15 = vector.multi_reduction <add>, %14, %cst [1] : vector<3x15xf32> to vector<3xf32>
    %16 = vector.shape_cast %15 : vector<3xf32> to vector<3x1xf32>
    %17 = vector.extract_strided_slice %7 {offsets = [0, 0], sizes = [1, 16], strides = [1, 1]} : vector<3x16xf32> to vector<1x16xf32>
    %18 = vector.broadcast %16 : vector<3x1xf32> to vector<3x16xf32>
    %19 = vector.broadcast %17 : vector<1x16xf32> to vector<3x16xf32>
    %20 = arith.mulf %18, %19 : vector<3x16xf32>
    %c11_i32_7 = arith.constant 11 : i32
    %21 = arith.addi %c11_i32_7, %arg1 : i32
    %c2_i32 = arith.constant 2 : i32
    %22 = arith.subi %21, %c2_i32 : i32
    %23 = vector.broadcast %22 : i32 to vector<3x15xi32>
    %24 = arith.cmpi eq, %6, %23 : vector<3x15xi32>
    %25 = arith.extui %24 : vector<3x15xi1> to vector<3x15xi32>
    %26 = arith.sitofp %25 : vector<3x15xi32> to vector<3x15xf32>
    %27 = arith.mulf %3, %26 : vector<3x15xf32>
    %cst_8 = arith.constant dense<0.000000e+00> : vector<3xf32>
    %28 = vector.multi_reduction <add>, %27, %cst_8 [1] : vector<3x15xf32> to vector<3xf32>
    %29 = vector.shape_cast %28 : vector<3xf32> to vector<3x1xf32>
    %30 = vector.extract_strided_slice %7 {offsets = [1, 0], sizes = [1, 16], strides = [1, 1]} : vector<3x16xf32> to vector<1x16xf32>
    %31 = vector.broadcast %29 : vector<3x1xf32> to vector<3x16xf32>
    %32 = vector.broadcast %30 : vector<1x16xf32> to vector<3x16xf32>
    %33 = arith.mulf %31, %32 : vector<3x16xf32>
    %34 = arith.addf %20, %33 : vector<3x16xf32>
    %c11_i32_9 = arith.constant 11 : i32
    %35 = arith.addi %c11_i32_9, %arg1 : i32
    %c3_i32 = arith.constant 3 : i32
    %36 = arith.subi %35, %c3_i32 : i32
    %37 = vector.broadcast %36 : i32 to vector<3x15xi32>
    %38 = arith.cmpi eq, %6, %37 : vector<3x15xi32>
    %39 = arith.extui %38 : vector<3x15xi1> to vector<3x15xi32>
    %40 = arith.sitofp %39 : vector<3x15xi32> to vector<3x15xf32>
    %41 = arith.mulf %3, %40 : vector<3x15xf32>
    %cst_10 = arith.constant dense<0.000000e+00> : vector<3xf32>
    %42 = vector.multi_reduction <add>, %41, %cst_10 [1] : vector<3x15xf32> to vector<3xf32>
    %43 = vector.shape_cast %42 : vector<3xf32> to vector<3x1xf32>
    %44 = vector.extract_strided_slice %7 {offsets = [2, 0], sizes = [1, 16], strides = [1, 1]} : vector<3x16xf32> to vector<1x16xf32>
    %45 = vector.broadcast %43 : vector<3x1xf32> to vector<3x16xf32>
    %46 = vector.broadcast %44 : vector<1x16xf32> to vector<3x16xf32>
    %47 = arith.mulf %45, %46 : vector<3x16xf32>
    %48 = arith.addf %34, %47 : vector<3x16xf32>
    %49 = vector.broadcast %5 : vector<1x1xf32> to vector<3x16xf32>
    %50 = arith.divf %48, %49 : vector<3x16xf32>
    %c0_11 = arith.constant 0 : index
    %c0_12 = arith.constant 0 : index
    %c0_13 = arith.constant 0 : index
    %c0_14 = arith.constant 0 : index
    %51 = vector.load %arg5[%c0_11, %c0_12, %c0_13, %c0_14] : memref<1x1x1x16xf32, #tpu.memory_space<vmem>>, vector<1x1x1x16xf32>
    %52 = vector.shape_cast %51 : vector<1x1x1x16xf32> to vector<1x16xf32>
    %53 = vector.broadcast %52 : vector<1x16xf32> to vector<3x16xf32>
    %54 = arith.addf %50, %53 : vector<3x16xf32>
    %c0_15 = arith.constant 0 : index
    %c0_16 = arith.constant 0 : index
    %c0_17 = arith.constant 0 : index
    %55 = vector.load %arg8[%c0_15, %c0_16, %c0_17] : memref<2x16x16xbf16, #tpu.memory_space<vmem>>, vector<1x16x16xbf16>
    %56 = vector.shape_cast %55 : vector<1x16x16xbf16> to vector<16x16xbf16>
    %57 = arith.truncf %54 : vector<3x16xf32> to vector<3x16xbf16>
    %cst_18 = arith.constant dense<0.000000e+00> : vector<3x16xf32>
    %58 = tpu.matmul %57, %56, %cst_18 {dimension_numbers = #tpu.dot_dimension_numbers<[1], [0], [0], [1], [0, 0, 1, 1], [], []>} : vector<3x16xbf16>, vector<16x16xbf16>, vector<3x16xf32> -> vector<3x16xf32>
    %c0_19 = arith.constant 0 : index
    %c0_20 = arith.constant 0 : index
    %c0_21 = arith.constant 0 : index
    %59 = vector.load %arg9[%c0_19, %c0_20, %c0_21] : memref<2x1x16xf32, #tpu.memory_space<vmem>>, vector<1x1x16xf32>
    %60 = vector.shape_cast %59 : vector<1x1x16xf32> to vector<1x16xf32>
    %61 = vector.broadcast %60 : vector<1x16xf32> to vector<3x16xf32>
    %62 = arith.addf %58, %61 : vector<3x16xf32>
    %c0_22 = arith.constant 0 : index
    %c0_23 = arith.constant 0 : index
    %c0_24 = arith.constant 0 : index
    %63 = vector.load %arg10[%c0_22, %c0_23, %c0_24] : memref<2x16x16xbf16, #tpu.memory_space<vmem>>, vector<1x16x16xbf16>
    %64 = vector.shape_cast %63 : vector<1x16x16xbf16> to vector<16x16xbf16>
    %65 = arith.truncf %62 : vector<3x16xf32> to vector<3x16xbf16>
    %cst_25 = arith.constant dense<0.000000e+00> : vector<3x16xf32>
    %66 = tpu.matmul %65, %64, %cst_25 {dimension_numbers = #tpu.dot_dimension_numbers<[1], [0], [0], [1], [0, 0, 1, 1], [], []>} : vector<3x16xbf16>, vector<16x16xbf16>, vector<3x16xf32> -> vector<3x16xf32>
    %c0_26 = arith.constant 0 : index
    %c0_27 = arith.constant 0 : index
    %c0_28 = arith.constant 0 : index
    %67 = vector.load %arg11[%c0_26, %c0_27, %c0_28] : memref<2x1x16xf32, #tpu.memory_space<vmem>>, vector<1x1x16xf32>
    %68 = vector.shape_cast %67 : vector<1x1x16xf32> to vector<1x16xf32>
    %69 = vector.broadcast %68 : vector<1x16xf32> to vector<3x16xf32>
    %70 = arith.addf %66, %69 : vector<3x16xf32>
    %71 = arith.addf %54, %70 : vector<3x16xf32>
    %c0_29 = arith.constant 0 : index
    %c0_30 = arith.constant 0 : index
    %c0_31 = arith.constant 0 : index
    %72 = vector.load %arg16[%c0_29, %c0_30, %c0_31] : memref<2x1x16xf32, #tpu.memory_space<vmem>>, vector<1x1x16xf32>
    %73 = vector.shape_cast %72 : vector<1x1x16xf32> to vector<1x16xf32>
    %c0_32 = arith.constant 0 : index
    %c0_33 = arith.constant 0 : index
    %c0_34 = arith.constant 0 : index
    %74 = vector.load %arg17[%c0_32, %c0_33, %c0_34] : memref<2x1x16xf32, #tpu.memory_space<vmem>>, vector<1x1x16xf32>
    %75 = vector.shape_cast %74 : vector<1x1x16xf32> to vector<1x16xf32>
    %cst_35 = arith.constant dense<0.000000e+00> : vector<3xf32>
    %76 = vector.multi_reduction <add>, %71, %cst_35 [1] : vector<3x16xf32> to vector<3xf32>
    %77 = vector.shape_cast %76 : vector<3xf32> to vector<3x1xf32>
    %cst_36 = arith.constant 1.600000e+01 : f32
    %78 = vector.broadcast %cst_36 : f32 to vector<3x1xf32>
    %79 = arith.divf %77, %78 : vector<3x1xf32>
    %80 = vector.broadcast %79 : vector<3x1xf32> to vector<3x16xf32>
    %81 = arith.subf %71, %80 : vector<3x16xf32>
    %82 = arith.mulf %81, %81 : vector<3x16xf32>
    %cst_37 = arith.constant dense<0.000000e+00> : vector<3xf32>
    %83 = vector.multi_reduction <add>, %82, %cst_37 [1] : vector<3x16xf32> to vector<3xf32>
    %84 = vector.shape_cast %83 : vector<3xf32> to vector<3x1xf32>
    %cst_38 = arith.constant 1.600000e+01 : f32
    %85 = vector.broadcast %cst_38 : f32 to vector<3x1xf32>
    %86 = arith.divf %84, %85 : vector<3x1xf32>
    %cst_39 = arith.constant 9.99999974E-6 : f32
    %87 = vector.broadcast %cst_39 : f32 to vector<3x1xf32>
    %88 = arith.addf %86, %87 : vector<3x1xf32>
    %89 = math.rsqrt %88 : vector<3x1xf32>
    %90 = vector.broadcast %89 : vector<3x1xf32> to vector<3x16xf32>
    %91 = arith.mulf %81, %90 : vector<3x16xf32>
    %92 = vector.broadcast %73 : vector<1x16xf32> to vector<3x16xf32>
    %93 = arith.mulf %91, %92 : vector<3x16xf32>
    %94 = vector.broadcast %75 : vector<1x16xf32> to vector<3x16xf32>
    %95 = arith.addf %93, %94 : vector<3x16xf32>
    %c0_40 = arith.constant 0 : index
    %c0_41 = arith.constant 0 : index
    %c0_42 = arith.constant 0 : index
    %96 = vector.load %arg12[%c0_40, %c0_41, %c0_42] : memref<2x16x16xbf16, #tpu.memory_space<vmem>>, vector<1x16x16xbf16>
    %97 = vector.shape_cast %96 : vector<1x16x16xbf16> to vector<16x16xbf16>
    %98 = arith.truncf %95 : vector<3x16xf32> to vector<3x16xbf16>
    %cst_43 = arith.constant dense<0.000000e+00> : vector<3x16xf32>
    %99 = tpu.matmul %98, %97, %cst_43 {dimension_numbers = #tpu.dot_dimension_numbers<[1], [0], [0], [1], [0, 0, 1, 1], [], []>} : vector<3x16xbf16>, vector<16x16xbf16>, vector<3x16xf32> -> vector<3x16xf32>
    %c0_44 = arith.constant 0 : index
    %c0_45 = arith.constant 0 : index
    %c0_46 = arith.constant 0 : index
    %100 = vector.load %arg13[%c0_44, %c0_45, %c0_46] : memref<2x1x16xf32, #tpu.memory_space<vmem>>, vector<1x1x16xf32>
    %101 = vector.shape_cast %100 : vector<1x1x16xf32> to vector<1x16xf32>
    %102 = vector.broadcast %101 : vector<1x16xf32> to vector<3x16xf32>
    %103 = arith.addf %99, %102 : vector<3x16xf32>
    %cst_47 = arith.constant 0.353553385 : f32
    %104 = vector.broadcast %cst_47 : f32 to vector<3x16xf32>
    %105 = arith.mulf %103, %104 : vector<3x16xf32>
    %c0_48 = arith.constant 0 : index
    %c0_49 = arith.constant 0 : index
    %c0_50 = arith.constant 0 : index
    %c0_51 = arith.constant 0 : index
    %106 = vector.load %arg2[%c0_48, %c0_49, %c0_50, %c0_51] : memref<1x2x8x32xbf16, #tpu.memory_space<vmem>>, vector<1x1x8x32xbf16>
    %107 = vector.shape_cast %106 : vector<1x1x8x32xbf16> to vector<8x32xbf16>
    %108 = vector.extract_strided_slice %107 {offsets = [0, 0], sizes = [8, 16], strides = [1, 1]} : vector<8x32xbf16> to vector<8x16xbf16>
    %109 = vector.extract_strided_slice %107 {offsets = [0, 16], sizes = [8, 16], strides = [1, 1]} : vector<8x32xbf16> to vector<8x16xbf16>
    %110 = vector.extract_strided_slice %105 {offsets = [0, 0], sizes = [3, 8], strides = [1, 1]} : vector<3x16xf32> to vector<3x8xf32>
    %111 = vector.extract_strided_slice %108 {offsets = [0, 0], sizes = [8, 8], strides = [1, 1]} : vector<8x16xbf16> to vector<8x8xbf16>
    %112 = arith.truncf %110 : vector<3x8xf32> to vector<3x8xbf16>
    %cst_52 = arith.constant dense<0.000000e+00> : vector<3x8xf32>
    %113 = tpu.matmul %112, %111, %cst_52 {dimension_numbers = #tpu.dot_dimension_numbers<[1], [1], [0], [0], [0, 0, 1, 0], [], []>} : vector<3x8xbf16>, vector<8x8xbf16>, vector<3x8xf32> -> vector<3x8xf32>
    %cst_53 = arith.constant dense<0xFF800000> : vector<3xf32>
    %114 = vector.multi_reduction <maximumf>, %113, %cst_53 [1] : vector<3x8xf32> to vector<3xf32>
    %115 = vector.shape_cast %114 : vector<3xf32> to vector<3x1xf32>
    %116 = vector.broadcast %115 : vector<3x1xf32> to vector<3x8xf32>
    %117 = arith.subf %113, %116 : vector<3x8xf32>
    %118 = math.exp %117 : vector<3x8xf32>
    %cst_54 = arith.constant dense<0.000000e+00> : vector<3xf32>
    %119 = vector.multi_reduction <add>, %118, %cst_54 [1] : vector<3x8xf32> to vector<3xf32>
    %120 = vector.shape_cast %119 : vector<3xf32> to vector<3x1xf32>
    %121 = tpu.reciprocal %120 {approx = true} : vector<3x1xf32> -> vector<3x1xf32>
    %122 = vector.broadcast %121 : vector<3x1xf32> to vector<3x8xf32>
    %123 = arith.mulf %118, %122 : vector<3x8xf32>
    %124 = vector.extract_strided_slice %109 {offsets = [0, 0], sizes = [8, 8], strides = [1, 1]} : vector<8x16xbf16> to vector<8x8xbf16>
    %125 = arith.truncf %123 : vector<3x8xf32> to vector<3x8xbf16>
    %cst_55 = arith.constant dense<0.000000e+00> : vector<3x8xf32>
    %126 = tpu.matmul %125, %124, %cst_55 {dimension_numbers = #tpu.dot_dimension_numbers<[1], [0], [0], [1], [0, 0, 1, 1], [], []>} : vector<3x8xbf16>, vector<8x8xbf16>, vector<3x8xf32> -> vector<3x8xf32>
    %127 = vector.extract_strided_slice %105 {offsets = [0, 8], sizes = [3, 8], strides = [1, 1]} : vector<3x16xf32> to vector<3x8xf32>
    %128 = vector.extract_strided_slice %108 {offsets = [0, 8], sizes = [8, 8], strides = [1, 1]} : vector<8x16xbf16> to vector<8x8xbf16>
    %129 = arith.truncf %127 : vector<3x8xf32> to vector<3x8xbf16>
    %cst_56 = arith.constant dense<0.000000e+00> : vector<3x8xf32>
    %130 = tpu.matmul %129, %128, %cst_56 {dimension_numbers = #tpu.dot_dimension_numbers<[1], [1], [0], [0], [0, 0, 1, 0], [], []>} : vector<3x8xbf16>, vector<8x8xbf16>, vector<3x8xf32> -> vector<3x8xf32>
    %cst_57 = arith.constant dense<0xFF800000> : vector<3xf32>
    %131 = vector.multi_reduction <maximumf>, %130, %cst_57 [1] : vector<3x8xf32> to vector<3xf32>
    %132 = vector.shape_cast %131 : vector<3xf32> to vector<3x1xf32>
    %133 = vector.broadcast %132 : vector<3x1xf32> to vector<3x8xf32>
    %134 = arith.subf %130, %133 : vector<3x8xf32>
    %135 = math.exp %134 : vector<3x8xf32>
    %cst_58 = arith.constant dense<0.000000e+00> : vector<3xf32>
    %136 = vector.multi_reduction <add>, %135, %cst_58 [1] : vector<3x8xf32> to vector<3xf32>
    %137 = vector.shape_cast %136 : vector<3xf32> to vector<3x1xf32>
    %138 = tpu.reciprocal %137 {approx = true} : vector<3x1xf32> -> vector<3x1xf32>
    %139 = vector.broadcast %138 : vector<3x1xf32> to vector<3x8xf32>
    %140 = arith.mulf %135, %139 : vector<3x8xf32>
    %141 = vector.extract_strided_slice %109 {offsets = [0, 8], sizes = [8, 8], strides = [1, 1]} : vector<8x16xbf16> to vector<8x8xbf16>
    %142 = arith.truncf %140 : vector<3x8xf32> to vector<3x8xbf16>
    %cst_59 = arith.constant dense<0.000000e+00> : vector<3x8xf32>
    %143 = tpu.matmul %142, %141, %cst_59 {dimension_numbers = #tpu.dot_dimension_numbers<[1], [0], [0], [1], [0, 0, 1, 1], [], []>} : vector<3x8xbf16>, vector<8x8xbf16>, vector<3x8xf32> -> vector<3x8xf32>
    %144 = tpu.concatenate %126, %143 in 1 : vector<3x8xf32>, vector<3x8xf32> -> vector<3x16xf32>
    %c0_60 = arith.constant 0 : index
    %c0_61 = arith.constant 0 : index
    %c0_62 = arith.constant 0 : index
    %145 = vector.load %arg14[%c0_60, %c0_61, %c0_62] : memref<2x16x16xbf16, #tpu.memory_space<vmem>>, vector<1x16x16xbf16>
    %146 = vector.shape_cast %145 : vector<1x16x16xbf16> to vector<16x16xbf16>
    %147 = arith.truncf %144 : vector<3x16xf32> to vector<3x16xbf16>
    %cst_63 = arith.constant dense<0.000000e+00> : vector<3x16xf32>
    %148 = tpu.matmul %147, %146, %cst_63 {dimension_numbers = #tpu.dot_dimension_numbers<[1], [0], [0], [1], [0, 0, 1, 1], [], []>} : vector<3x16xbf16>, vector<16x16xbf16>, vector<3x16xf32> -> vector<3x16xf32>
    %c0_64 = arith.constant 0 : index
    %c0_65 = arith.constant 0 : index
    %c0_66 = arith.constant 0 : index
    %149 = vector.load %arg15[%c0_64, %c0_65, %c0_66] : memref<2x1x16xf32, #tpu.memory_space<vmem>>, vector<1x1x16xf32>
    %150 = vector.shape_cast %149 : vector<1x1x16xf32> to vector<1x16xf32>
    %151 = vector.broadcast %150 : vector<1x16xf32> to vector<3x16xf32>
    %152 = arith.addf %148, %151 : vector<3x16xf32>
    %153 = arith.addf %95, %152 : vector<3x16xf32>
    %c0_67 = arith.constant 0 : index
    %c0_68 = arith.constant 0 : index
    %c0_69 = arith.constant 0 : index
    %154 = vector.load %arg18[%c0_67, %c0_68, %c0_69] : memref<2x1x16xf32, #tpu.memory_space<vmem>>, vector<1x1x16xf32>
    %155 = vector.shape_cast %154 : vector<1x1x16xf32> to vector<1x16xf32>
    %c0_70 = arith.constant 0 : index
    %c0_71 = arith.constant 0 : index
    %c0_72 = arith.constant 0 : index
    %156 = vector.load %arg19[%c0_70, %c0_71, %c0_72] : memref<2x1x16xf32, #tpu.memory_space<vmem>>, vector<1x1x16xf32>
    %157 = vector.shape_cast %156 : vector<1x1x16xf32> to vector<1x16xf32>
    %cst_73 = arith.constant dense<0.000000e+00> : vector<3xf32>
    %158 = vector.multi_reduction <add>, %153, %cst_73 [1] : vector<3x16xf32> to vector<3xf32>
    %159 = vector.shape_cast %158 : vector<3xf32> to vector<3x1xf32>
    %cst_74 = arith.constant 1.600000e+01 : f32
    %160 = vector.broadcast %cst_74 : f32 to vector<3x1xf32>
    %161 = arith.divf %159, %160 : vector<3x1xf32>
    %162 = vector.broadcast %161 : vector<3x1xf32> to vector<3x16xf32>
    %163 = arith.subf %153, %162 : vector<3x16xf32>
    %164 = arith.mulf %163, %163 : vector<3x16xf32>
    %cst_75 = arith.constant dense<0.000000e+00> : vector<3xf32>
    %165 = vector.multi_reduction <add>, %164, %cst_75 [1] : vector<3x16xf32> to vector<3xf32>
    %166 = vector.shape_cast %165 : vector<3xf32> to vector<3x1xf32>
    %cst_76 = arith.constant 1.600000e+01 : f32
    %167 = vector.broadcast %cst_76 : f32 to vector<3x1xf32>
    %168 = arith.divf %166, %167 : vector<3x1xf32>
    %cst_77 = arith.constant 9.99999974E-6 : f32
    %169 = vector.broadcast %cst_77 : f32 to vector<3x1xf32>
    %170 = arith.addf %168, %169 : vector<3x1xf32>
    %171 = math.rsqrt %170 : vector<3x1xf32>
    %172 = vector.broadcast %171 : vector<3x1xf32> to vector<3x16xf32>
    %173 = arith.mulf %163, %172 : vector<3x16xf32>
    %174 = vector.broadcast %155 : vector<1x16xf32> to vector<3x16xf32>
    %175 = arith.mulf %173, %174 : vector<3x16xf32>
    %176 = vector.broadcast %157 : vector<1x16xf32> to vector<3x16xf32>
    %177 = arith.addf %175, %176 : vector<3x16xf32>
    %c0_78 = arith.constant 0 : index
    %c0_79 = arith.constant 0 : index
    %c0_80 = arith.constant 0 : index
    %178 = vector.load %arg22[%c0_78, %c0_79, %c0_80] : memref<2x16x32xbf16, #tpu.memory_space<vmem>>, vector<1x16x32xbf16>
    %179 = vector.shape_cast %178 : vector<1x16x32xbf16> to vector<16x32xbf16>
    %180 = arith.truncf %177 : vector<3x16xf32> to vector<3x16xbf16>
    %cst_81 = arith.constant dense<0.000000e+00> : vector<3x32xf32>
    %181 = tpu.matmul %180, %179, %cst_81 {dimension_numbers = #tpu.dot_dimension_numbers<[1], [0], [0], [1], [0, 0, 1, 1], [], []>} : vector<3x16xbf16>, vector<16x32xbf16>, vector<3x32xf32> -> vector<3x32xf32>
    %c0_82 = arith.constant 0 : index
    %c0_83 = arith.constant 0 : index
    %c0_84 = arith.constant 0 : index
    %182 = vector.load %arg23[%c0_82, %c0_83, %c0_84] : memref<2x1x32xf32, #tpu.memory_space<vmem>>, vector<1x1x32xf32>
    %183 = vector.shape_cast %182 : vector<1x1x32xf32> to vector<1x32xf32>
    %184 = vector.broadcast %183 : vector<1x32xf32> to vector<3x32xf32>
    %185 = arith.addf %181, %184 : vector<3x32xf32>
    %cst_85 = arith.constant 0.000000e+00 : f32
    %186 = vector.broadcast %cst_85 : f32 to vector<3x32xf32>
    %187 = arith.maximumf %185, %186 : vector<3x32xf32>
    %c0_86 = arith.constant 0 : index
    %c0_87 = arith.constant 0 : index
    %c0_88 = arith.constant 0 : index
    %188 = vector.load %arg24[%c0_86, %c0_87, %c0_88] : memref<2x32x16xbf16, #tpu.memory_space<vmem>>, vector<1x32x16xbf16>
    %189 = vector.shape_cast %188 : vector<1x32x16xbf16> to vector<32x16xbf16>
    %190 = arith.truncf %187 : vector<3x32xf32> to vector<3x32xbf16>
    %cst_89 = arith.constant dense<0.000000e+00> : vector<3x16xf32>
    %191 = tpu.matmul %190, %189, %cst_89 {dimension_numbers = #tpu.dot_dimension_numbers<[1], [0], [0], [1], [0, 0, 1, 1], [], []>} : vector<3x32xbf16>, vector<32x16xbf16>, vector<3x16xf32> -> vector<3x16xf32>
    %c0_90 = arith.constant 0 : index
    %c0_91 = arith.constant 0 : index
    %c0_92 = arith.constant 0 : index
    %192 = vector.load %arg25[%c0_90, %c0_91, %c0_92] : memref<2x1x16xf32, #tpu.memory_space<vmem>>, vector<1x1x16xf32>
    %193 = vector.shape_cast %192 : vector<1x1x16xf32> to vector<1x16xf32>
    %194 = vector.broadcast %193 : vector<1x16xf32> to vector<3x16xf32>
    %195 = arith.addf %191, %194 : vector<3x16xf32>
    %196 = arith.addf %177, %195 : vector<3x16xf32>
    %c0_93 = arith.constant 0 : index
    %c0_94 = arith.constant 0 : index
    %c0_95 = arith.constant 0 : index
    %197 = vector.load %arg20[%c0_93, %c0_94, %c0_95] : memref<2x1x16xf32, #tpu.memory_space<vmem>>, vector<1x1x16xf32>
    %198 = vector.shape_cast %197 : vector<1x1x16xf32> to vector<1x16xf32>
    %c0_96 = arith.constant 0 : index
    %c0_97 = arith.constant 0 : index
    %c0_98 = arith.constant 0 : index
    %199 = vector.load %arg21[%c0_96, %c0_97, %c0_98] : memref<2x1x16xf32, #tpu.memory_space<vmem>>, vector<1x1x16xf32>
    %200 = vector.shape_cast %199 : vector<1x1x16xf32> to vector<1x16xf32>
    %cst_99 = arith.constant dense<0.000000e+00> : vector<3xf32>
    %201 = vector.multi_reduction <add>, %196, %cst_99 [1] : vector<3x16xf32> to vector<3xf32>
    %202 = vector.shape_cast %201 : vector<3xf32> to vector<3x1xf32>
    %cst_100 = arith.constant 1.600000e+01 : f32
    %203 = vector.broadcast %cst_100 : f32 to vector<3x1xf32>
    %204 = arith.divf %202, %203 : vector<3x1xf32>
    %205 = vector.broadcast %204 : vector<3x1xf32> to vector<3x16xf32>
    %206 = arith.subf %196, %205 : vector<3x16xf32>
    %207 = arith.mulf %206, %206 : vector<3x16xf32>
    %cst_101 = arith.constant dense<0.000000e+00> : vector<3xf32>
    %208 = vector.multi_reduction <add>, %207, %cst_101 [1] : vector<3x16xf32> to vector<3xf32>
    %209 = vector.shape_cast %208 : vector<3xf32> to vector<3x1xf32>
    %cst_102 = arith.constant 1.600000e+01 : f32
    %210 = vector.broadcast %cst_102 : f32 to vector<3x1xf32>
    %211 = arith.divf %209, %210 : vector<3x1xf32>
    %cst_103 = arith.constant 9.99999974E-6 : f32
    %212 = vector.broadcast %cst_103 : f32 to vector<3x1xf32>
    %213 = arith.addf %211, %212 : vector<3x1xf32>
    %214 = math.rsqrt %213 : vector<3x1xf32>
    %215 = vector.broadcast %214 : vector<3x1xf32> to vector<3x16xf32>
    %216 = arith.mulf %206, %215 : vector<3x16xf32>
    %217 = vector.broadcast %198 : vector<1x16xf32> to vector<3x16xf32>
    %218 = arith.mulf %216, %217 : vector<3x16xf32>
    %219 = vector.broadcast %200 : vector<1x16xf32> to vector<3x16xf32>
    %220 = arith.addf %218, %219 : vector<3x16xf32>
    %c1 = arith.constant 1 : index
    %c0_104 = arith.constant 0 : index
    %c0_105 = arith.constant 0 : index
    %221 = vector.load %arg8[%c1, %c0_104, %c0_105] : memref<2x16x16xbf16, #tpu.memory_space<vmem>>, vector<1x16x16xbf16>
    %222 = vector.shape_cast %221 : vector<1x16x16xbf16> to vector<16x16xbf16>
    %223 = arith.truncf %220 : vector<3x16xf32> to vector<3x16xbf16>
    %cst_106 = arith.constant dense<0.000000e+00> : vector<3x16xf32>
    %224 = tpu.matmul %223, %222, %cst_106 {dimension_numbers = #tpu.dot_dimension_numbers<[1], [0], [0], [1], [0, 0, 1, 1], [], []>} : vector<3x16xbf16>, vector<16x16xbf16>, vector<3x16xf32> -> vector<3x16xf32>
    %c1_107 = arith.constant 1 : index
    %c0_108 = arith.constant 0 : index
    %c0_109 = arith.constant 0 : index
    %225 = vector.load %arg9[%c1_107, %c0_108, %c0_109] : memref<2x1x16xf32, #tpu.memory_space<vmem>>, vector<1x1x16xf32>
    %226 = vector.shape_cast %225 : vector<1x1x16xf32> to vector<1x16xf32>
    %227 = vector.broadcast %226 : vector<1x16xf32> to vector<3x16xf32>
    %228 = arith.addf %224, %227 : vector<3x16xf32>
    %c1_110 = arith.constant 1 : index
    %c0_111 = arith.constant 0 : index
    %c0_112 = arith.constant 0 : index
    %229 = vector.load %arg10[%c1_110, %c0_111, %c0_112] : memref<2x16x16xbf16, #tpu.memory_space<vmem>>, vector<1x16x16xbf16>
    %230 = vector.shape_cast %229 : vector<1x16x16xbf16> to vector<16x16xbf16>
    %231 = arith.truncf %228 : vector<3x16xf32> to vector<3x16xbf16>
    %cst_113 = arith.constant dense<0.000000e+00> : vector<3x16xf32>
    %232 = tpu.matmul %231, %230, %cst_113 {dimension_numbers = #tpu.dot_dimension_numbers<[1], [0], [0], [1], [0, 0, 1, 1], [], []>} : vector<3x16xbf16>, vector<16x16xbf16>, vector<3x16xf32> -> vector<3x16xf32>
    %c1_114 = arith.constant 1 : index
    %c0_115 = arith.constant 0 : index
    %c0_116 = arith.constant 0 : index
    %233 = vector.load %arg11[%c1_114, %c0_115, %c0_116] : memref<2x1x16xf32, #tpu.memory_space<vmem>>, vector<1x1x16xf32>
    %234 = vector.shape_cast %233 : vector<1x1x16xf32> to vector<1x16xf32>
    %235 = vector.broadcast %234 : vector<1x16xf32> to vector<3x16xf32>
    %236 = arith.addf %232, %235 : vector<3x16xf32>
    %237 = arith.addf %220, %236 : vector<3x16xf32>
    %c1_117 = arith.constant 1 : index
    %c0_118 = arith.constant 0 : index
    %c0_119 = arith.constant 0 : index
    %238 = vector.load %arg16[%c1_117, %c0_118, %c0_119] : memref<2x1x16xf32, #tpu.memory_space<vmem>>, vector<1x1x16xf32>
    %239 = vector.shape_cast %238 : vector<1x1x16xf32> to vector<1x16xf32>
    %c1_120 = arith.constant 1 : index
    %c0_121 = arith.constant 0 : index
    %c0_122 = arith.constant 0 : index
    %240 = vector.load %arg17[%c1_120, %c0_121, %c0_122] : memref<2x1x16xf32, #tpu.memory_space<vmem>>, vector<1x1x16xf32>
    %241 = vector.shape_cast %240 : vector<1x1x16xf32> to vector<1x16xf32>
    %cst_123 = arith.constant dense<0.000000e+00> : vector<3xf32>
    %242 = vector.multi_reduction <add>, %237, %cst_123 [1] : vector<3x16xf32> to vector<3xf32>
    %243 = vector.shape_cast %242 : vector<3xf32> to vector<3x1xf32>
    %cst_124 = arith.constant 1.600000e+01 : f32
    %244 = vector.broadcast %cst_124 : f32 to vector<3x1xf32>
    %245 = arith.divf %243, %244 : vector<3x1xf32>
    %246 = vector.broadcast %245 : vector<3x1xf32> to vector<3x16xf32>
    %247 = arith.subf %237, %246 : vector<3x16xf32>
    %248 = arith.mulf %247, %247 : vector<3x16xf32>
    %cst_125 = arith.constant dense<0.000000e+00> : vector<3xf32>
    %249 = vector.multi_reduction <add>, %248, %cst_125 [1] : vector<3x16xf32> to vector<3xf32>
    %250 = vector.shape_cast %249 : vector<3xf32> to vector<3x1xf32>
    %cst_126 = arith.constant 1.600000e+01 : f32
    %251 = vector.broadcast %cst_126 : f32 to vector<3x1xf32>
    %252 = arith.divf %250, %251 : vector<3x1xf32>
    %cst_127 = arith.constant 9.99999974E-6 : f32
    %253 = vector.broadcast %cst_127 : f32 to vector<3x1xf32>
    %254 = arith.addf %252, %253 : vector<3x1xf32>
    %255 = math.rsqrt %254 : vector<3x1xf32>
    %256 = vector.broadcast %255 : vector<3x1xf32> to vector<3x16xf32>
    %257 = arith.mulf %247, %256 : vector<3x16xf32>
    %258 = vector.broadcast %239 : vector<1x16xf32> to vector<3x16xf32>
    %259 = arith.mulf %257, %258 : vector<3x16xf32>
    %260 = vector.broadcast %241 : vector<1x16xf32> to vector<3x16xf32>
    %261 = arith.addf %259, %260 : vector<3x16xf32>
    %c1_128 = arith.constant 1 : index
    %c0_129 = arith.constant 0 : index
    %c0_130 = arith.constant 0 : index
    %262 = vector.load %arg12[%c1_128, %c0_129, %c0_130] : memref<2x16x16xbf16, #tpu.memory_space<vmem>>, vector<1x16x16xbf16>
    %263 = vector.shape_cast %262 : vector<1x16x16xbf16> to vector<16x16xbf16>
    %264 = arith.truncf %261 : vector<3x16xf32> to vector<3x16xbf16>
    %cst_131 = arith.constant dense<0.000000e+00> : vector<3x16xf32>
    %265 = tpu.matmul %264, %263, %cst_131 {dimension_numbers = #tpu.dot_dimension_numbers<[1], [0], [0], [1], [0, 0, 1, 1], [], []>} : vector<3x16xbf16>, vector<16x16xbf16>, vector<3x16xf32> -> vector<3x16xf32>
    %c1_132 = arith.constant 1 : index
    %c0_133 = arith.constant 0 : index
    %c0_134 = arith.constant 0 : index
    %266 = vector.load %arg13[%c1_132, %c0_133, %c0_134] : memref<2x1x16xf32, #tpu.memory_space<vmem>>, vector<1x1x16xf32>
    %267 = vector.shape_cast %266 : vector<1x1x16xf32> to vector<1x16xf32>
    %268 = vector.broadcast %267 : vector<1x16xf32> to vector<3x16xf32>
    %269 = arith.addf %265, %268 : vector<3x16xf32>
    %cst_135 = arith.constant 0.353553385 : f32
    %270 = vector.broadcast %cst_135 : f32 to vector<3x16xf32>
    %271 = arith.mulf %269, %270 : vector<3x16xf32>
    %c0_136 = arith.constant 0 : index
    %c1_137 = arith.constant 1 : index
    %c0_138 = arith.constant 0 : index
    %c0_139 = arith.constant 0 : index
    %272 = vector.load %arg2[%c0_136, %c1_137, %c0_138, %c0_139] : memref<1x2x8x32xbf16, #tpu.memory_space<vmem>>, vector<1x1x8x32xbf16>
    %273 = vector.shape_cast %272 : vector<1x1x8x32xbf16> to vector<8x32xbf16>
    %274 = vector.extract_strided_slice %273 {offsets = [0, 0], sizes = [8, 16], strides = [1, 1]} : vector<8x32xbf16> to vector<8x16xbf16>
    %275 = vector.extract_strided_slice %273 {offsets = [0, 16], sizes = [8, 16], strides = [1, 1]} : vector<8x32xbf16> to vector<8x16xbf16>
    %276 = vector.extract_strided_slice %271 {offsets = [0, 0], sizes = [3, 8], strides = [1, 1]} : vector<3x16xf32> to vector<3x8xf32>
    %277 = vector.extract_strided_slice %274 {offsets = [0, 0], sizes = [8, 8], strides = [1, 1]} : vector<8x16xbf16> to vector<8x8xbf16>
    %278 = arith.truncf %276 : vector<3x8xf32> to vector<3x8xbf16>
    %cst_140 = arith.constant dense<0.000000e+00> : vector<3x8xf32>
    %279 = tpu.matmul %278, %277, %cst_140 {dimension_numbers = #tpu.dot_dimension_numbers<[1], [1], [0], [0], [0, 0, 1, 0], [], []>} : vector<3x8xbf16>, vector<8x8xbf16>, vector<3x8xf32> -> vector<3x8xf32>
    %cst_141 = arith.constant dense<0xFF800000> : vector<3xf32>
    %280 = vector.multi_reduction <maximumf>, %279, %cst_141 [1] : vector<3x8xf32> to vector<3xf32>
    %281 = vector.shape_cast %280 : vector<3xf32> to vector<3x1xf32>
    %282 = vector.broadcast %281 : vector<3x1xf32> to vector<3x8xf32>
    %283 = arith.subf %279, %282 : vector<3x8xf32>
    %284 = math.exp %283 : vector<3x8xf32>
    %cst_142 = arith.constant dense<0.000000e+00> : vector<3xf32>
    %285 = vector.multi_reduction <add>, %284, %cst_142 [1] : vector<3x8xf32> to vector<3xf32>
    %286 = vector.shape_cast %285 : vector<3xf32> to vector<3x1xf32>
    %287 = tpu.reciprocal %286 {approx = true} : vector<3x1xf32> -> vector<3x1xf32>
    %288 = vector.broadcast %287 : vector<3x1xf32> to vector<3x8xf32>
    %289 = arith.mulf %284, %288 : vector<3x8xf32>
    %290 = vector.extract_strided_slice %275 {offsets = [0, 0], sizes = [8, 8], strides = [1, 1]} : vector<8x16xbf16> to vector<8x8xbf16>
    %291 = arith.truncf %289 : vector<3x8xf32> to vector<3x8xbf16>
    %cst_143 = arith.constant dense<0.000000e+00> : vector<3x8xf32>
    %292 = tpu.matmul %291, %290, %cst_143 {dimension_numbers = #tpu.dot_dimension_numbers<[1], [0], [0], [1], [0, 0, 1, 1], [], []>} : vector<3x8xbf16>, vector<8x8xbf16>, vector<3x8xf32> -> vector<3x8xf32>
    %293 = vector.extract_strided_slice %271 {offsets = [0, 8], sizes = [3, 8], strides = [1, 1]} : vector<3x16xf32> to vector<3x8xf32>
    %294 = vector.extract_strided_slice %274 {offsets = [0, 8], sizes = [8, 8], strides = [1, 1]} : vector<8x16xbf16> to vector<8x8xbf16>
    %295 = arith.truncf %293 : vector<3x8xf32> to vector<3x8xbf16>
    %cst_144 = arith.constant dense<0.000000e+00> : vector<3x8xf32>
    %296 = tpu.matmul %295, %294, %cst_144 {dimension_numbers = #tpu.dot_dimension_numbers<[1], [1], [0], [0], [0, 0, 1, 0], [], []>} : vector<3x8xbf16>, vector<8x8xbf16>, vector<3x8xf32> -> vector<3x8xf32>
    %cst_145 = arith.constant dense<0xFF800000> : vector<3xf32>
    %297 = vector.multi_reduction <maximumf>, %296, %cst_145 [1] : vector<3x8xf32> to vector<3xf32>
    %298 = vector.shape_cast %297 : vector<3xf32> to vector<3x1xf32>
    %299 = vector.broadcast %298 : vector<3x1xf32> to vector<3x8xf32>
    %300 = arith.subf %296, %299 : vector<3x8xf32>
    %301 = math.exp %300 : vector<3x8xf32>
    %cst_146 = arith.constant dense<0.000000e+00> : vector<3xf32>
    %302 = vector.multi_reduction <add>, %301, %cst_146 [1] : vector<3x8xf32> to vector<3xf32>
    %303 = vector.shape_cast %302 : vector<3xf32> to vector<3x1xf32>
    %304 = tpu.reciprocal %303 {approx = true} : vector<3x1xf32> -> vector<3x1xf32>
    %305 = vector.broadcast %304 : vector<3x1xf32> to vector<3x8xf32>
    %306 = arith.mulf %301, %305 : vector<3x8xf32>
    %307 = vector.extract_strided_slice %275 {offsets = [0, 8], sizes = [8, 8], strides = [1, 1]} : vector<8x16xbf16> to vector<8x8xbf16>
    %308 = arith.truncf %306 : vector<3x8xf32> to vector<3x8xbf16>
    %cst_147 = arith.constant dense<0.000000e+00> : vector<3x8xf32>
    %309 = tpu.matmul %308, %307, %cst_147 {dimension_numbers = #tpu.dot_dimension_numbers<[1], [0], [0], [1], [0, 0, 1, 1], [], []>} : vector<3x8xbf16>, vector<8x8xbf16>, vector<3x8xf32> -> vector<3x8xf32>
    %310 = tpu.concatenate %292, %309 in 1 : vector<3x8xf32>, vector<3x8xf32> -> vector<3x16xf32>
    %c1_148 = arith.constant 1 : index
    %c0_149 = arith.constant 0 : index
    %c0_150 = arith.constant 0 : index
    %311 = vector.load %arg14[%c1_148, %c0_149, %c0_150] : memref<2x16x16xbf16, #tpu.memory_space<vmem>>, vector<1x16x16xbf16>
    %312 = vector.shape_cast %311 : vector<1x16x16xbf16> to vector<16x16xbf16>
    %313 = arith.truncf %310 : vector<3x16xf32> to vector<3x16xbf16>
    %cst_151 = arith.constant dense<0.000000e+00> : vector<3x16xf32>
    %314 = tpu.matmul %313, %312, %cst_151 {dimension_numbers = #tpu.dot_dimension_numbers<[1], [0], [0], [1], [0, 0, 1, 1], [], []>} : vector<3x16xbf16>, vector<16x16xbf16>, vector<3x16xf32> -> vector<3x16xf32>
    %c1_152 = arith.constant 1 : index
    %c0_153 = arith.constant 0 : index
    %c0_154 = arith.constant 0 : index
    %315 = vector.load %arg15[%c1_152, %c0_153, %c0_154] : memref<2x1x16xf32, #tpu.memory_space<vmem>>, vector<1x1x16xf32>
    %316 = vector.shape_cast %315 : vector<1x1x16xf32> to vector<1x16xf32>
    %317 = vector.broadcast %316 : vector<1x16xf32> to vector<3x16xf32>
    %318 = arith.addf %314, %317 : vector<3x16xf32>
    %319 = arith.addf %261, %318 : vector<3x16xf32>
    %c1_155 = arith.constant 1 : index
    %c0_156 = arith.constant 0 : index
    %c0_157 = arith.constant 0 : index
    %320 = vector.load %arg18[%c1_155, %c0_156, %c0_157] : memref<2x1x16xf32, #tpu.memory_space<vmem>>, vector<1x1x16xf32>
    %321 = vector.shape_cast %320 : vector<1x1x16xf32> to vector<1x16xf32>
    %c1_158 = arith.constant 1 : index
    %c0_159 = arith.constant 0 : index
    %c0_160 = arith.constant 0 : index
    %322 = vector.load %arg19[%c1_158, %c0_159, %c0_160] : memref<2x1x16xf32, #tpu.memory_space<vmem>>, vector<1x1x16xf32>
    %323 = vector.shape_cast %322 : vector<1x1x16xf32> to vector<1x16xf32>
    %cst_161 = arith.constant dense<0.000000e+00> : vector<3xf32>
    %324 = vector.multi_reduction <add>, %319, %cst_161 [1] : vector<3x16xf32> to vector<3xf32>
    %325 = vector.shape_cast %324 : vector<3xf32> to vector<3x1xf32>
    %cst_162 = arith.constant 1.600000e+01 : f32
    %326 = vector.broadcast %cst_162 : f32 to vector<3x1xf32>
    %327 = arith.divf %325, %326 : vector<3x1xf32>
    %328 = vector.broadcast %327 : vector<3x1xf32> to vector<3x16xf32>
    %329 = arith.subf %319, %328 : vector<3x16xf32>
    %330 = arith.mulf %329, %329 : vector<3x16xf32>
    %cst_163 = arith.constant dense<0.000000e+00> : vector<3xf32>
    %331 = vector.multi_reduction <add>, %330, %cst_163 [1] : vector<3x16xf32> to vector<3xf32>
    %332 = vector.shape_cast %331 : vector<3xf32> to vector<3x1xf32>
    %cst_164 = arith.constant 1.600000e+01 : f32
    %333 = vector.broadcast %cst_164 : f32 to vector<3x1xf32>
    %334 = arith.divf %332, %333 : vector<3x1xf32>
    %cst_165 = arith.constant 9.99999974E-6 : f32
    %335 = vector.broadcast %cst_165 : f32 to vector<3x1xf32>
    %336 = arith.addf %334, %335 : vector<3x1xf32>
    %337 = math.rsqrt %336 : vector<3x1xf32>
    %338 = vector.broadcast %337 : vector<3x1xf32> to vector<3x16xf32>
    %339 = arith.mulf %329, %338 : vector<3x16xf32>
    %340 = vector.broadcast %321 : vector<1x16xf32> to vector<3x16xf32>
    %341 = arith.mulf %339, %340 : vector<3x16xf32>
    %342 = vector.broadcast %323 : vector<1x16xf32> to vector<3x16xf32>
    %343 = arith.addf %341, %342 : vector<3x16xf32>
    %c1_166 = arith.constant 1 : index
    %c0_167 = arith.constant 0 : index
    %c0_168 = arith.constant 0 : index
    %344 = vector.load %arg22[%c1_166, %c0_167, %c0_168] : memref<2x16x32xbf16, #tpu.memory_space<vmem>>, vector<1x16x32xbf16>
    %345 = vector.shape_cast %344 : vector<1x16x32xbf16> to vector<16x32xbf16>
    %346 = arith.truncf %343 : vector<3x16xf32> to vector<3x16xbf16>
    %cst_169 = arith.constant dense<0.000000e+00> : vector<3x32xf32>
    %347 = tpu.matmul %346, %345, %cst_169 {dimension_numbers = #tpu.dot_dimension_numbers<[1], [0], [0], [1], [0, 0, 1, 1], [], []>} : vector<3x16xbf16>, vector<16x32xbf16>, vector<3x32xf32> -> vector<3x32xf32>
    %c1_170 = arith.constant 1 : index
    %c0_171 = arith.constant 0 : index
    %c0_172 = arith.constant 0 : index
    %348 = vector.load %arg23[%c1_170, %c0_171, %c0_172] : memref<2x1x32xf32, #tpu.memory_space<vmem>>, vector<1x1x32xf32>
    %349 = vector.shape_cast %348 : vector<1x1x32xf32> to vector<1x32xf32>
    %350 = vector.broadcast %349 : vector<1x32xf32> to vector<3x32xf32>
    %351 = arith.addf %347, %350 : vector<3x32xf32>
    %cst_173 = arith.constant 0.000000e+00 : f32
    %352 = vector.broadcast %cst_173 : f32 to vector<3x32xf32>
    %353 = arith.maximumf %351, %352 : vector<3x32xf32>
    %c1_174 = arith.constant 1 : index
    %c0_175 = arith.constant 0 : index
    %c0_176 = arith.constant 0 : index
    %354 = vector.load %arg24[%c1_174, %c0_175, %c0_176] : memref<2x32x16xbf16, #tpu.memory_space<vmem>>, vector<1x32x16xbf16>
    %355 = vector.shape_cast %354 : vector<1x32x16xbf16> to vector<32x16xbf16>
    %356 = arith.truncf %353 : vector<3x32xf32> to vector<3x32xbf16>
    %cst_177 = arith.constant dense<0.000000e+00> : vector<3x16xf32>
    %357 = tpu.matmul %356, %355, %cst_177 {dimension_numbers = #tpu.dot_dimension_numbers<[1], [0], [0], [1], [0, 0, 1, 1], [], []>} : vector<3x32xbf16>, vector<32x16xbf16>, vector<3x16xf32> -> vector<3x16xf32>
    %c1_178 = arith.constant 1 : index
    %c0_179 = arith.constant 0 : index
    %c0_180 = arith.constant 0 : index
    %358 = vector.load %arg25[%c1_178, %c0_179, %c0_180] : memref<2x1x16xf32, #tpu.memory_space<vmem>>, vector<1x1x16xf32>
    %359 = vector.shape_cast %358 : vector<1x1x16xf32> to vector<1x16xf32>
    %360 = vector.broadcast %359 : vector<1x16xf32> to vector<3x16xf32>
    %361 = arith.addf %357, %360 : vector<3x16xf32>
    %362 = arith.addf %343, %361 : vector<3x16xf32>
    %c1_181 = arith.constant 1 : index
    %c0_182 = arith.constant 0 : index
    %c0_183 = arith.constant 0 : index
    %363 = vector.load %arg20[%c1_181, %c0_182, %c0_183] : memref<2x1x16xf32, #tpu.memory_space<vmem>>, vector<1x1x16xf32>
    %364 = vector.shape_cast %363 : vector<1x1x16xf32> to vector<1x16xf32>
    %c1_184 = arith.constant 1 : index
    %c0_185 = arith.constant 0 : index
    %c0_186 = arith.constant 0 : index
    %365 = vector.load %arg21[%c1_184, %c0_185, %c0_186] : memref<2x1x16xf32, #tpu.memory_space<vmem>>, vector<1x1x16xf32>
    %366 = vector.shape_cast %365 : vector<1x1x16xf32> to vector<1x16xf32>
    %cst_187 = arith.constant dense<0.000000e+00> : vector<3xf32>
    %367 = vector.multi_reduction <add>, %362, %cst_187 [1] : vector<3x16xf32> to vector<3xf32>
    %368 = vector.shape_cast %367 : vector<3xf32> to vector<3x1xf32>
    %cst_188 = arith.constant 1.600000e+01 : f32
    %369 = vector.broadcast %cst_188 : f32 to vector<3x1xf32>
    %370 = arith.divf %368, %369 : vector<3x1xf32>
    %371 = vector.broadcast %370 : vector<3x1xf32> to vector<3x16xf32>
    %372 = arith.subf %362, %371 : vector<3x16xf32>
    %373 = arith.mulf %372, %372 : vector<3x16xf32>
    %cst_189 = arith.constant dense<0.000000e+00> : vector<3xf32>
    %374 = vector.multi_reduction <add>, %373, %cst_189 [1] : vector<3x16xf32> to vector<3xf32>
    %375 = vector.shape_cast %374 : vector<3xf32> to vector<3x1xf32>
    %cst_190 = arith.constant 1.600000e+01 : f32
    %376 = vector.broadcast %cst_190 : f32 to vector<3x1xf32>
    %377 = arith.divf %375, %376 : vector<3x1xf32>
    %cst_191 = arith.constant 9.99999974E-6 : f32
    %378 = vector.broadcast %cst_191 : f32 to vector<3x1xf32>
    %379 = arith.addf %377, %378 : vector<3x1xf32>
    %380 = math.rsqrt %379 : vector<3x1xf32>
    %381 = vector.broadcast %380 : vector<3x1xf32> to vector<3x16xf32>
    %382 = arith.mulf %372, %381 : vector<3x16xf32>
    %383 = vector.broadcast %364 : vector<1x16xf32> to vector<3x16xf32>
    %384 = arith.mulf %382, %383 : vector<3x16xf32>
    %385 = vector.broadcast %366 : vector<1x16xf32> to vector<3x16xf32>
    %386 = arith.addf %384, %385 : vector<3x16xf32>
    %c0_192 = arith.constant 0 : index
    %c0_193 = arith.constant 0 : index
    %387 = vector.load %arg26[%c0_192, %c0_193] : memref<1x16xf32, #tpu.memory_space<vmem>>, vector<1x16xf32>
    %c0_194 = arith.constant 0 : index
    %c0_195 = arith.constant 0 : index
    %388 = vector.load %arg27[%c0_194, %c0_195] : memref<1x16xf32, #tpu.memory_space<vmem>>, vector<1x16xf32>
    %cst_196 = arith.constant dense<0.000000e+00> : vector<3xf32>
    %389 = vector.multi_reduction <add>, %386, %cst_196 [1] : vector<3x16xf32> to vector<3xf32>
    %390 = vector.shape_cast %389 : vector<3xf32> to vector<3x1xf32>
    %cst_197 = arith.constant 1.600000e+01 : f32
    %391 = vector.broadcast %cst_197 : f32 to vector<3x1xf32>
    %392 = arith.divf %390, %391 : vector<3x1xf32>
    %393 = vector.broadcast %392 : vector<3x1xf32> to vector<3x16xf32>
    %394 = arith.subf %386, %393 : vector<3x16xf32>
    %395 = arith.mulf %394, %394 : vector<3x16xf32>
    %cst_198 = arith.constant dense<0.000000e+00> : vector<3xf32>
    %396 = vector.multi_reduction <add>, %395, %cst_198 [1] : vector<3x16xf32> to vector<3xf32>
    %397 = vector.shape_cast %396 : vector<3xf32> to vector<3x1xf32>
    %cst_199 = arith.constant 1.600000e+01 : f32
    %398 = vector.broadcast %cst_199 : f32 to vector<3x1xf32>
    %399 = arith.divf %397, %398 : vector<3x1xf32>
    %cst_200 = arith.constant 9.99999974E-6 : f32
    %400 = vector.broadcast %cst_200 : f32 to vector<3x1xf32>
    %401 = arith.addf %399, %400 : vector<3x1xf32>
    %402 = math.rsqrt %401 : vector<3x1xf32>
    %403 = vector.broadcast %402 : vector<3x1xf32> to vector<3x16xf32>
    %404 = arith.mulf %394, %403 : vector<3x16xf32>
    %405 = vector.broadcast %387 : vector<1x16xf32> to vector<3x16xf32>
    %406 = arith.mulf %404, %405 : vector<3x16xf32>
    %407 = vector.broadcast %388 : vector<1x16xf32> to vector<3x16xf32>
    %408 = arith.addf %406, %407 : vector<3x16xf32>
    %c0_201 = arith.constant 0 : index
    %c0_202 = arith.constant 0 : index
    %409 = vector.load %arg28[%c0_201, %c0_202] : memref<16x2xbf16, #tpu.memory_space<vmem>>, vector<16x2xbf16>
    %410 = arith.truncf %408 : vector<3x16xf32> to vector<3x16xbf16>
    %cst_203 = arith.constant dense<0.000000e+00> : vector<3x2xf32>
    %411 = tpu.matmul %410, %409, %cst_203 {dimension_numbers = #tpu.dot_dimension_numbers<[1], [0], [0], [1], [0, 0, 1, 1], [], []>} : vector<3x16xbf16>, vector<16x2xbf16>, vector<3x2xf32> -> vector<3x2xf32>
    %c0_204 = arith.constant 0 : index
    %c0_205 = arith.constant 0 : index
    %412 = vector.load %arg29[%c0_204, %c0_205] : memref<1x2xf32, #tpu.memory_space<vmem>>, vector<1x2xf32>
    %413 = vector.broadcast %412 : vector<1x2xf32> to vector<3x2xf32>
    %414 = arith.addf %411, %413 : vector<3x2xf32>
    %415 = vector.extract_strided_slice %414 {offsets = [0, 0], sizes = [3, 1], strides = [1, 1]} : vector<3x2xf32> to vector<3x1xf32>
    %416 = vector.extract_strided_slice %414 {offsets = [0, 1], sizes = [3, 1], strides = [1, 1]} : vector<3x2xf32> to vector<3x1xf32>
    %cst_206 = arith.constant 0.000000e+00 : f32
    %417 = vector.broadcast %cst_206 : f32 to vector<3x1xf32>
    %418 = arith.maximumf %416, %417 : vector<3x1xf32>
    %419 = math.absf %416 : vector<3x1xf32>
    %cst_207 = arith.constant 0.000000e+00 : f32
    %420 = vector.broadcast %cst_207 : f32 to vector<3x1xf32>
    %421 = arith.subf %420, %419 : vector<3x1xf32>
    %422 = math.exp %421 : vector<3x1xf32>
    %cst_208 = arith.constant 1.000000e+00 : f32
    %423 = vector.broadcast %cst_208 : f32 to vector<3x1xf32>
    %424 = arith.addf %423, %422 : vector<3x1xf32>
    %425 = math.log %424 : vector<3x1xf32>
    %426 = arith.addf %418, %425 : vector<3x1xf32>
    %c0_209 = arith.constant 0 : index
    %c0_210 = arith.constant 0 : index
    %c0_211 = arith.constant 0 : index
    %c0_212 = arith.constant 0 : index
    %427 = vector.load %arg6[%c0_209, %c0_210, %c0_211, %c0_212] : memref<1x1x3x1xf32, #tpu.memory_space<vmem>>, vector<1x1x3x1xf32>
    %428 = vector.shape_cast %427 : vector<1x1x3x1xf32> to vector<3x1xf32>
    %429 = arith.mulf %426, %428 : vector<3x1xf32>
    %430 = arith.addf %415, %429 : vector<3x1xf32>
    %431 = vector.broadcast %5 : vector<1x1xf32> to vector<3x1xf32>
    %432 = arith.mulf %430, %431 : vector<3x1xf32>
    %433 = tpu.iota {dimensions = array<i32: 1>} : vector<3x15xi32>
    %c11_i32_213 = arith.constant 11 : i32
    %434 = arith.addi %c11_i32_213, %arg1 : i32
    %435 = vector.broadcast %434 : i32 to vector<3x15xi32>
    %436 = arith.cmpi eq, %433, %435 : vector<3x15xi32>
    %437 = vector.shape_cast %432 : vector<3x1xf32> to vector<3x1xf32>
    %438 = vector.broadcast %437 : vector<3x1xf32> to vector<3x15xf32>
    %439 = arith.select %436, %438, %3 : vector<3x15xi1>, vector<3x15xf32>
    %c0_214 = arith.constant 0 : index
    %c0_215 = arith.constant 0 : index
    %440 = vector.load %arg31[%c0_214, %c0_215] : memref<3x15xf32, #tpu.memory_space<vmem>>, vector<3x15xf32>
    tpu.vector_store %arg31[%c0_214, %c0_215], %439 {strides = array<i32>} : memref<3x15xf32, #tpu.memory_space<vmem>>, vector<3x15xf32>,
    %c3_i32_216 = arith.constant 3 : i32
    %441 = arith.cmpi eq, %arg1, %c3_i32_216 : i32
    %442 = arith.extui %441 : i1 to i32
    %c0_i32_217 = arith.constant 0 : i32
    %443 = arith.cmpi ne, %442, %c0_i32_217 : i32
    scf.if %443 {
      %444 = vector.extract_strided_slice %439 {offsets = [0, 11], sizes = [3, 4], strides = [1, 1]} : vector<3x15xf32> to vector<3x4xf32>
      %c0_218 = arith.constant 0 : index
      %c0_219 = arith.constant 0 : index
      %c0_220 = arith.constant 0 : index
      %445 = vector.load %arg30[%c0_218, %c0_219, %c0_220] : memref<1x3x4xf32, #tpu.memory_space<vmem>>, vector<1x3x4xf32>
      %446 = vector.shape_cast %445 : vector<1x3x4xf32> to vector<3x4xf32>
      %447 = vector.shape_cast %444 : vector<3x4xf32> to vector<1x3x4xf32>
      tpu.vector_store %arg30[%c0_218, %c0_219, %c0_220], %447 {strides = array<i32>} : memref<1x3x4xf32, #tpu.memory_space<vmem>>, vector<1x3x4xf32>,
    } else {
    }
    return
  }
  func.func @transform_0(%arg0: i32, %arg1: i32) -> (i32, i32, i32, i32) {
    %c0_i32 = arith.constant 0 : i32
    %c0_i32_0 = arith.constant 0 : i32
    %c0_i32_1 = arith.constant 0 : i32
    %c0_i32_2 = arith.constant 0 : i32
    return %arg0, %c0_i32, %c0_i32_0, %c0_i32_1 : i32, i32, i32, i32
  }
  func.func @transform_1(%arg0: i32, %arg1: i32) -> (i32, i32, i32) {
    %c0_i32 = arith.constant 0 : i32
    %c0_i32_0 = arith.constant 0 : i32
    %c0_i32_1 = arith.constant 0 : i32
    return %arg0, %c0_i32, %c0_i32_0 : i32, i32, i32
  }
  func.func @transform_2(%arg0: i32, %arg1: i32) -> (i32, i32, i32) {
    %c0_i32 = arith.constant 0 : i32
    %c0_i32_0 = arith.constant 0 : i32
    %c0_i32_1 = arith.constant 0 : i32
    return %arg0, %c0_i32, %c0_i32_0 : i32, i32, i32
  }
  func.func @transform_3(%arg0: i32, %arg1: i32) -> (i32, i32, i32, i32) {
    %c0_i32 = arith.constant 0 : i32
    %c0_i32_0 = arith.constant 0 : i32
    %c0_i32_1 = arith.constant 0 : i32
    return %arg0, %arg1, %c0_i32, %c0_i32_0 : i32, i32, i32, i32
  }
  func.func @transform_4(%arg0: i32, %arg1: i32) -> (i32, i32, i32, i32) {
    %c0_i32 = arith.constant 0 : i32
    %c0_i32_0 = arith.constant 0 : i32
    %c0_i32_1 = arith.constant 0 : i32
    return %arg0, %arg1, %c0_i32, %c0_i32_0 : i32, i32, i32, i32
  }
  func.func @transform_5(%arg0: i32, %arg1: i32) -> (i32, i32) {
    %c0_i32 = arith.constant 0 : i32
    %c0_i32_0 = arith.constant 0 : i32
    %c0_i32_1 = arith.constant 0 : i32
    return %c0_i32, %c0_i32_0 : i32, i32
  }
  func.func @transform_6(%arg0: i32, %arg1: i32) -> (i32, i32, i32) {
    %c0_i32 = arith.constant 0 : i32
    %c0_i32_0 = arith.constant 0 : i32
    %c0_i32_1 = arith.constant 0 : i32
    %c0_i32_2 = arith.constant 0 : i32
    return %c0_i32, %c0_i32_0, %c0_i32_1 : i32, i32, i32
  }
  func.func @transform_7(%arg0: i32, %arg1: i32) -> (i32, i32, i32) {
    %c0_i32 = arith.constant 0 : i32
    %c0_i32_0 = arith.constant 0 : i32
    %c0_i32_1 = arith.constant 0 : i32
    %c0_i32_2 = arith.constant 0 : i32
    return %c0_i32, %c0_i32_0, %c0_i32_1 : i32, i32, i32
  }
  func.func @transform_8(%arg0: i32, %arg1: i32) -> (i32, i32, i32) {
    %c0_i32 = arith.constant 0 : i32
    %c0_i32_0 = arith.constant 0 : i32
    %c0_i32_1 = arith.constant 0 : i32
    %c0_i32_2 = arith.constant 0 : i32
    return %c0_i32, %c0_i32_0, %c0_i32_1 : i32, i32, i32
  }
  func.func @transform_9(%arg0: i32, %arg1: i32) -> (i32, i32, i32) {
    %c0_i32 = arith.constant 0 : i32
    %c0_i32_0 = arith.constant 0 : i32
    %c0_i32_1 = arith.constant 0 : i32
    %c0_i32_2 = arith.constant 0 : i32
    return %c0_i32, %c0_i32_0, %c0_i32_1 : i32, i32, i32
  }
  func.func @transform_10(%arg0: i32, %arg1: i32) -> (i32, i32, i32) {
    %c0_i32 = arith.constant 0 : i32
    %c0_i32_0 = arith.constant 0 : i32
    %c0_i32_1 = arith.constant 0 : i32
    %c0_i32_2 = arith.constant 0 : i32
    return %c0_i32, %c0_i32_0, %c0_i32_1 : i32, i32, i32
  }
  func.func @transform_11(%arg0: i32, %arg1: i32) -> (i32, i32, i32) {
    %c0_i32 = arith.constant 0 : i32
    %c0_i32_0 = arith.constant 0 : i32
    %c0_i32_1 = arith.constant 0 : i32
    %c0_i32_2 = arith.constant 0 : i32
    return %c0_i32, %c0_i32_0, %c0_i32_1 : i32, i32, i32
  }
  func.func @transform_12(%arg0: i32, %arg1: i32) -> (i32, i32, i32) {
    %c0_i32 = arith.constant 0 : i32
    %c0_i32_0 = arith.constant 0 : i32
    %c0_i32_1 = arith.constant 0 : i32
    %c0_i32_2 = arith.constant 0 : i32
    return %c0_i32, %c0_i32_0, %c0_i32_1 : i32, i32, i32
  }
  func.func @transform_13(%arg0: i32, %arg1: i32) -> (i32, i32, i32) {
    %c0_i32 = arith.constant 0 : i32
    %c0_i32_0 = arith.constant 0 : i32
    %c0_i32_1 = arith.constant 0 : i32
    %c0_i32_2 = arith.constant 0 : i32
    return %c0_i32, %c0_i32_0, %c0_i32_1 : i32, i32, i32
  }
  func.func @transform_14(%arg0: i32, %arg1: i32) -> (i32, i32, i32) {
    %c0_i32 = arith.constant 0 : i32
    %c0_i32_0 = arith.constant 0 : i32
    %c0_i32_1 = arith.constant 0 : i32
    %c0_i32_2 = arith.constant 0 : i32
    return %c0_i32, %c0_i32_0, %c0_i32_1 : i32, i32, i32
  }
  func.func @transform_15(%arg0: i32, %arg1: i32) -> (i32, i32, i32) {
    %c0_i32 = arith.constant 0 : i32
    %c0_i32_0 = arith.constant 0 : i32
    %c0_i32_1 = arith.constant 0 : i32
    %c0_i32_2 = arith.constant 0 : i32
    return %c0_i32, %c0_i32_0, %c0_i32_1 : i32, i32, i32
  }
  func.func @transform_16(%arg0: i32, %arg1: i32) -> (i32, i32, i32) {
    %c0_i32 = arith.constant 0 : i32
    %c0_i32_0 = arith.constant 0 : i32
    %c0_i32_1 = arith.constant 0 : i32
    %c0_i32_2 = arith.constant 0 : i32
    return %c0_i32, %c0_i32_0, %c0_i32_1 : i32, i32, i32
  }
  func.func @transform_17(%arg0: i32, %arg1: i32) -> (i32, i32, i32) {
    %c0_i32 = arith.constant 0 : i32
    %c0_i32_0 = arith.constant 0 : i32
    %c0_i32_1 = arith.constant 0 : i32
    %c0_i32_2 = arith.constant 0 : i32
    return %c0_i32, %c0_i32_0, %c0_i32_1 : i32, i32, i32
  }
  func.func @transform_18(%arg0: i32, %arg1: i32) -> (i32, i32, i32) {
    %c0_i32 = arith.constant 0 : i32
    %c0_i32_0 = arith.constant 0 : i32
    %c0_i32_1 = arith.constant 0 : i32
    %c0_i32_2 = arith.constant 0 : i32
    return %c0_i32, %c0_i32_0, %c0_i32_1 : i32, i32, i32
  }
  func.func @transform_19(%arg0: i32, %arg1: i32) -> (i32, i32, i32) {
    %c0_i32 = arith.constant 0 : i32
    %c0_i32_0 = arith.constant 0 : i32
    %c0_i32_1 = arith.constant 0 : i32
    %c0_i32_2 = arith.constant 0 : i32
    return %c0_i32, %c0_i32_0, %c0_i32_1 : i32, i32, i32
  }
  func.func @transform_20(%arg0: i32, %arg1: i32) -> (i32, i32, i32) {
    %c0_i32 = arith.constant 0 : i32
    %c0_i32_0 = arith.constant 0 : i32
    %c0_i32_1 = arith.constant 0 : i32
    %c0_i32_2 = arith.constant 0 : i32
    return %c0_i32, %c0_i32_0, %c0_i32_1 : i32, i32, i32
  }
  func.func @transform_21(%arg0: i32, %arg1: i32) -> (i32, i32, i32) {
    %c0_i32 = arith.constant 0 : i32
    %c0_i32_0 = arith.constant 0 : i32
    %c0_i32_1 = arith.constant 0 : i32
    %c0_i32_2 = arith.constant 0 : i32
    return %c0_i32, %c0_i32_0, %c0_i32_1 : i32, i32, i32
  }
  func.func @transform_22(%arg0: i32, %arg1: i32) -> (i32, i32, i32) {
    %c0_i32 = arith.constant 0 : i32
    %c0_i32_0 = arith.constant 0 : i32
    %c0_i32_1 = arith.constant 0 : i32
    %c0_i32_2 = arith.constant 0 : i32
    return %c0_i32, %c0_i32_0, %c0_i32_1 : i32, i32, i32
  }
  func.func @transform_23(%arg0: i32, %arg1: i32) -> (i32, i32, i32) {
    %c0_i32 = arith.constant 0 : i32
    %c0_i32_0 = arith.constant 0 : i32
    %c0_i32_1 = arith.constant 0 : i32
    %c0_i32_2 = arith.constant 0 : i32
    return %c0_i32, %c0_i32_0, %c0_i32_1 : i32, i32, i32
  }
  func.func @transform_24(%arg0: i32, %arg1: i32) -> (i32, i32) {
    %c0_i32 = arith.constant 0 : i32
    %c0_i32_0 = arith.constant 0 : i32
    %c0_i32_1 = arith.constant 0 : i32
    return %c0_i32, %c0_i32_0 : i32, i32
  }
  func.func @transform_25(%arg0: i32, %arg1: i32) -> (i32, i32) {
    %c0_i32 = arith.constant 0 : i32
    %c0_i32_0 = arith.constant 0 : i32
    %c0_i32_1 = arith.constant 0 : i32
    return %c0_i32, %c0_i32_0 : i32, i32
  }
  func.func @transform_26(%arg0: i32, %arg1: i32) -> (i32, i32) {
    %c0_i32 = arith.constant 0 : i32
    %c0_i32_0 = arith.constant 0 : i32
    %c0_i32_1 = arith.constant 0 : i32
    return %c0_i32, %c0_i32_0 : i32, i32
  }
  func.func @transform_27(%arg0: i32, %arg1: i32) -> (i32, i32) {
    %c0_i32 = arith.constant 0 : i32
    %c0_i32_0 = arith.constant 0 : i32
    %c0_i32_1 = arith.constant 0 : i32
    return %c0_i32, %c0_i32_0 : i32, i32
  }
  func.func @transform_28(%arg0: i32, %arg1: i32) -> (i32, i32, i32) {
    %c0_i32 = arith.constant 0 : i32
    %c0_i32_0 = arith.constant 0 : i32
    %c0_i32_1 = arith.constant 0 : i32
    return %arg0, %c0_i32, %c0_i32_0 : i32, i32, i32
  }
}

</mosaic_0001>

<llo_original>
// kernel: forward.2
$region0: #{forward.2}
  #allocation0 [shape = 'u32[]', space=smem, size = 0x4, offset = 0x4, fixed_abs, tag = 'smem constant byte address 0x4 - core index']
  #allocation1 [shape = 'u32[72,128]{1,0:T(1,128)}', space=vmem, size = 0x9000, scoped, tag = 'internal scratch']
  %s0 = inlined_call_operand.vmem [shape: f32[2,8,9], index: 0, kind: input, shape index: {}]
  %s1 = inlined_call_operand.vmem [shape: bf16[9,16], index: 1, kind: input, shape index: {}]
  %s2 = inlined_call_operand.vmem [shape: f32[1,16], index: 2, kind: input, shape index: {}]
  %s3 = inlined_call_operand.vmem [shape: bf16[2,16,48], index: 3, kind: input, shape index: {}]
  %s4 = inlined_call_operand.vmem [shape: f32[2,1,48], index: 4, kind: input, shape index: {}]
  %s5 = inlined_call_operand.vmem [shape: bf16[2,16,16], index: 5, kind: input, shape index: {}]
  %s6 = inlined_call_operand.vmem [shape: f32[2,1,16], index: 6, kind: input, shape index: {}]
  %s7 = inlined_call_operand.vmem [shape: f32[2,1,16], index: 7, kind: input, shape index: {}, may-alias: {7,13}]
  %s8 = inlined_call_operand.vmem [shape: f32[2,1,16], index: 8, kind: input, shape index: {}, may-alias: {8,14}]
  %s9 = inlined_call_operand.vmem [shape: bf16[2,16,32], index: 9, kind: input, shape index: {}]
  %s10 = inlined_call_operand.vmem [shape: f32[2,1,32], index: 10, kind: input, shape index: {}]
  %s11 = inlined_call_operand.vmem [shape: bf16[2,32,16], index: 11, kind: input, shape index: {}]
  %s12 = inlined_call_operand.vmem [shape: f32[2,1,16], index: 12, kind: input, shape index: {}]
  %s13 = inlined_call_operand.vmem [shape: f32[2,1,16], index: 13, kind: input, shape index: {}, may-alias: {7,13}]
  %s14 = inlined_call_operand.vmem [shape: f32[2,1,16], index: 14, kind: input, shape index: {}, may-alias: {8,14}]
  %s15 = inlined_call_operand.vmem [shape: f32[1,16], index: 15, kind: input, shape index: {}]
  %s16 = inlined_call_operand.vmem [shape: f32[1,16], index: 16, kind: input, shape index: {}]
  %s17 = inlined_call_operand.vmem [shape: bf16[2,16,32], index: 17, kind: input, shape index: {}]
  %s18 = inlined_call_operand.vmem [shape: f32[2,1,32], index: 18, kind: input, shape index: {}]
  %s19 = inlined_call_operand.vmem [shape: bf16[2,2,8,32], index: 19, kind: output, shape index: {}]
  %s20 = sld [smem:[#allocation0]]
  $region109: #{forward.2} parent=0
    _
  %s22 = ssub.s32 1, %s20
  %s23 = scalar_select 0, %s22, %s20
  loop: start=0, step=1, limit=4
  $region2: #{forward.2} parent=0 // loop_pre_header
    _
  $region3: #{forward.2} parent=0 // loop_header
    %s25 = sphi 0, %s29
    %p26 = scmp.ge.s32.totalorder %s25, 4
    %s35 = sphi 0, %s37
    %s38 = sphi 0, %s35
    %s39 = sphi 0, %s38
    %s55 = sphi 0, %s39
    %s59 = sphi 0, %s59
    %s61 = sphi 0, %s59
    %s62 = sphi 0, %s61
    %s76 = sphi 0, %s62
    %s80 = sphi 0, %s80
    %s82 = sphi 0, %s80
    %s83 = sphi 0, %s82
    %s97 = sphi 0, %s83
    %s101 = sphi 0, %s101
    %s103 = sphi 0, %s101
    %s104 = sphi 0, %s103
    %s118 = sphi 0, %s104
    %s122 = sphi 0, %s122
    %s124 = sphi 0, %s122
    %s125 = sphi 0, %s124
    %s139 = sphi 0, %s125
    %s143 = sphi 0, %s143
    %s145 = sphi 0, %s143
    %s146 = sphi 0, %s145
    %s160 = sphi 0, %s146
    %s164 = sphi 0, %s164
    %s166 = sphi 0, %s164
    %s167 = sphi 0, %s166
    %s181 = sphi 0, %s167
    %s185 = sphi 0, %s185
    %s187 = sphi 0, %s185
    %s188 = sphi 0, %s187
    %s202 = sphi 0, %s188
    %s206 = sphi 0, %s206
    %s208 = sphi 0, %s206
    %s209 = sphi 0, %s208
    %s223 = sphi 0, %s209
    %s227 = sphi 0, %s227
    %s229 = sphi 0, %s227
    %s230 = sphi 0, %s229
    %s244 = sphi 0, %s230
    %s248 = sphi 0, %s248
    %s250 = sphi 0, %s248
    %s251 = sphi 0, %s250
    %s265 = sphi 0, %s251
    %s269 = sphi 0, %s269
    %s271 = sphi 0, %s269
    %s272 = sphi 0, %s271
    %s286 = sphi 0, %s272
    %s290 = sphi 0, %s290
    %s292 = sphi 0, %s290
    %s293 = sphi 0, %s292
    %s307 = sphi 0, %s293
    %s311 = sphi 0, %s311
    %s313 = sphi 0, %s311
    %s314 = sphi 0, %s313
    %s328 = sphi 0, %s314
    %s332 = sphi 0, %s332
    %s334 = sphi 0, %s332
    %s335 = sphi 0, %s334
    %s349 = sphi 0, %s335
    %s353 = sphi 0, %s353
    %s355 = sphi 0, %s353
    %s356 = sphi 0, %s355
    %s370 = sphi 0, %s356
    %s374 = sphi 0, %s374
    %s376 = sphi 0, %s374
    %s377 = sphi 0, %s376
    %s391 = sphi 0, %s377
    %s395 = sphi 0, %s395
    %s397 = sphi 0, %s395
    %s398 = sphi 0, %s397
    %s412 = sphi 0, %s398
    %s416 = sphi 0, %s416
    %s418 = sphi 0, %s416
    %s419 = sphi 0, %s418
    %s433 = sphi 0, %s419
    %s439 = sphi 0, %s441
    %s442 = sphi 0, %s439
    %s443 = sphi 0, %s442
    %s459 = sphi 0, %s443
  $region4: #{forward.2} parent=0 // loop_header_branch
    %28 = sbr.rel (%p26) target = $region8
  $region5: #{forward.2} parent=0 // loop_body
    %s30 = ssub.s32 %s25, 1
    %s31 = ssub.s32 %s25, 2
    %s32 = sadd.s32 %s25, 1
    %s33 = ssub.s32 %s25, %s32
    %p34 = scmp.eq.s32.totalorder %s33, 0
    %s36 = sadd.s32 %s35, 1
    %s37 = scalar_select %p34, %s35, %s36
    %p40 = pneg %p34
    %p41 = scmp.eq.s32.totalorder %s25, 1
    %p42 = por %p40, %p41
    %p43 = scmp.ne.s32.totalorder %s35, %s38
    %p44 = scmp.eq.s32.totalorder %s25, 0
    %p45 = por %p43, %p44
    %p46 = scmp.ne.s32.totalorder %s35, %s38
    %p47 = scmp.eq.s32.totalorder %s30, 1
    %p48 = por %p46, %p47
    %p49 = scmp.ne.s32.totalorder %s38, %s39
    %p50 = scmp.eq.s32.totalorder %s30, 0
    %p51 = por %p49, %p50
    %p52 = scmp.ne.s32.totalorder %s38, %s39
    %p53 = scmp.eq.s32.totalorder %s31, 1
    %p54 = por %p52, %p53
    %p56 = scmp.ne.s32.totalorder %s39, %s55
    %p57 = scmp.eq.s32.totalorder %s31, 0
    %p58 = por %p56, %p57
    %s60 = sadd.s32 %s59, 1
    %p63 = scmp.eq.s32.totalorder %s25, 1
    %p64 = scmp.ne.s32.totalorder %s59, %s61
    %p65 = scmp.eq.s32.totalorder %s25, 0
    %p66 = por %p64, %p65
    %p67 = scmp.ne.s32.totalorder %s59, %s61
    %p68 = scmp.eq.s32.totalorder %s30, 1
    %p69 = por %p67, %p68
    %p70 = scmp.ne.s32.totalorder %s61, %s62
    %p71 = scmp.eq.s32.totalorder %s30, 0
    %p72 = por %p70, %p71
    %p73 = scmp.ne.s32.totalorder %s61, %s62
    %p74 = scmp.eq.s32.totalorder %s31, 1
    %p75 = por %p73, %p74
    %p77 = scmp.ne.s32.totalorder %s62, %s76
    %p78 = scmp.eq.s32.totalorder %s31, 0
    %p79 = por %p77, %p78
    %s81 = sadd.s32 %s80, 1
    %p84 = scmp.eq.s32.totalorder %s25, 1
    %p85 = scmp.ne.s32.totalorder %s80, %s82
    %p86 = scmp.eq.s32.totalorder %s25, 0
    %p87 = por %p85, %p86
    %p88 = scmp.ne.s32.totalorder %s80, %s82
    %p89 = scmp.eq.s32.totalorder %s30, 1
    %p90 = por %p88, %p89
    %p91 = scmp.ne.s32.totalorder %s82, %s83
    %p92 = scmp.eq.s32.totalorder %s30, 0
    %p93 = por %p91, %p92
    %p94 = scmp.ne.s32.totalorder %s82, %s83
    %p95 = scmp.eq.s32.totalorder %s31, 1
    %p96 = por %p94, %p95
    %p98 = scmp.ne.s32.totalorder %s83, %s97
    %p99 = scmp.eq.s32.totalorder %s31, 0
    %p100 = por %p98, %p99
    %s102 = sadd.s32 %s101, 1
    %p105 = scmp.eq.s32.totalorder %s25, 1
    %p106 = scmp.ne.s32.totalorder %s101, %s103
    %p107 = scmp.eq.s32.totalorder %s25, 0
    %p108 = por %p106, %p107
    %p109 = scmp.ne.s32.totalorder %s101, %s103
    %p110 = scmp.eq.s32.totalorder %s30, 1
    %p111 = por %p109, %p110
    %p112 = scmp.ne.s32.totalorder %s103, %s104
    %p113 = scmp.eq.s32.totalorder %s30, 0
    %p114 = por %p112, %p113
    %p115 = scmp.ne.s32.totalorder %s103, %s104
    %p116 = scmp.eq.s32.totalorder %s31, 1
    %p117 = por %p115, %p116
    %p119 = scmp.ne.s32.totalorder %s104, %s118
    %p120 = scmp.eq.s32.totalorder %s31, 0
    %p121 = por %p119, %p120
    %s123 = sadd.s32 %s122, 1
    %p126 = scmp.eq.s32.totalorder %s25, 1
    %p127 = scmp.ne.s32.totalorder %s122, %s124
    %p128 = scmp.eq.s32.totalorder %s25, 0
    %p129 = por %p127, %p128
    %p130 = scmp.ne.s32.totalorder %s122, %s124
    %p131 = scmp.eq.s32.totalorder %s30, 1
    %p132 = por %p130, %p131
    %p133 = scmp.ne.s32.totalorder %s124, %s125
    %p134 = scmp.eq.s32.totalorder %s30, 0
    %p135 = por %p133, %p134
    %p136 = scmp.ne.s32.totalorder %s124, %s125
    %p137 = scmp.eq.s32.totalorder %s31, 1
    %p138 = por %p136, %p137
    %p140 = scmp.ne.s32.totalorder %s125, %s139
    %p141 = scmp.eq.s32.totalorder %s31, 0
    %p142 = por %p140, %p141
    %s144 = sadd.s32 %s143, 1
    %p147 = scmp.eq.s32.totalorder %s25, 1
    %p148 = scmp.ne.s32.totalorder %s143, %s145
    %p149 = scmp.eq.s32.totalorder %s25, 0
    %p150 = por %p148, %p149
    %p151 = scmp.ne.s32.totalorder %s143, %s145
    %p152 = scmp.eq.s32.totalorder %s30, 1
    %p153 = por %p151, %p152
    %p154 = scmp.ne.s32.totalorder %s145, %s146
    %p155 = scmp.eq.s32.totalorder %s30, 0
    %p156 = por %p154, %p155
    %p157 = scmp.ne.s32.totalorder %s145, %s146
    %p158 = scmp.eq.s32.totalorder %s31, 1
    %p159 = por %p157, %p158
    %p161 = scmp.ne.s32.totalorder %s146, %s160
    %p162 = scmp.eq.s32.totalorder %s31, 0
    %p163 = por %p161, %p162
    %s165 = sadd.s32 %s164, 1
    %p168 = scmp.eq.s32.totalorder %s25, 1
    %p169 = scmp.ne.s32.totalorder %s164, %s166
    %p170 = scmp.eq.s32.totalorder %s25, 0
    %p171 = por %p169, %p170
    %p172 = scmp.ne.s32.totalorder %s164, %s166
    %p173 = scmp.eq.s32.totalorder %s30, 1
    %p174 = por %p172, %p173
    %p175 = scmp.ne.s32.totalorder %s166, %s167
    %p176 = scmp.eq.s32.totalorder %s30, 0
    %p177 = por %p175, %p176
    %p178 = scmp.ne.s32.totalorder %s166, %s167
    %p179 = scmp.eq.s32.totalorder %s31, 1
    %p180 = por %p178, %p179
    %p182 = scmp.ne.s32.totalorder %s167, %s181
    %p183 = scmp.eq.s32.totalorder %s31, 0
    %p184 = por %p182, %p183
    %s186 = sadd.s32 %s185, 1
    %p189 = scmp.eq.s32.totalorder %s25, 1
    %p190 = scmp.ne.s32.totalorder %s185, %s187
    %p191 = scmp.eq.s32.totalorder %s25, 0
    %p192 = por %p190, %p191
    %p193 = scmp.ne.s32.totalorder %s185, %s187
    %p194 = scmp.eq.s32.totalorder %s30, 1
    %p195 = por %p193, %p194
    %p196 = scmp.ne.s32.totalorder %s187, %s188
    %p197 = scmp.eq.s32.totalorder %s30, 0
    %p198 = por %p196, %p197
    %p199 = scmp.ne.s32.totalorder %s187, %s188
    %p200 = scmp.eq.s32.totalorder %s31, 1
    %p201 = por %p199, %p200
    %p203 = scmp.ne.s32.totalorder %s188, %s202
    %p204 = scmp.eq.s32.totalorder %s31, 0
    %p205 = por %p203, %p204
    %s207 = sadd.s32 %s206, 1
    %p210 = scmp.eq.s32.totalorder %s25, 1
    %p211 = scmp.ne.s32.totalorder %s206, %s208
    %p212 = scmp.eq.s32.totalorder %s25, 0
    %p213 = por %p211, %p212
    %p214 = scmp.ne.s32.totalorder %s206, %s208
    %p215 = scmp.eq.s32.totalorder %s30, 1
    %p216 = por %p214, %p215
    %p217 = scmp.ne.s32.totalorder %s208, %s209
    %p218 = scmp.eq.s32.totalorder %s30, 0
    %p219 = por %p217, %p218
    %p220 = scmp.ne.s32.totalorder %s208, %s209
    %p221 = scmp.eq.s32.totalorder %s31, 1
    %p222 = por %p220, %p221
    %p224 = scmp.ne.s32.totalorder %s209, %s223
    %p225 = scmp.eq.s32.totalorder %s31, 0
    %p226 = por %p224, %p225
    %s228 = sadd.s32 %s227, 1
    %p231 = scmp.eq.s32.totalorder %s25, 1
    %p232 = scmp.ne.s32.totalorder %s227, %s229
    %p233 = scmp.eq.s32.totalorder %s25, 0
    %p234 = por %p232, %p233
    %p235 = scmp.ne.s32.totalorder %s227, %s229
    %p236 = scmp.eq.s32.totalorder %s30, 1
    %p237 = por %p235, %p236
    %p238 = scmp.ne.s32.totalorder %s229, %s230
    %p239 = scmp.eq.s32.totalorder %s30, 0
    %p240 = por %p238, %p239
    %p241 = scmp.ne.s32.totalorder %s229, %s230
    %p242 = scmp.eq.s32.totalorder %s31, 1
    %p243 = por %p241, %p242
    %p245 = scmp.ne.s32.totalorder %s230, %s244
    %p246 = scmp.eq.s32.totalorder %s31, 0
    %p247 = por %p245, %p246
    %s249 = sadd.s32 %s248, 1
    %p252 = scmp.eq.s32.totalorder %s25, 1
    %p253 = scmp.ne.s32.totalorder %s248, %s250
    %p254 = scmp.eq.s32.totalorder %s25, 0
    %p255 = por %p253, %p254
    %p256 = scmp.ne.s32.totalorder %s248, %s250
    %p257 = scmp.eq.s32.totalorder %s30, 1
    %p258 = por %p256, %p257
    %p259 = scmp.ne.s32.totalorder %s250, %s251
    %p260 = scmp.eq.s32.totalorder %s30, 0
    %p261 = por %p259, %p260
    %p262 = scmp.ne.s32.totalorder %s250, %s251
    %p263 = scmp.eq.s32.totalorder %s31, 1
    %p264 = por %p262, %p263
    %p266 = scmp.ne.s32.totalorder %s251, %s265
    %p267 = scmp.eq.s32.totalorder %s31, 0
    %p268 = por %p266, %p267
    %s270 = sadd.s32 %s269, 1
    %p273 = scmp.eq.s32.totalorder %s25, 1
    %p274 = scmp.ne.s32.totalorder %s269, %s271
    %p275 = scmp.eq.s32.totalorder %s25, 0
    %p276 = por %p274, %p275
    %p277 = scmp.ne.s32.totalorder %s269, %s271
    %p278 = scmp.eq.s32.totalorder %s30, 1
    %p279 = por %p277, %p278
    %p280 = scmp.ne.s32.totalorder %s271, %s272
    %p281 = scmp.eq.s32.totalorder %s30, 0
    %p282 = por %p280, %p281
    %p283 = scmp.ne.s32.totalorder %s271, %s272
    %p284 = scmp.eq.s32.totalorder %s31, 1
    %p285 = por %p283, %p284
    %p287 = scmp.ne.s32.totalorder %s272, %s286
    %p288 = scmp.eq.s32.totalorder %s31, 0
    %p289 = por %p287, %p288
    %s291 = sadd.s32 %s290, 1
    %p294 = scmp.eq.s32.totalorder %s25, 1
    %p295 = scmp.ne.s32.totalorder %s290, %s292
    %p296 = scmp.eq.s32.totalorder %s25, 0
    %p297 = por %p295, %p296
    %p298 = scmp.ne.s32.totalorder %s290, %s292
    %p299 = scmp.eq.s32.totalorder %s30, 1
    %p300 = por %p298, %p299
    %p301 = scmp.ne.s32.totalorder %s292, %s293
    %p302 = scmp.eq.s32.totalorder %s30, 0
    %p303 = por %p301, %p302
    %p304 = scmp.ne.s32.totalorder %s292, %s293
    %p305 = scmp.eq.s32.totalorder %s31, 1
    %p306 = por %p304, %p305
    %p308 = scmp.ne.s32.totalorder %s293, %s307
    %p309 = scmp.eq.s32.totalorder %s31, 0
    %p310 = por %p308, %p309
    %s312 = sadd.s32 %s311, 1
    %p315 = scmp.eq.s32.totalorder %s25, 1
    %p316 = scmp.ne.s32.totalorder %s311, %s313
    %p317 = scmp.eq.s32.totalorder %s25, 0
    %p318 = por %p316, %p317
    %p319 = scmp.ne.s32.totalorder %s311, %s313
    %p320 = scmp.eq.s32.totalorder %s30, 1
    %p321 = por %p319, %p320
    %p322 = scmp.ne.s32.totalorder %s313, %s314
    %p323 = scmp.eq.s32.totalorder %s30, 0
    %p324 = por %p322, %p323
    %p325 = scmp.ne.s32.totalorder %s313, %s314
    %p326 = scmp.eq.s32.totalorder %s31, 1
    %p327 = por %p325, %p326
    %p329 = scmp.ne.s32.totalorder %s314, %s328
    %p330 = scmp.eq.s32.totalorder %s31, 0
    %p331 = por %p329, %p330
    %s333 = sadd.s32 %s332, 1
    %p336 = scmp.eq.s32.totalorder %s25, 1
    %p337 = scmp.ne.s32.totalorder %s332, %s334
    %p338 = scmp.eq.s32.totalorder %s25, 0
    %p339 = por %p337, %p338
    %p340 = scmp.ne.s32.totalorder %s332, %s334
    %p341 = scmp.eq.s32.totalorder %s30, 1
    %p342 = por %p340, %p341
    %p343 = scmp.ne.s32.totalorder %s334, %s335
    %p344 = scmp.eq.s32.totalorder %s30, 0
    %p345 = por %p343, %p344
    %p346 = scmp.ne.s32.totalorder %s334, %s335
    %p347 = scmp.eq.s32.totalorder %s31, 1
    %p348 = por %p346, %p347
    %p350 = scmp.ne.s32.totalorder %s335, %s349
    %p351 = scmp.eq.s32.totalorder %s31, 0
    %p352 = por %p350, %p351
    %s354 = sadd.s32 %s353, 1
    %p357 = scmp.eq.s32.totalorder %s25, 1
    %p358 = scmp.ne.s32.totalorder %s353, %s355
    %p359 = scmp.eq.s32.totalorder %s25, 0
    %p360 = por %p358, %p359
    %p361 = scmp.ne.s32.totalorder %s353, %s355
    %p362 = scmp.eq.s32.totalorder %s30, 1
    %p363 = por %p361, %p362
    %p364 = scmp.ne.s32.totalorder %s355, %s356
    %p365 = scmp.eq.s32.totalorder %s30, 0
    %p366 = por %p364, %p365
    %p367 = scmp.ne.s32.totalorder %s355, %s356
    %p368 = scmp.eq.s32.totalorder %s31, 1
    %p369 = por %p367, %p368
    %p371 = scmp.ne.s32.totalorder %s356, %s370
    %p372 = scmp.eq.s32.totalorder %s31, 0
    %p373 = por %p371, %p372
    %s375 = sadd.s32 %s374, 1
    %p378 = scmp.eq.s32.totalorder %s25, 1
    %p379 = scmp.ne.s32.totalorder %s374, %s376
    %p380 = scmp.eq.s32.totalorder %s25, 0
    %p381 = por %p379, %p380
    %p382 = scmp.ne.s32.totalorder %s374, %s376
    %p383 = scmp.eq.s32.totalorder %s30, 1
    %p384 = por %p382, %p383
    %p385 = scmp.ne.s32.totalorder %s376, %s377
    %p386 = scmp.eq.s32.totalorder %s30, 0
    %p387 = por %p385, %p386
    %p388 = scmp.ne.s32.totalorder %s376, %s377
    %p389 = scmp.eq.s32.totalorder %s31, 1
    %p390 = por %p388, %p389
    %p392 = scmp.ne.s32.totalorder %s377, %s391
    %p393 = scmp.eq.s32.totalorder %s31, 0
    %p394 = por %p392, %p393
    %s396 = sadd.s32 %s395, 1
    %p399 = scmp.eq.s32.totalorder %s25, 1
    %p400 = scmp.ne.s32.totalorder %s395, %s397
    %p401 = scmp.eq.s32.totalorder %s25, 0
    %p402 = por %p400, %p401
    %p403 = scmp.ne.s32.totalorder %s395, %s397
    %p404 = scmp.eq.s32.totalorder %s30, 1
    %p405 = por %p403, %p404
    %p406 = scmp.ne.s32.totalorder %s397, %s398
    %p407 = scmp.eq.s32.totalorder %s30, 0
    %p408 = por %p406, %p407
    %p409 = scmp.ne.s32.totalorder %s397, %s398
    %p410 = scmp.eq.s32.totalorder %s31, 1
    %p411 = por %p409, %p410
    %p413 = scmp.ne.s32.totalorder %s398, %s412
    %p414 = scmp.eq.s32.totalorder %s31, 0
    %p415 = por %p413, %p414
    %s417 = sadd.s32 %s416, 1
    %p420 = scmp.eq.s32.totalorder %s25, 1
    %p421 = scmp.ne.s32.totalorder %s416, %s418
    %p422 = scmp.eq.s32.totalorder %s25, 0
    %p423 = por %p421, %p422
    %p424 = scmp.ne.s32.totalorder %s416, %s418
    %p425 = scmp.eq.s32.totalorder %s30, 1
    %p426 = por %p424, %p425
    %p427 = scmp.ne.s32.totalorder %s418, %s419
    %p428 = scmp.eq.s32.totalorder %s30, 0
    %p429 = por %p427, %p428
    %p430 = scmp.ne.s32.totalorder %s418, %s419
    %p431 = scmp.eq.s32.totalorder %s31, 1
    %p432 = por %p430, %p431
    %p434 = scmp.ne.s32.totalorder %s419, %s433
    %p435 = scmp.eq.s32.totalorder %s31, 0
    %p436 = por %p434, %p435
    %s437 = ssub.s32 %s25, %s32
    %p438 = scmp.eq.s32.totalorder %s437, 0
    %s440 = sadd.s32 %s439, 1
    %s441 = scalar_select %p438, %s439, %s440
    %p444 = pneg %p438
    %p445 = scmp.eq.s32.totalorder %s25, 1
    %p446 = por %p444, %p445
    %p447 = scmp.ne.s32.totalorder %s439, %s442
    %p448 = scmp.eq.s32.totalorder %s25, 0
    %p449 = por %p447, %p448
    %p450 = scmp.ne.s32.totalorder %s439, %s442
    %p451 = scmp.eq.s32.totalorder %s30, 1
    %p452 = por %p450, %p451
    %p453 = scmp.ne.s32.totalorder %s442, %s443
    %p454 = scmp.eq.s32.totalorder %s30, 0
    %p455 = por %p453, %p454
    %p456 = scmp.ne.s32.totalorder %s442, %s443
    %p457 = scmp.eq.s32.totalorder %s31, 1
    %p458 = por %p456, %p457
    %p460 = scmp.ne.s32.totalorder %s443, %s459
    %p461 = scmp.eq.s32.totalorder %s31, 0
    %p462 = por %p460, %p461
    %p463 = scmp.le.s32.totalorder 1, %s25
    %p464 = scmp.lt.s32.totalorder %s25, 3
    %p465 = pnand %p463, %p464
    %p466 = pneg %p465
    // Predicated region
    $region9: #{forward.2} parent=5 // pred_check
      _
    $region10: #{forward.2} parent=5 // pred_check_branch
      %468 = sbr.rel (%p465) target = $region12
    $region11: #{forward.2} parent=5 // pred_region
      %s469 = ssub.s32 %s25, 1
      // Predicated region
      $region13: #{forward.2} parent=11 // pred_check
        %p470 = pneg %p72
      $region14: #{forward.2} parent=11 // pred_check_branch
        %472 = sbr.rel (%p470) target = $region16
      $region15: #{forward.2} parent=11 // pred_region
        _
      $region16: #{forward.2} parent=11 // pred_fallthru
        _
      // Predicated region
      $region17: #{forward.2} parent=11 // pred_check
        %p473 = pneg %p93
      $region18: #{forward.2} parent=11 // pred_check_branch
        %475 = sbr.rel (%p473) target = $region20
      $region19: #{forward.2} parent=11 // pred_region
        _
      $region20: #{forward.2} parent=11 // pred_fallthru
        _
      // Predicated region
      $region21: #{forward.2} parent=11 // pred_check
        %p476 = pneg %p114
      $region22: #{forward.2} parent=11 // pred_check_branch
        %478 = sbr.rel (%p476) target = $region24
      $region23: #{forward.2} parent=11 // pred_region
        _
      $region24: #{forward.2} parent=11 // pred_fallthru
        _
      // Predicated region
      $region25: #{forward.2} parent=11 // pred_check
        %p479 = pneg %p135
      $region26: #{forward.2} parent=11 // pred_check_branch
        %481 = sbr.rel (%p479) target = $region28
      $region27: #{forward.2} parent=11 // pred_region
        _
      $region28: #{forward.2} parent=11 // pred_fallthru
        _
      // Predicated region
      $region29: #{forward.2} parent=11 // pred_check
        %p482 = pneg %p156
      $region30: #{forward.2} parent=11 // pred_check_branch
        %484 = sbr.rel (%p482) target = $region32
      $region31: #{forward.2} parent=11 // pred_region
        _
      $region32: #{forward.2} parent=11 // pred_fallthru
        _
      // Predicated region
      $region33: #{forward.2} parent=11 // pred_check
        %p485 = pneg %p177
      $region34: #{forward.2} parent=11 // pred_check_branch
        %487 = sbr.rel (%p485) target = $region36
      $region35: #{forward.2} parent=11 // pred_region
        _
      $region36: #{forward.2} parent=11 // pred_fallthru
        _
      // Predicated region
      $region37: #{forward.2} parent=11 // pred_check
        %p488 = pneg %p198
      $region38: #{forward.2} parent=11 // pred_check_branch
        %490 = sbr.rel (%p488) target = $region40
      $region39: #{forward.2} parent=11 // pred_region
        _
      $region40: #{forward.2} parent=11 // pred_fallthru
        _
      // Predicated region
      $region41: #{forward.2} parent=11 // pred_check
        %p491 = pneg %p219
      $region42: #{forward.2} parent=11 // pred_check_branch
        %493 = sbr.rel (%p491) target = $region44
      $region43: #{forward.2} parent=11 // pred_region
        _
      $region44: #{forward.2} parent=11 // pred_fallthru
        _
      // Predicated region
      $region45: #{forward.2} parent=11 // pred_check
        %p494 = pneg %p240
      $region46: #{forward.2} parent=11 // pred_check_branch
        %496 = sbr.rel (%p494) target = $region48
      $region47: #{forward.2} parent=11 // pred_region
        _
      $region48: #{forward.2} parent=11 // pred_fallthru
        _
      // Predicated region
      $region49: #{forward.2} parent=11 // pred_check
        %p497 = pneg %p261
      $region50: #{forward.2} parent=11 // pred_check_branch
        %499 = sbr.rel (%p497) target = $region52
      $region51: #{forward.2} parent=11 // pred_region
        _
      $region52: #{forward.2} parent=11 // pred_fallthru
        _
      // Predicated region
      $region53: #{forward.2} parent=11 // pred_check
        %p500 = pneg %p282
      $region54: #{forward.2} parent=11 // pred_check_branch
        %502 = sbr.rel (%p500) target = $region56
      $region55: #{forward.2} parent=11 // pred_region
        _
      $region56: #{forward.2} parent=11 // pred_fallthru
        _
      // Predicated region
      $region57: #{forward.2} parent=11 // pred_check
        %p503 = pneg %p303
      $region58: #{forward.2} parent=11 // pred_check_branch
        %505 = sbr.rel (%p503) target = $region60
      $region59: #{forward.2} parent=11 // pred_region
        _
      $region60: #{forward.2} parent=11 // pred_fallthru
        _
      // Predicated region
      $region61: #{forward.2} parent=11 // pred_check
        %p506 = pneg %p324
      $region62: #{forward.2} parent=11 // pred_check_branch
        %508 = sbr.rel (%p506) target = $region64
      $region63: #{forward.2} parent=11 // pred_region
        _
      $region64: #{forward.2} parent=11 // pred_fallthru
        _
      // Predicated region
      $region65: #{forward.2} parent=11 // pred_check
        %p509 = pneg %p345
      $region66: #{forward.2} parent=11 // pred_check_branch
        %511 = sbr.rel (%p509) target = $region68
      $region67: #{forward.2} parent=11 // pred_region
        _
      $region68: #{forward.2} parent=11 // pred_fallthru
        _
      // Predicated region
      $region69: #{forward.2} parent=11 // pred_check
        %p512 = pneg %p366
      $region70: #{forward.2} parent=11 // pred_check_branch
        %514 = sbr.rel (%p512) target = $region72
      $region71: #{forward.2} parent=11 // pred_region
        _
      $region72: #{forward.2} parent=11 // pred_fallthru
        _
      // Predicated region
      $region73: #{forward.2} parent=11 // pred_check
        %p515 = pneg %p387
      $region74: #{forward.2} parent=11 // pred_check_branch
        %517 = sbr.rel (%p515) target = $region76
      $region75: #{forward.2} parent=11 // pred_region
        _
      $region76: #{forward.2} parent=11 // pred_fallthru
        _
      // Predicated region
      $region77: #{forward.2} parent=11 // pred_check
        %p518 = pneg %p408
      $region78: #{forward.2} parent=11 // pred_check_branch
        %520 = sbr.rel (%p518) target = $region80
      $region79: #{forward.2} parent=11 // pred_region
        _
      $region80: #{forward.2} parent=11 // pred_fallthru
        _
      // Predicated region
      $region81: #{forward.2} parent=11 // pred_check
        %p521 = pneg %p429
      $region82: #{forward.2} parent=11 // pred_check_branch
        %523 = sbr.rel (%p521) target = $region84
      $region83: #{forward.2} parent=11 // pred_region
        _
      $region84: #{forward.2} parent=11 // pred_fallthru
        _
    $region12: #{forward.2} parent=5 // pred_fallthru
      _
    %p524 = scmp.lt.s32.totalorder %s25, 2
    // Predicated region
    $region85: #{forward.2} parent=5 // pred_check
      %p525 = pneg %p524
    $region86: #{forward.2} parent=5 // pred_check_branch
      %527 = sbr.rel (%p525) target = $region88
    $region87: #{forward.2} parent=5 // pred_region
      // Predicated region
      $region89: #{forward.2} parent=87 // pred_check
        %p528 = pneg %p45
      $region90: #{forward.2} parent=87 // pred_check_branch
        %530 = sbr.rel (%p528) target = $region92
      $region91: #{forward.2} parent=87 // pred_region
        %p531 = scmp.lt.s32.totalorder %s25, 1
        %s532 = scalar_select %p531, %s25, 1
        %s533 = smul.addr %s532, 8
        %s534 = scalar_lea.vmem %s0, %s533
      $region92: #{forward.2} parent=87 // pred_fallthru
        _
    $region88: #{forward.2} parent=5 // pred_fallthru
      _
    %p535 = scmp.le.s32.totalorder 1, %s25
    %p536 = scmp.lt.s32.totalorder %s25, 3
    %p537 = pnand %p535, %p536
    %p538 = pneg %p537
    // Predicated region
    $region93: #{forward.2} parent=5 // pred_check
      _
    $region94: #{forward.2} parent=5 // pred_check_branch
      %540 = sbr.rel (%p537) target = $region96
    $region95: #{forward.2} parent=5 // pred_region
      %s541 = ssub.s32 %s25, 1
      %p542 = scmp.lt.s32.totalorder %s30, 1
      %s543 = scalar_select %p542, %s30, 1
      %s544 = smul.addr %s543, 8
      %s545 = scalar_lea.vmem %s0, %s544
      %p546 = pneg %p51
      %p547 = pneg %p48
      %p548 = pneg %p72
      %p549 = pneg %p69
      %p550 = pneg %p93
      %p551 = pneg %p90
      %p552 = pneg %p114
      %p553 = pneg %p111
      %p554 = pneg %p135
      %p555 = pneg %p132
      %p556 = pneg %p156
      %p557 = pneg %p153
      %p558 = pneg %p177
      %p559 = pneg %p174
      %p560 = pneg %p198
      %p561 = pneg %p195
      %p562 = pneg %p219
      %p563 = pneg %p216
      %p564 = pneg %p240
      %p565 = pneg %p237
      %p566 = pneg %p261
      %p567 = pneg %p258
      %p568 = pneg %p282
      %p569 = pneg %p279
      %p570 = pneg %p303
      %p571 = pneg %p300
      %p572 = pneg %p324
      %p573 = pneg %p321
      %p574 = pneg %p345
      %p575 = pneg %p342
      %p576 = pneg %p366
      %p577 = pneg %p363
      %p578 = pneg %p387
      %p579 = pneg %p384
      %p580 = pneg %p408
      %p581 = pneg %p405
      %p582 = pneg %p429
      %p583 = pneg %p426
      %p584 = pneg %p455
      %p585 = pneg %p452
      %p586 = scmp.lt.s32.totalorder %s30, 1
      %s587 = scalar_select %p586, %s30, 1
      %s588 = smul.addr %s587, 2
      %s589 = smul.addr %s588, 4
      %s590 = scalar_lea.vmem %s19, %s589
      %p591 = scmp.lt.s32.totalorder %s30, 1
      %s592 = scalar_select %p591, %s30, 1
      %s593 = smul.addr %s592, 8
      %s594 = scalar_lea.vmem %s0, %s593
      %p595 = scmp.lt.s32.totalorder %s30, 1
      %s596 = scalar_select %p595, %s30, 1
      %s597 = smul.addr %s596, 2
      %s598 = smul.addr %s597, 4
      %s599 = scalar_lea.vmem %s19, %s598
      %v601 = vld [vmem:[%s594] sm:$0xff]
      %v602 = vld [vmem:[%s1] sm:$0xf]
      %v603 = vld [vmem:[%s1 + $0x4] sm:$0x1]
      %v604 = vpack.c.bf16 %v601, %v601
      %v605 = vld [vmem:[%s2] sm:$0x1]
      %v607 = vperm.slane %v605, 0
      %v611 = vunpack.c.l.b16 %v602
      %v612 = vunpack.c.l.b16 %v603
      %v613 = vpack.c.b16 %v612, %v611
      %vm614 = vcmask 72704
      %v616 = vsel %vm614, %v604, 0
      %vm618 = vcmask 1043456
      %vm619 = vcmask 1044480
      %v620 = vsel %vm618, 4294967295, 65535
      %v621 = vsel %vm619, %v620, 0
      %v623 = vand.u32 %v613, %v621
      %625 = vmatpush.bf16.msra.mxu0 0
      %626 = vmatpush.bf16.msra.mxu0 0
      %627 = vmatpush.bf16.msra.mxu0 0
      %628 = vmatpush.bf16.msra.mxu0 0
      %629 = vmatpush.bf16.msra.mxu0 0
      %630 = vmatpush.bf16.msra.mxu0 0
      %631 = vmatpush.bf16.msra.mxu0 0
      %632 = vmatpush.bf16.msra.mxu0 %v623
      %633 = vmatmul.bf16.gmra.mxu0 %v616
      %v634 = vpop.f32.mrf.mxu0
      %v635 = vadd.f32 %v607, %v634
      %v636 = vpop.f32.mrf.mxu0
      %637 = vdwg.mxu0
      %v638 = vld [vmem:[%s3] sm:$0xf]
      %v639 = vld [vmem:[%s3 + $0x4] sm:$0xf]
      %v640 = vpack.c.bf16 %v635, %v635
      %v641 = vld [vmem:[%s4] sm:$0x1]
      %v643 = vperm.slane %v641, 0
      %v647 = vunpack.c.l.b16 %v638
      %v648 = vunpack.c.l.b16 %v639
      %v649 = vpack.c.b16 %v648, %v647
      %vm651 = vcmask 130048
      %v653 = vsel %vm651, %v640, 0
      %655 = vmatpush.bf16.msra.mxu0 0
      %656 = vmatpush.bf16.msra.mxu0 0
      %657 = vmatpush.bf16.msra.mxu0 0
      %658 = vmatpush.bf16.msra.mxu0 0
      %659 = vmatpush.bf16.msra.mxu0 0
      %660 = vmatpush.bf16.msra.mxu0 0
      %661 = vmatpush.bf16.msra.mxu0 0
      %662 = vmatpush.bf16.msra.mxu0 %v649
      %663 = vmatmul.bf16.gmra.mxu0 %v653
      %v664 = vpop.f32.mrf.mxu0
      %v665 = vadd.f32 %v643, %v664
      %v666 = vpop.f32.mrf.mxu0
      %667 = vdwg.mxu0
      %v668 = vmul.f32 %v665, 0.35355338
      %v669 = vpack.c.bf16 %v668, %v668
      %v670 = vpack.c.bf16 %v665, %v665
      %672 = vrot.lane.b32.xlu0 %v670, 112
      %v673 = vpop.permute.xlu0 %672
      %vm674 = vcmask 64512
      %v676 = vsel %vm674, %v669, 0
      %v679 = vsel %vm674, %v673, 0
      %681 = vmatpush.bf16.xpose.msra.mxu0 0
      %682 = vmatpush.bf16.xpose.msra.mxu0 0
      %683 = vmatpush.bf16.xpose.msra.mxu0 0
      %684 = vmatpush.bf16.xpose.msra.mxu0 0
      %685 = vmatpush.bf16.xpose.msra.mxu0 0
      %686 = vmatpush.bf16.xpose.msra.mxu0 0
      %687 = vmatpush.bf16.xpose.msra.mxu0 0
      %688 = vmatpush.bf16.xpose.msra.mxu0 %v679
      %689 = vmatmul.bf16.gmra.mxu0 %v676
      %v690 = vpop.f32.mrf.mxu0
      %v691 = vadd.f32 0.0, %v690
      %v692 = vpop.f32.mrf.mxu0
      %693 = vdwg.mxu0
      %v694 = vsel %vm674, %v691, -inf
      %695 = vmax.xlane.f32.xlu0 %v694
      %v696 = vpop.xlane.xlu0 %695
      %v697 = vsub.f32 %v691, %v696
      %v698 = vmul.f32 %v697, 1.442695
      %v699 = vpow.pop %v698
      %v700 = vsel %vm674, %v699, 0.0
      %701 = vadd.xlane.f32.xlu0 %v700
      %v702 = vpop.xlane.xlu0 %701
      %v703 = vrcp.pop %v702
      %v704 = vmul.f32 %v699, %v703
      %v705 = vpack.c.bf16 %v704, %v704
      %706 = vrot.lane.b32.xlu0 %v670, 96
      %v707 = vpop.permute.xlu0 %706
      %v709 = vsel %vm674, %v705, 0
      %v712 = vsel %vm618, %v707, 0
      %714 = vmatpush.bf16.msra.mxu0 0
      %715 = vmatpush.bf16.msra.mxu0 0
      %716 = vmatpush.bf16.msra.mxu0 0
      %717 = vmatpush.bf16.msra.mxu0 0
      %718 = vmatpush.bf16.msra.mxu0 0
      %719 = vmatpush.bf16.msra.mxu0 0
      %720 = vmatpush.bf16.msra.mxu0 0
      %721 = vmatpush.bf16.msra.mxu0 %v712
      %722 = vmatmul.bf16.gmra.mxu0 %v709
      %v723 = vpop.f32.mrf.mxu0
      %v724 = vadd.f32 0.0, %v723
      %v725 = vpop.f32.mrf.mxu0
      %726 = vdwg.mxu0
      %728 = vrot.lane.b32.xlu0 %v669, 120
      %v729 = vpop.permute.xlu0 %728
      %730 = vrot.lane.b32.xlu0 %v670, 104
      %v731 = vpop.permute.xlu0 %730
      %v733 = vsel %vm674, %v729, 0
      %v736 = vsel %vm674, %v731, 0
      %738 = vmatpush.bf16.xpose.msra.mxu0 0
      %739 = vmatpush.bf16.xpose.msra.mxu0 0
      %740 = vmatpush.bf16.xpose.msra.mxu0 0
      %741 = vmatpush.bf16.xpose.msra.mxu0 0
      %742 = vmatpush.bf16.xpose.msra.mxu0 0
      %743 = vmatpush.bf16.xpose.msra.mxu0 0
      %744 = vmatpush.bf16.xpose.msra.mxu0 0
      %745 = vmatpush.bf16.xpose.msra.mxu0 %v736
      %746 = vmatmul.bf16.gmra.mxu0 %v733
      %v747 = vpop.f32.mrf.mxu0
      %v748 = vadd.f32 0.0, %v747
      %v749 = vpop.f32.mrf.mxu0
      %750 = vdwg.mxu0
      %v751 = vsel %vm674, %v748, -inf
      %752 = vmax.xlane.f32.xlu0 %v751
      %v753 = vpop.xlane.xlu0 %752
      %v754 = vsub.f32 %v748, %v753
      %v755 = vmul.f32 %v754, 1.442695
      %v756 = vpow.pop %v755
      %v757 = vsel %vm674, %v756, 0.0
      %758 = vadd.xlane.f32.xlu0 %v757
      %v759 = vpop.xlane.xlu0 %758
      %v760 = vrcp.pop %v759
      %v761 = vmul.f32 %v756, %v760
      %v762 = vpack.c.bf16 %v761, %v761
      %763 = vrot.lane.b32.xlu0 %v670, 88
      %v764 = vpop.permute.xlu0 %763
      %v766 = vsel %vm674, %v762, 0
      %v769 = vsel %vm618, %v764, 0
      %771 = vmatpush.bf16.msra.mxu0 0
      %772 = vmatpush.bf16.msra.mxu0 0
      %773 = vmatpush.bf16.msra.mxu0 0
      %774 = vmatpush.bf16.msra.mxu0 0
      %775 = vmatpush.bf16.msra.mxu0 0
      %776 = vmatpush.bf16.msra.mxu0 0
      %777 = vmatpush.bf16.msra.mxu0 0
      %778 = vmatpush.bf16.msra.mxu0 %v769
      %779 = vmatmul.bf16.gmra.mxu0 %v766
      %v780 = vpop.f32.mrf.mxu0
      %v781 = vadd.f32 0.0, %v780
      %v782 = vpop.f32.mrf.mxu0
      %783 = vdwg.mxu0
      %785 = vrot.lane.b32.xlu0 %v781, 8
      %v786 = vpop.permute.xlu0 %785
      %v788 = vsel %vm674, %v724, %v786
      %v789 = vld [vmem:[%s5] sm:$0xf]
      %v790 = vld [vmem:[%s5 + $0x4] sm:$0xf]
      %v791 = vpack.c.bf16 %v788, %v788
      %v792 = vld [vmem:[%s6] sm:$0x1]
      %v794 = vperm.slane %v792, 0
      %v798 = vunpack.c.l.b16 %v789
      %v799 = vunpack.c.l.b16 %v790
      %v800 = vpack.c.b16 %v799, %v798
      %v803 = vsel %vm651, %v791, 0
      %805 = vmatpush.bf16.msra.mxu0 0
      %806 = vmatpush.bf16.msra.mxu0 0
      %807 = vmatpush.bf16.msra.mxu0 0
      %808 = vmatpush.bf16.msra.mxu0 0
      %809 = vmatpush.bf16.msra.mxu0 0
      %810 = vmatpush.bf16.msra.mxu0 0
      %811 = vmatpush.bf16.msra.mxu0 0
      %812 = vmatpush.bf16.msra.mxu0 %v800
      %813 = vmatmul.bf16.gmra.mxu0 %v803
      %v814 = vpop.f32.mrf.mxu0
      %v815 = vadd.f32 %v794, %v814
      %v816 = vpop.f32.mrf.mxu0
      %817 = vdwg.mxu0
      %v818 = vadd.f32 %v635, %v815
      %v819 = vld [vmem:[%s7] sm:$0x1]
      %v820 = vld [vmem:[%s8] sm:$0x1]
      %v821 = vsel %vm651, %v818, 0.0
      %822 = vadd.xlane.f32.xlu0 %v821
      %v823 = vpop.xlane.xlu0 %822
      %v824 = vrcp.pop 16.0
      %v825 = vmul.f32 16.0, %v824
      %v826 = vsub.f32 1.0, %v825
      %v827 = vmul.f32 %v824, %v826
      %v828 = vadd.f32 %v824, %v827
      %vm829 = vweird.f32 %v824
      %v830 = vsel %vm829, %v824, %v828
      %v831 = vmul.f32 %v823, %v830
      %v832 = vsub.f32 %v818, %v831
      %v833 = vmul.f32 %v832, %v832
      %v834 = vsel %vm651, %v833, 0.0
      %835 = vadd.xlane.f32.xlu0 %v834
      %v836 = vpop.xlane.xlu0 %835
      %v837 = vmul.f32 %v836, %v830
      %v838 = vadd.f32 %v837, 1e-05
      %v839 = vrsqrt.pop %v838
      %v840 = vmul.f32 %v839, %v838
      %v841 = vmul.f32 %v840, %v839
      %v842 = vmul.f32 0.5, %v841
      %v843 = vsub.f32 1.5, %v842
      %v844 = vmul.f32 %v839, %v843
      %vm845 = vweird.f32 %v838
      %vm846 = vweird.f32 %v839
      %vm847 = vmor %vm845, %vm846
      %v848 = vsel %vm847, %v839, %v844
      %v849 = vmul.f32 %v832, %v848
      %v851 = vperm.slane %v819, 0
      %v853 = vmul.f32 %v849, %v851
      %v855 = vperm.slane %v820, 0
      %v857 = vadd.f32 %v853, %v855
      %v858 = vld [vmem:[%s9] sm:$0xf]
      %v859 = vld [vmem:[%s9 + $0x4] sm:$0xf]
      %v860 = vpack.c.bf16 %v857, %v857
      %v861 = vld [vmem:[%s10] sm:$0x1]
      %v863 = vperm.slane %v861, 0
      %v867 = vunpack.c.l.b16 %v858
      %v868 = vunpack.c.l.b16 %v859
      %v869 = vpack.c.b16 %v868, %v867
      %v872 = vsel %vm651, %v860, 0
      %874 = vmatpush.bf16.msra.mxu0 0
      %875 = vmatpush.bf16.msra.mxu0 0
      %876 = vmatpush.bf16.msra.mxu0 0
      %877 = vmatpush.bf16.msra.mxu0 0
      %878 = vmatpush.bf16.msra.mxu0 0
      %879 = vmatpush.bf16.msra.mxu0 0
      %880 = vmatpush.bf16.msra.mxu0 0
      %881 = vmatpush.bf16.msra.mxu0 %v869
      %882 = vmatmul.bf16.gmra.mxu0 %v872
      %v883 = vpop.f32.mrf.mxu0
      %v884 = vadd.f32 %v863, %v883
      %v885 = vpop.f32.mrf.mxu0
      %886 = vdwg.mxu0
      %v887 = vmax.f32 %v884, 0.0
      %v888 = vld [vmem:[%s11] sm:$0xf]
      %v889 = vld [vmem:[%s11 + $0x4] sm:$0xf]
      %v890 = vld [vmem:[%s11 + $0x8] sm:$0xf]
      %v891 = vld [vmem:[%s11 + $0xc] sm:$0xf]
      %v892 = vpack.c.bf16 %v887, %v887
      %v893 = vld [vmem:[%s12] sm:$0x1]
      %v895 = vperm.slane %v893, 0
      %v901 = vunpack.c.l.b16 %v888
      %v902 = vunpack.c.l.b16 %v889
      %v903 = vunpack.c.l.b16 %v890
      %v904 = vunpack.c.l.b16 %v891
      %v905 = vpack.c.b16 %v902, %v901
      %v906 = vpack.c.b16 %v904, %v903
      %vm909 = vcmask 261120
      %v911 = vsel %vm909, %v892, 0
      %913 = vmatpush.bf16.msra.mxu0 0
      %914 = vmatpush.bf16.msra.mxu0 0
      %915 = vmatpush.bf16.msra.mxu0 0
      %916 = vmatpush.bf16.msra.mxu0 0
      %917 = vmatpush.bf16.msra.mxu0 0
      %918 = vmatpush.bf16.msra.mxu0 0
      %919 = vmatpush.bf16.msra.mxu0 %v906
      %920 = vmatpush.bf16.msra.mxu0 %v905
      %921 = vmatmul.bf16.gmra.mxu0 %v911
      %v922 = vpop.f32.mrf.mxu0
      %v923 = vadd.f32 %v895, %v922
      %v924 = vpop.f32.mrf.mxu0
      %925 = vdwg.mxu0
      %v926 = vadd.f32 %v857, %v923
      %v927 = vld [vmem:[%s13] sm:$0x1]
      %v928 = vld [vmem:[%s14] sm:$0x1]
      %v929 = vsel %vm651, %v926, 0.0
      %930 = vadd.xlane.f32.xlu0 %v929
      %v931 = vpop.xlane.xlu0 %930
      %v932 = vmul.f32 %v931, %v830
      %v933 = vsub.f32 %v926, %v932
      %v934 = vmul.f32 %v933, %v933
      %v935 = vsel %vm651, %v934, 0.0
      %936 = vadd.xlane.f32.xlu0 %v935
      %v937 = vpop.xlane.xlu0 %936
      %v938 = vmul.f32 %v937, %v830
      %v939 = vadd.f32 %v938, 1e-05
      %v940 = vrsqrt.pop %v939
      %v941 = vmul.f32 %v940, %v939
      %v942 = vmul.f32 %v941, %v940
      %v943 = vmul.f32 0.5, %v942
      %v944 = vsub.f32 1.5, %v943
      %v945 = vmul.f32 %v940, %v944
      %vm946 = vweird.f32 %v939
      %vm947 = vweird.f32 %v940
      %vm948 = vmor %vm946, %vm947
      %v949 = vsel %vm948, %v940, %v945
      %v950 = vmul.f32 %v933, %v949
      %v952 = vperm.slane %v927, 0
      %v954 = vmul.f32 %v950, %v952
      %v956 = vperm.slane %v928, 0
      %v958 = vadd.f32 %v954, %v956
      %s959 = scalar_lea.vmem %s3, 8
      %v960 = vld [vmem:[%s959] sm:$0xf]
      %v961 = vld [vmem:[%s959 + $0x4] sm:$0xf]
      %v962 = vpack.c.bf16 %v958, %v958
      %s963 = scalar_lea.vmem %s4, 1
      %v964 = vld [vmem:[%s963] sm:$0x1]
      %v966 = vperm.slane %v964, 0
      %v970 = vunpack.c.l.b16 %v960
      %v971 = vunpack.c.l.b16 %v961
      %v972 = vpack.c.b16 %v971, %v970
      %v975 = vsel %vm651, %v962, 0
      %977 = vmatpush.bf16.msra.mxu0 0
      %978 = vmatpush.bf16.msra.mxu0 0
      %979 = vmatpush.bf16.msra.mxu0 0
      %980 = vmatpush.bf16.msra.mxu0 0
      %981 = vmatpush.bf16.msra.mxu0 0
      %982 = vmatpush.bf16.msra.mxu0 0
      %983 = vmatpush.bf16.msra.mxu0 0
      %984 = vmatpush.bf16.msra.mxu0 %v972
      %985 = vmatmul.bf16.gmra.mxu0 %v975
      %v986 = vpop.f32.mrf.mxu0
      %v987 = vadd.f32 %v966, %v986
      %v988 = vpop.f32.mrf.mxu0
      %989 = vdwg.mxu0
      %v990 = vmul.f32 %v987, 0.35355338
      %v991 = vpack.c.bf16 %v990, %v990
      %v992 = vpack.c.bf16 %v987, %v987
      %994 = vrot.lane.b32.xlu0 %v992, 112
      %v995 = vpop.permute.xlu0 %994
      %v997 = vsel %vm674, %v991, 0
      %v1000 = vsel %vm674, %v995, 0
      %1002 = vmatpush.bf16.xpose.msra.mxu0 0
      %1003 = vmatpush.bf16.xpose.msra.mxu0 0
      %1004 = vmatpush.bf16.xpose.msra.mxu0 0
      %1005 = vmatpush.bf16.xpose.msra.mxu0 0
      %1006 = vmatpush.bf16.xpose.msra.mxu0 0
      %1007 = vmatpush.bf16.xpose.msra.mxu0 0
      %1008 = vmatpush.bf16.xpose.msra.mxu0 0
      %1009 = vmatpush.bf16.xpose.msra.mxu0 %v1000
      %1010 = vmatmul.bf16.gmra.mxu0 %v997
      %v1011 = vpop.f32.mrf.mxu0
      %v1012 = vadd.f32 0.0, %v1011
      %v1013 = vpop.f32.mrf.mxu0
      %1014 = vdwg.mxu0
      %v1015 = vsel %vm674, %v1012, -inf
      %1016 = vmax.xlane.f32.xlu0 %v1015
      %v1017 = vpop.xlane.xlu0 %1016
      %v1018 = vsub.f32 %v1012, %v1017
      %v1019 = vmul.f32 %v1018, 1.442695
      %v1020 = vpow.pop %v1019
      %v1021 = vsel %vm674, %v1020, 0.0
      %1022 = vadd.xlane.f32.xlu0 %v1021
      %v1023 = vpop.xlane.xlu0 %1022
      %v1024 = vrcp.pop %v1023
      %v1025 = vmul.f32 %v1020, %v1024
      %v1026 = vpack.c.bf16 %v1025, %v1025
      %1027 = vrot.lane.b32.xlu0 %v992, 96
      %v1028 = vpop.permute.xlu0 %1027
      %v1030 = vsel %vm674, %v1026, 0
      %v1033 = vsel %vm618, %v1028, 0
      %1035 = vmatpush.bf16.msra.mxu0 0
      %1036 = vmatpush.bf16.msra.mxu0 0
      %1037 = vmatpush.bf16.msra.mxu0 0
      %1038 = vmatpush.bf16.msra.mxu0 0
      %1039 = vmatpush.bf16.msra.mxu0 0
      %1040 = vmatpush.bf16.msra.mxu0 0
      %1041 = vmatpush.bf16.msra.mxu0 0
      %1042 = vmatpush.bf16.msra.mxu0 %v1033
      %1043 = vmatmul.bf16.gmra.mxu0 %v1030
      %v1044 = vpop.f32.mrf.mxu0
      %v1045 = vadd.f32 0.0, %v1044
      %v1046 = vpop.f32.mrf.mxu0
      %1047 = vdwg.mxu0
      %1049 = vrot.lane.b32.xlu0 %v991, 120
      %v1050 = vpop.permute.xlu0 %1049
      %1051 = vrot.lane.b32.xlu0 %v992, 104
      %v1052 = vpop.permute.xlu0 %1051
      %v1054 = vsel %vm674, %v1050, 0
      %v1057 = vsel %vm674, %v1052, 0
      %1059 = vmatpush.bf16.xpose.msra.mxu0 0
      %1060 = vmatpush.bf16.xpose.msra.mxu0 0
      %1061 = vmatpush.bf16.xpose.msra.mxu0 0
      %1062 = vmatpush.bf16.xpose.msra.mxu0 0
      %1063 = vmatpush.bf16.xpose.msra.mxu0 0
      %1064 = vmatpush.bf16.xpose.msra.mxu0 0
      %1065 = vmatpush.bf16.xpose.msra.mxu0 0
      %1066 = vmatpush.bf16.xpose.msra.mxu0 %v1057
      %1067 = vmatmul.bf16.gmra.mxu0 %v1054
      %v1068 = vpop.f32.mrf.mxu0
      %v1069 = vadd.f32 0.0, %v1068
      %v1070 = vpop.f32.mrf.mxu0
      %1071 = vdwg.mxu0
      %v1072 = vsel %vm674, %v1069, -inf
      %1073 = vmax.xlane.f32.xlu0 %v1072
      %v1074 = vpop.xlane.xlu0 %1073
      %v1075 = vsub.f32 %v1069, %v1074
      %v1076 = vmul.f32 %v1075, 1.442695
      %v1077 = vpow.pop %v1076
      %v1078 = vsel %vm674, %v1077, 0.0
      %1079 = vadd.xlane.f32.xlu0 %v1078
      %v1080 = vpop.xlane.xlu0 %1079
      %v1081 = vrcp.pop %v1080
      %v1082 = vmul.f32 %v1077, %v1081
      %v1083 = vpack.c.bf16 %v1082, %v1082
      %1084 = vrot.lane.b32.xlu0 %v992, 88
      %v1085 = vpop.permute.xlu0 %1084
      %v1087 = vsel %vm674, %v1083, 0
      %v1090 = vsel %vm618, %v1085, 0
      %1092 = vmatpush.bf16.msra.mxu0 0
      %1093 = vmatpush.bf16.msra.mxu0 0
      %1094 = vmatpush.bf16.msra.mxu0 0
      %1095 = vmatpush.bf16.msra.mxu0 0
      %1096 = vmatpush.bf16.msra.mxu0 0
      %1097 = vmatpush.bf16.msra.mxu0 0
      %1098 = vmatpush.bf16.msra.mxu0 0
      %1099 = vmatpush.bf16.msra.mxu0 %v1090
      %1100 = vmatmul.bf16.gmra.mxu0 %v1087
      %v1101 = vpop.f32.mrf.mxu0
      %v1102 = vadd.f32 0.0, %v1101
      %v1103 = vpop.f32.mrf.mxu0
      %1104 = vdwg.mxu0
      %1106 = vrot.lane.b32.xlu0 %v1102, 8
      %v1107 = vpop.permute.xlu0 %1106
      %v1109 = vsel %vm674, %v1045, %v1107
      %s1110 = scalar_lea.vmem %s5, 8
      %v1111 = vld [vmem:[%s1110] sm:$0xf]
      %v1112 = vld [vmem:[%s1110 + $0x4] sm:$0xf]
      %v1113 = vpack.c.bf16 %v1109, %v1109
      %s1114 = scalar_lea.vmem %s6, 1
      %v1115 = vld [vmem:[%s1114] sm:$0x1]
      %v1117 = vperm.slane %v1115, 0
      %v1121 = vunpack.c.l.b16 %v1111
      %v1122 = vunpack.c.l.b16 %v1112
      %v1123 = vpack.c.b16 %v1122, %v1121
      %v1126 = vsel %vm651, %v1113, 0
      %1128 = vmatpush.bf16.msra.mxu0 0
      %1129 = vmatpush.bf16.msra.mxu0 0
      %1130 = vmatpush.bf16.msra.mxu0 0
      %1131 = vmatpush.bf16.msra.mxu0 0
      %1132 = vmatpush.bf16.msra.mxu0 0
      %1133 = vmatpush.bf16.msra.mxu0 0
      %1134 = vmatpush.bf16.msra.mxu0 0
      %1135 = vmatpush.bf16.msra.mxu0 %v1123
      %1136 = vmatmul.bf16.gmra.mxu0 %v1126
      %v1137 = vpop.f32.mrf.mxu0
      %v1138 = vadd.f32 %v1117, %v1137
      %v1139 = vpop.f32.mrf.mxu0
      %1140 = vdwg.mxu0
      %v1141 = vadd.f32 %v958, %v1138
      %s1142 = scalar_lea.vmem %s7, 1
      %v1143 = vld [vmem:[%s1142] sm:$0x1]
      %s1144 = scalar_lea.vmem %s8, 1
      %v1145 = vld [vmem:[%s1144] sm:$0x1]
      %v1146 = vsel %vm651, %v1141, 0.0
      %1147 = vadd.xlane.f32.xlu0 %v1146
      %v1148 = vpop.xlane.xlu0 %1147
      %v1149 = vmul.f32 %v1148, %v830
      %v1150 = vsub.f32 %v1141, %v1149
      %v1151 = vmul.f32 %v1150, %v1150
      %v1152 = vsel %vm651, %v1151, 0.0
      %1153 = vadd.xlane.f32.xlu0 %v1152
      %v1154 = vpop.xlane.xlu0 %1153
      %v1155 = vmul.f32 %v1154, %v830
      %v1156 = vadd.f32 %v1155, 1e-05
      %v1157 = vrsqrt.pop %v1156
      %v1158 = vmul.f32 %v1157, %v1156
      %v1159 = vmul.f32 %v1158, %v1157
      %v1160 = vmul.f32 0.5, %v1159
      %v1161 = vsub.f32 1.5, %v1160
      %v1162 = vmul.f32 %v1157, %v1161
      %vm1163 = vweird.f32 %v1156
      %vm1164 = vweird.f32 %v1157
      %vm1165 = vmor %vm1163, %vm1164
      %v1166 = vsel %vm1165, %v1157, %v1162
      %v1167 = vmul.f32 %v1150, %v1166
      %v1169 = vperm.slane %v1143, 0
      %v1171 = vmul.f32 %v1167, %v1169
      %v1173 = vperm.slane %v1145, 0
      %v1175 = vadd.f32 %v1171, %v1173
      %s1176 = scalar_lea.vmem %s9, 8
      %v1177 = vld [vmem:[%s1176] sm:$0xf]
      %v1178 = vld [vmem:[%s1176 + $0x4] sm:$0xf]
      %v1179 = vpack.c.bf16 %v1175, %v1175
      %s1180 = scalar_lea.vmem %s10, 1
      %v1181 = vld [vmem:[%s1180] sm:$0x1]
      %v1183 = vperm.slane %v1181, 0
      %v1187 = vunpack.c.l.b16 %v1177
      %v1188 = vunpack.c.l.b16 %v1178
      %v1189 = vpack.c.b16 %v1188, %v1187
      %v1192 = vsel %vm651, %v1179, 0
      %1194 = vmatpush.bf16.msra.mxu0 0
      %1195 = vmatpush.bf16.msra.mxu0 0
      %1196 = vmatpush.bf16.msra.mxu0 0
      %1197 = vmatpush.bf16.msra.mxu0 0
      %1198 = vmatpush.bf16.msra.mxu0 0
      %1199 = vmatpush.bf16.msra.mxu0 0
      %1200 = vmatpush.bf16.msra.mxu0 0
      %1201 = vmatpush.bf16.msra.mxu0 %v1189
      %1202 = vmatmul.bf16.gmra.mxu0 %v1192
      %v1203 = vpop.f32.mrf.mxu0
      %v1204 = vadd.f32 %v1183, %v1203
      %v1205 = vpop.f32.mrf.mxu0
      %1206 = vdwg.mxu0
      %v1207 = vmax.f32 %v1204, 0.0
      %s1208 = scalar_lea.vmem %s11, 16
      %v1209 = vld [vmem:[%s1208] sm:$0xf]
      %v1210 = vld [vmem:[%s1208 + $0x4] sm:$0xf]
      %v1211 = vld [vmem:[%s1208 + $0x8] sm:$0xf]
      %v1212 = vld [vmem:[%s1208 + $0xc] sm:$0xf]
      %v1213 = vpack.c.bf16 %v1207, %v1207
      %s1214 = scalar_lea.vmem %s12, 1
      %v1215 = vld [vmem:[%s1214] sm:$0x1]
      %v1217 = vperm.slane %v1215, 0
      %v1223 = vunpack.c.l.b16 %v1209
      %v1224 = vunpack.c.l.b16 %v1210
      %v1225 = vunpack.c.l.b16 %v1211
      %v1226 = vunpack.c.l.b16 %v1212
      %v1227 = vpack.c.b16 %v1224, %v1223
      %v1228 = vpack.c.b16 %v1226, %v1225
      %v1232 = vsel %vm909, %v1213, 0
      %1234 = vmatpush.bf16.msra.mxu0 0
      %1235 = vmatpush.bf16.msra.mxu0 0
      %1236 = vmatpush.bf16.msra.mxu0 0
      %1237 = vmatpush.bf16.msra.mxu0 0
      %1238 = vmatpush.bf16.msra.mxu0 0
      %1239 = vmatpush.bf16.msra.mxu0 0
      %1240 = vmatpush.bf16.msra.mxu0 %v1228
      %1241 = vmatpush.bf16.msra.mxu0 %v1227
      %1242 = vmatmul.bf16.gmra.mxu0 %v1232
      %v1243 = vpop.f32.mrf.mxu0
      %v1244 = vadd.f32 %v1217, %v1243
      %v1245 = vpop.f32.mrf.mxu0
      %1246 = vdwg.mxu0
      %v1247 = vadd.f32 %v1175, %v1244
      %s1248 = scalar_lea.vmem %s13, 1
      %v1249 = vld [vmem:[%s1248] sm:$0x1]
      %s1250 = scalar_lea.vmem %s14, 1
      %v1251 = vld [vmem:[%s1250] sm:$0x1]
      %v1252 = vsel %vm651, %v1247, 0.0
      %1253 = vadd.xlane.f32.xlu0 %v1252
      %v1254 = vpop.xlane.xlu0 %1253
      %v1255 = vmul.f32 %v1254, %v830
      %v1256 = vsub.f32 %v1247, %v1255
      %v1257 = vmul.f32 %v1256, %v1256
      %v1258 = vsel %vm651, %v1257, 0.0
      %1259 = vadd.xlane.f32.xlu0 %v1258
      %v1260 = vpop.xlane.xlu0 %1259
      %v1261 = vmul.f32 %v1260, %v830
      %v1262 = vadd.f32 %v1261, 1e-05
      %v1263 = vrsqrt.pop %v1262
      %v1264 = vmul.f32 %v1263, %v1262
      %v1265 = vmul.f32 %v1264, %v1263
      %v1266 = vmul.f32 0.5, %v1265
      %v1267 = vsub.f32 1.5, %v1266
      %v1268 = vmul.f32 %v1263, %v1267
      %vm1269 = vweird.f32 %v1262
      %vm1270 = vweird.f32 %v1263
      %vm1271 = vmor %vm1269, %vm1270
      %v1272 = vsel %vm1271, %v1263, %v1268
      %v1273 = vmul.f32 %v1256, %v1272
      %v1275 = vperm.slane %v1249, 0
      %v1277 = vmul.f32 %v1273, %v1275
      %v1279 = vperm.slane %v1251, 0
      %v1281 = vadd.f32 %v1277, %v1279
      %v1282 = vld [vmem:[%s15] sm:$0x1]
      %v1283 = vld [vmem:[%s16] sm:$0x1]
      %v1284 = vsel %vm651, %v1281, 0.0
      %1285 = vadd.xlane.f32.xlu0 %v1284
      %v1286 = vpop.xlane.xlu0 %1285
      %v1287 = vmul.f32 %v1286, %v830
      %v1288 = vsub.f32 %v1281, %v1287
      %v1289 = vmul.f32 %v1288, %v1288
      %v1290 = vsel %vm651, %v1289, 0.0
      %1291 = vadd.xlane.f32.xlu0 %v1290
      %v1292 = vpop.xlane.xlu0 %1291
      %v1293 = vmul.f32 %v1292, %v830
      %v1294 = vadd.f32 %v1293, 1e-05
      %v1295 = vrsqrt.pop %v1294
      %v1296 = vmul.f32 %v1295, %v1294
      %v1297 = vmul.f32 %v1296, %v1295
      %v1298 = vmul.f32 0.5, %v1297
      %v1299 = vsub.f32 1.5, %v1298
      %v1300 = vmul.f32 %v1295, %v1299
      %vm1301 = vweird.f32 %v1294
      %vm1302 = vweird.f32 %v1295
      %vm1303 = vmor %vm1301, %vm1302
      %v1304 = vsel %vm1303, %v1295, %v1300
      %v1305 = vmul.f32 %v1288, %v1304
      %v1307 = vperm.slane %v1282, 0
      %v1309 = vmul.f32 %v1305, %v1307
      %v1311 = vperm.slane %v1283, 0
      %v1313 = vadd.f32 %v1309, %v1311
      %v1314 = vld [vmem:[%s17] sm:$0xf]
      %v1315 = vld [vmem:[%s17 + $0x4] sm:$0xf]
      %v1316 = vpack.c.bf16 %v1313, %v1313
      %v1317 = vld [vmem:[%s18] sm:$0x1]
      %v1319 = vperm.slane %v1317, 0
      %v1323 = vunpack.c.l.b16 %v1314
      %v1324 = vunpack.c.l.b16 %v1315
      %v1325 = vpack.c.b16 %v1324, %v1323
      %v1328 = vsel %vm651, %v1316, 0
      %1330 = vmatpush.bf16.msra.mxu0 0
      %1331 = vmatpush.bf16.msra.mxu0 0
      %1332 = vmatpush.bf16.msra.mxu0 0
      %1333 = vmatpush.bf16.msra.mxu0 0
      %1334 = vmatpush.bf16.msra.mxu0 0
      %1335 = vmatpush.bf16.msra.mxu0 0
      %1336 = vmatpush.bf16.msra.mxu0 0
      %1337 = vmatpush.bf16.msra.mxu0 %v1325
      %1338 = vmatmul.bf16.gmra.mxu0 %v1328
      %v1339 = vpop.f32.mrf.mxu0
      %v1340 = vadd.f32 %v1319, %v1339
      %v1341 = vpop.f32.mrf.mxu0
      %1342 = vdwg.mxu0
      %v1343 = vpack.c.bf16 %v1340, %v1340
      %vm1344 = vcmask 257024
      %1345 = vst.msk [vmem:[%s599] sm:$0xf] %vm1344, %v1343
      %s1346 = scalar_lea.vmem %s17, 8
      %v1347 = vld [vmem:[%s1346] sm:$0xf]
      %v1348 = vld [vmem:[%s1346 + $0x4] sm:$0xf]
      %s1349 = scalar_lea.vmem %s18, 1
      %v1350 = vld [vmem:[%s1349] sm:$0x1]
      %v1352 = vperm.slane %v1350, 0
      %v1356 = vunpack.c.l.b16 %v1347
      %v1357 = vunpack.c.l.b16 %v1348
      %v1358 = vpack.c.b16 %v1357, %v1356
      %1360 = vmatpush.bf16.msra.mxu0 0
      %1361 = vmatpush.bf16.msra.mxu0 0
      %1362 = vmatpush.bf16.msra.mxu0 0
      %1363 = vmatpush.bf16.msra.mxu0 0
      %1364 = vmatpush.bf16.msra.mxu0 0
      %1365 = vmatpush.bf16.msra.mxu0 0
      %1366 = vmatpush.bf16.msra.mxu0 0
      %1367 = vmatpush.bf16.msra.mxu0 %v1358
      %1368 = vmatmul.bf16.gmra.mxu0 %v1328
      %v1369 = vpop.f32.mrf.mxu0
      %v1370 = vadd.f32 %v1352, %v1369
      %v1371 = vpop.f32.mrf.mxu0
      %1372 = vdwg.mxu0
      %v1373 = vpack.c.bf16 %v1370, %v1370
      %s1374 = scalar_lea.vmem %s599, 4
      %1375 = vst.msk [vmem:[%s1374] sm:$0xf] %vm1344, %v1373
      %p1376 = scmp.lt.s32.totalorder %s30, 1
      %s1377 = scalar_select %p1376, %s30, 1
      %s1378 = smul.addr %s1377, 2
      %s1379 = smul.addr %s1378, 4
      %s1380 = scalar_lea.vmem %s19, %s1379
      // Predicated region
      $region97: #{forward.2} parent=95 // pred_check
        %p1381 = pneg %p452
      $region98: #{forward.2} parent=95 // pred_check_branch
        %1383 = sbr.rel (%p1381) target = $region100
      $region99: #{forward.2} parent=95 // pred_region
        _
      $region100: #{forward.2} parent=95 // pred_fallthru
        _
    $region96: #{forward.2} parent=5 // pred_fallthru
      _
    %p1384 = scmp.le.s32.totalorder 2, %s25
    // Predicated region
    $region101: #{forward.2} parent=5 // pred_check
      %p1385 = pneg %p1384
    $region102: #{forward.2} parent=5 // pred_check_branch
      %1387 = sbr.rel (%p1385) target = $region104
    $region103: #{forward.2} parent=5 // pred_region
      %s1388 = ssub.s32 %s25, 2
      // Predicated region
      $region105: #{forward.2} parent=103 // pred_check
        %p1389 = pneg %p458
      $region106: #{forward.2} parent=103 // pred_check_branch
        %1391 = sbr.rel (%p1389) target = $region108
      $region107: #{forward.2} parent=103 // pred_region
        %p1392 = scmp.lt.s32.totalorder %s31, 1
        %s1393 = scalar_select %p1392, %s31, 1
        %s1394 = smul.addr %s1393, 2
        %s1395 = smul.addr %s1394, 4
        %s1396 = scalar_lea.vmem %s19, %s1395
      $region108: #{forward.2} parent=103 // pred_fallthru
        _
    $region104: #{forward.2} parent=5 // pred_fallthru
      _
  $region6: #{forward.2} parent=0 // loop_footer
    %s29 = sadd.s32 1, %s25
  $region7: #{forward.2} parent=0 // loop_footer_branch
    %24 = sbr.rel target = $region3
  $region8: #{forward.2} parent=0 // loop_exit
    _

// kernel: forward.3
$region0: #{forward.3}
  #allocation0 [shape = 'u32[]', space=smem, size = 0x4, offset = 0x4, fixed_abs, tag = 'smem constant byte address 0x4 - core index']
  #allocation1 [shape = 'u32[72,128]{1,0:T(1,128)}', space=vmem, size = 0x9000, scoped, tag = 'internal scratch']
  #allocation2 [shape = 'f32[3,15]{1,0:T(4,128)}', space=vmem, size = 0x800, scoped, tag = 'scratch operand']
  %s0 = inlined_call_operand.vmem [shape: bf16[2,2,8,32], index: 0, kind: input, shape index: {}]
  %s1 = inlined_call_operand.vmem [shape: f32[2,1,1], index: 1, kind: input, shape index: {}]
  %s2 = inlined_call_operand.vmem [shape: f32[2,1,15], index: 2, kind: input, shape index: {}]
  %s3 = inlined_call_operand.vmem [shape: f32[2,4,1,16], index: 3, kind: input, shape index: {}]
  %s4 = inlined_call_operand.vmem [shape: f32[2,4,3,1], index: 4, kind: input, shape index: {}]
  %s5 = inlined_call_operand.vmem [shape: f32[3,16], index: 5, kind: input, shape index: {}]
  %s6 = inlined_call_operand.vmem [shape: bf16[2,16,16], index: 6, kind: input, shape index: {}]
  %s7 = inlined_call_operand.vmem [shape: f32[2,1,16], index: 7, kind: input, shape index: {}, may-alias: {7,11,15,17,19}]
  %s8 = inlined_call_operand.vmem [shape: bf16[2,16,16], index: 8, kind: input, shape index: {}]
  %s9 = inlined_call_operand.vmem [shape: f32[2,1,16], index: 9, kind: input, shape index: {}]
  %s10 = inlined_call_operand.vmem [shape: bf16[2,16,16], index: 10, kind: input, shape index: {}]
  %s11 = inlined_call_operand.vmem [shape: f32[2,1,16], index: 11, kind: input, shape index: {}, may-alias: {7,11,15,17,19}]
  %s12 = inlined_call_operand.vmem [shape: bf16[2,16,16], index: 12, kind: input, shape index: {}]
  %s13 = inlined_call_operand.vmem [shape: f32[2,1,16], index: 13, kind: input, shape index: {}]
  %s14 = inlined_call_operand.vmem [shape: f32[2,1,16], index: 14, kind: input, shape index: {}, may-alias: {14,16,18}]
  %s15 = inlined_call_operand.vmem [shape: f32[2,1,16], index: 15, kind: input, shape index: {}, may-alias: {7,11,15,17,19}]
  %s16 = inlined_call_operand.vmem [shape: f32[2,1,16], index: 16, kind: input, shape index: {}, may-alias: {14,16,18}]
  %s17 = inlined_call_operand.vmem [shape: f32[2,1,16], index: 17, kind: input, shape index: {}, may-alias: {7,11,15,17,19}]
  %s18 = inlined_call_operand.vmem [shape: f32[2,1,16], index: 18, kind: input, shape index: {}, may-alias: {14,16,18}]
  %s19 = inlined_call_operand.vmem [shape: f32[2,1,16], index: 19, kind: input, shape index: {}, may-alias: {7,11,15,17,19}]
  %s20 = inlined_call_operand.vmem [shape: bf16[2,16,32], index: 20, kind: input, shape index: {}]
  %s21 = inlined_call_operand.vmem [shape: f32[2,1,32], index: 21, kind: input, shape index: {}]
  %s22 = inlined_call_operand.vmem [shape: bf16[2,32,16], index: 22, kind: input, shape index: {}]
  %s23 = inlined_call_operand.vmem [shape: f32[2,1,16], index: 23, kind: input, shape index: {}]
  %s24 = inlined_call_operand.vmem [shape: f32[1,16], index: 24, kind: input, shape index: {}]
  %s25 = inlined_call_operand.vmem [shape: f32[1,16], index: 25, kind: input, shape index: {}]
  %s26 = inlined_call_operand.vmem [shape: bf16[16,2], index: 26, kind: input, shape index: {}]
  %s27 = inlined_call_operand.vmem [shape: f32[1,2], index: 27, kind: input, shape index: {}]
  %s28 = inlined_call_operand.vmem [shape: f32[2,3,4], index: 28, kind: output, shape index: {}]
  %s29 = sld [smem:[#allocation0]]
  $region153: #{forward.3} parent=0
    _
  %s31 = ssub.s32 1, %s29
  %s32 = scalar_select 0, %s31, %s29
  loop: start=0, step=1, limit=10
  $region2: #{forward.3} parent=0 // loop_pre_header
    _
  $region3: #{forward.3} parent=0 // loop_header
    %s34 = sphi 0, %s38
    %p35 = scmp.ge.s32.totalorder %s34, 10
    %s41 = sphi 0, %s53
    %s42 = sphi 0, %s49
    %s43 = sphi 0, %s41
    %s44 = sphi 0, %s42
    %s45 = sphi 0, %s43
    %s46 = sphi 0, %s44
    %s56 = sphi 0, %s58
    %s59 = sphi 0, %s56
    %s60 = sphi 0, %s59
    %s76 = sphi 0, %s60
    %s82 = sphi 0, %s84
    %s85 = sphi 0, %s82
    %s86 = sphi 0, %s85
    %s102 = sphi 0, %s86
    %s108 = sphi 0, %s110
    %s111 = sphi 0, %s108
    %s112 = sphi 0, %s111
    %s128 = sphi 0, %s112
    %s136 = sphi 0, %s138
    %s139 = sphi 0, %s136
    %s140 = sphi 0, %s139
    %s156 = sphi 0, %s140
    %s164 = sphi 0, %s166
    %s167 = sphi 0, %s164
    %s168 = sphi 0, %s167
    %s184 = sphi 0, %s168
    %s188 = sphi 0, %s188
    %s190 = sphi 0, %s188
    %s191 = sphi 0, %s190
    %s205 = sphi 0, %s191
    %s209 = sphi 0, %s209
    %s211 = sphi 0, %s209
    %s212 = sphi 0, %s211
    %s226 = sphi 0, %s212
    %s230 = sphi 0, %s230
    %s232 = sphi 0, %s230
    %s233 = sphi 0, %s232
    %s247 = sphi 0, %s233
    %s251 = sphi 0, %s251
    %s253 = sphi 0, %s251
    %s254 = sphi 0, %s253
    %s268 = sphi 0, %s254
    %s272 = sphi 0, %s272
    %s274 = sphi 0, %s272
    %s275 = sphi 0, %s274
    %s289 = sphi 0, %s275
    %s293 = sphi 0, %s293
    %s295 = sphi 0, %s293
    %s296 = sphi 0, %s295
    %s310 = sphi 0, %s296
    %s314 = sphi 0, %s314
    %s316 = sphi 0, %s314
    %s317 = sphi 0, %s316
    %s331 = sphi 0, %s317
    %s335 = sphi 0, %s335
    %s337 = sphi 0, %s335
    %s338 = sphi 0, %s337
    %s352 = sphi 0, %s338
    %s356 = sphi 0, %s356
    %s358 = sphi 0, %s356
    %s359 = sphi 0, %s358
    %s373 = sphi 0, %s359
    %s377 = sphi 0, %s377
    %s379 = sphi 0, %s377
    %s380 = sphi 0, %s379
    %s394 = sphi 0, %s380
    %s398 = sphi 0, %s398
    %s400 = sphi 0, %s398
    %s401 = sphi 0, %s400
    %s415 = sphi 0, %s401
    %s419 = sphi 0, %s419
    %s421 = sphi 0, %s419
    %s422 = sphi 0, %s421
    %s436 = sphi 0, %s422
    %s440 = sphi 0, %s440
    %s442 = sphi 0, %s440
    %s443 = sphi 0, %s442
    %s457 = sphi 0, %s443
    %s461 = sphi 0, %s461
    %s463 = sphi 0, %s461
    %s464 = sphi 0, %s463
    %s478 = sphi 0, %s464
    %s482 = sphi 0, %s482
    %s484 = sphi 0, %s482
    %s485 = sphi 0, %s484
    %s499 = sphi 0, %s485
    %s503 = sphi 0, %s503
    %s505 = sphi 0, %s503
    %s506 = sphi 0, %s505
    %s520 = sphi 0, %s506
    %s524 = sphi 0, %s524
    %s526 = sphi 0, %s524
    %s527 = sphi 0, %s526
    %s541 = sphi 0, %s527
    %s545 = sphi 0, %s545
    %s547 = sphi 0, %s545
    %s548 = sphi 0, %s547
    %s562 = sphi 0, %s548
    %s566 = sphi 0, %s566
    %s568 = sphi 0, %s566
    %s569 = sphi 0, %s568
    %s583 = sphi 0, %s569
    %s587 = sphi 0, %s587
    %s589 = sphi 0, %s587
    %s590 = sphi 0, %s589
    %s604 = sphi 0, %s590
    %s608 = sphi 0, %s608
    %s610 = sphi 0, %s608
    %s611 = sphi 0, %s610
    %s625 = sphi 0, %s611
    %s629 = sphi 0, %s629
    %s631 = sphi 0, %s629
    %s632 = sphi 0, %s631
    %s646 = sphi 0, %s632
    %s650 = sphi 0, %s650
    %s652 = sphi 0, %s650
    %s653 = sphi 0, %s652
    %s667 = sphi 0, %s653
    %s673 = sphi 0, %s675
    %s676 = sphi 0, %s673
    %s677 = sphi 0, %s676
    %s693 = sphi 0, %s677
  $region4: #{forward.3} parent=0 // loop_header_branch
    %37 = sbr.rel (%p35) target = $region8
  $region5: #{forward.3} parent=0 // loop_body
    %s39 = ssub.s32 %s34, 1
    %s40 = ssub.s32 %s34, 2
    %s47 = sadd.s32 1, %s42
    %p48 = scmp.ge.s32.totalorder %s47, 4
    %s49 = scalar_select %p48, 0, %s47
    %s50 = sadd.s32 1, %s41
    %s51 = scalar_select %p48, %s50, %s41
    %p52 = scmp.ge.s32.totalorder %s51, 2
    %s53 = scalar_select %p52, 0, %s51
    %s54 = ssub.s32 %s41, %s53
    %p55 = scmp.eq.s32.totalorder %s54, 0
    %s57 = sadd.s32 %s56, 1
    %s58 = scalar_select %p55, %s56, %s57
    %p61 = pneg %p55
    %p62 = scmp.eq.s32.totalorder %s34, 7
    %p63 = por %p61, %p62
    %p64 = scmp.ne.s32.totalorder %s56, %s59
    %p65 = scmp.eq.s32.totalorder %s34, 0
    %p66 = por %p64, %p65
    %p67 = scmp.ne.s32.totalorder %s56, %s59
    %p68 = scmp.eq.s32.totalorder %s39, 7
    %p69 = por %p67, %p68
    %p70 = scmp.ne.s32.totalorder %s59, %s60
    %p71 = scmp.eq.s32.totalorder %s39, 0
    %p72 = por %p70, %p71
    %p73 = scmp.ne.s32.totalorder %s59, %s60
    %p74 = scmp.eq.s32.totalorder %s40, 7
    %p75 = por %p73, %p74
    %p77 = scmp.ne.s32.totalorder %s60, %s76
    %p78 = scmp.eq.s32.totalorder %s40, 0
    %p79 = por %p77, %p78
    %s80 = ssub.s32 %s41, %s53
    %p81 = scmp.eq.s32.totalorder %s80, 0
    %s83 = sadd.s32 %s82, 1
    %s84 = scalar_select %p81, %s82, %s83
    %p87 = pneg %p81
    %p88 = scmp.eq.s32.totalorder %s34, 7
    %p89 = por %p87, %p88
    %p90 = scmp.ne.s32.totalorder %s82, %s85
    %p91 = scmp.eq.s32.totalorder %s34, 0
    %p92 = por %p90, %p91
    %p93 = scmp.ne.s32.totalorder %s82, %s85
    %p94 = scmp.eq.s32.totalorder %s39, 7
    %p95 = por %p93, %p94
    %p96 = scmp.ne.s32.totalorder %s85, %s86
    %p97 = scmp.eq.s32.totalorder %s39, 0
    %p98 = por %p96, %p97
    %p99 = scmp.ne.s32.totalorder %s85, %s86
    %p100 = scmp.eq.s32.totalorder %s40, 7
    %p101 = por %p99, %p100
    %p103 = scmp.ne.s32.totalorder %s86, %s102
    %p104 = scmp.eq.s32.totalorder %s40, 0
    %p105 = por %p103, %p104
    %s106 = ssub.s32 %s41, %s53
    %p107 = scmp.eq.s32.totalorder %s106, 0
    %s109 = sadd.s32 %s108, 1
    %s110 = scalar_select %p107, %s108, %s109
    %p113 = pneg %p107
    %p114 = scmp.eq.s32.totalorder %s34, 7
    %p115 = por %p113, %p114
    %p116 = scmp.ne.s32.totalorder %s108, %s111
    %p117 = scmp.eq.s32.totalorder %s34, 0
    %p118 = por %p116, %p117
    %p119 = scmp.ne.s32.totalorder %s108, %s111
    %p120 = scmp.eq.s32.totalorder %s39, 7
    %p121 = por %p119, %p120
    %p122 = scmp.ne.s32.totalorder %s111, %s112
    %p123 = scmp.eq.s32.totalorder %s39, 0
    %p124 = por %p122, %p123
    %p125 = scmp.ne.s32.totalorder %s111, %s112
    %p126 = scmp.eq.s32.totalorder %s40, 7
    %p127 = por %p125, %p126
    %p129 = scmp.ne.s32.totalorder %s112, %s128
    %p130 = scmp.eq.s32.totalorder %s40, 0
    %p131 = por %p129, %p130
    %s132 = ssub.s32 %s41, %s53
    %s133 = ssub.s32 %s42, %s49
    %s134 = sor.u32 %s132, %s133
    %p135 = scmp.eq.s32.totalorder %s134, 0
    %s137 = sadd.s32 %s136, 1
    %s138 = scalar_select %p135, %s136, %s137
    %p141 = pneg %p135
    %p142 = scmp.eq.s32.totalorder %s34, 7
    %p143 = por %p141, %p142
    %p144 = scmp.ne.s32.totalorder %s136, %s139
    %p145 = scmp.eq.s32.totalorder %s34, 0
    %p146 = por %p144, %p145
    %p147 = scmp.ne.s32.totalorder %s136, %s139
    %p148 = scmp.eq.s32.totalorder %s39, 7
    %p149 = por %p147, %p148
    %p150 = scmp.ne.s32.totalorder %s139, %s140
    %p151 = scmp.eq.s32.totalorder %s39, 0
    %p152 = por %p150, %p151
    %p153 = scmp.ne.s32.totalorder %s139, %s140
    %p154 = scmp.eq.s32.totalorder %s40, 7
    %p155 = por %p153, %p154
    %p157 = scmp.ne.s32.totalorder %s140, %s156
    %p158 = scmp.eq.s32.totalorder %s40, 0
    %p159 = por %p157, %p158
    %s160 = ssub.s32 %s41, %s53
    %s161 = ssub.s32 %s42, %s49
    %s162 = sor.u32 %s160, %s161
    %p163 = scmp.eq.s32.totalorder %s162, 0
    %s165 = sadd.s32 %s164, 1
    %s166 = scalar_select %p163, %s164, %s165
    %p169 = pneg %p163
    %p170 = scmp.eq.s32.totalorder %s34, 7
    %p171 = por %p169, %p170
    %p172 = scmp.ne.s32.totalorder %s164, %s167
    %p173 = scmp.eq.s32.totalorder %s34, 0
    %p174 = por %p172, %p173
    %p175 = scmp.ne.s32.totalorder %s164, %s167
    %p176 = scmp.eq.s32.totalorder %s39, 7
    %p177 = por %p175, %p176
    %p178 = scmp.ne.s32.totalorder %s167, %s168
    %p179 = scmp.eq.s32.totalorder %s39, 0
    %p180 = por %p178, %p179
    %p181 = scmp.ne.s32.totalorder %s167, %s168
    %p182 = scmp.eq.s32.totalorder %s40, 7
    %p183 = por %p181, %p182
    %p185 = scmp.ne.s32.totalorder %s168, %s184
    %p186 = scmp.eq.s32.totalorder %s40, 0
    %p187 = por %p185, %p186
    %s189 = sadd.s32 %s188, 1
    %p192 = scmp.eq.s32.totalorder %s34, 7
    %p193 = scmp.ne.s32.totalorder %s188, %s190
    %p194 = scmp.eq.s32.totalorder %s34, 0
    %p195 = por %p193, %p194
    %p196 = scmp.ne.s32.totalorder %s188, %s190
    %p197 = scmp.eq.s32.totalorder %s39, 7
    %p198 = por %p196, %p197
    %p199 = scmp.ne.s32.totalorder %s190, %s191
    %p200 = scmp.eq.s32.totalorder %s39, 0
    %p201 = por %p199, %p200
    %p202 = scmp.ne.s32.totalorder %s190, %s191
    %p203 = scmp.eq.s32.totalorder %s40, 7
    %p204 = por %p202, %p203
    %p206 = scmp.ne.s32.totalorder %s191, %s205
    %p207 = scmp.eq.s32.totalorder %s40, 0
    %p208 = por %p206, %p207
    %s210 = sadd.s32 %s209, 1
    %p213 = scmp.eq.s32.totalorder %s34, 7
    %p214 = scmp.ne.s32.totalorder %s209, %s211
    %p215 = scmp.eq.s32.totalorder %s34, 0
    %p216 = por %p214, %p215
    %p217 = scmp.ne.s32.totalorder %s209, %s211
    %p218 = scmp.eq.s32.totalorder %s39, 7
    %p219 = por %p217, %p218
    %p220 = scmp.ne.s32.totalorder %s211, %s212
    %p221 = scmp.eq.s32.totalorder %s39, 0
    %p222 = por %p220, %p221
    %p223 = scmp.ne.s32.totalorder %s211, %s212
    %p224 = scmp.eq.s32.totalorder %s40, 7
    %p225 = por %p223, %p224
    %p227 = scmp.ne.s32.totalorder %s212, %s226
    %p228 = scmp.eq.s32.totalorder %s40, 0
    %p229 = por %p227, %p228
    %s231 = sadd.s32 %s230, 1
    %p234 = scmp.eq.s32.totalorder %s34, 7
    %p235 = scmp.ne.s32.totalorder %s230, %s232
    %p236 = scmp.eq.s32.totalorder %s34, 0
    %p237 = por %p235, %p236
    %p238 = scmp.ne.s32.totalorder %s230, %s232
    %p239 = scmp.eq.s32.totalorder %s39, 7
    %p240 = por %p238, %p239
    %p241 = scmp.ne.s32.totalorder %s232, %s233
    %p242 = scmp.eq.s32.totalorder %s39, 0
    %p243 = por %p241, %p242
    %p244 = scmp.ne.s32.totalorder %s232, %s233
    %p245 = scmp.eq.s32.totalorder %s40, 7
    %p246 = por %p244, %p245
    %p248 = scmp.ne.s32.totalorder %s233, %s247
    %p249 = scmp.eq.s32.totalorder %s40, 0
    %p250 = por %p248, %p249
    %s252 = sadd.s32 %s251, 1
    %p255 = scmp.eq.s32.totalorder %s34, 7
    %p256 = scmp.ne.s32.totalorder %s251, %s253
    %p257 = scmp.eq.s32.totalorder %s34, 0
    %p258 = por %p256, %p257
    %p259 = scmp.ne.s32.totalorder %s251, %s253
    %p260 = scmp.eq.s32.totalorder %s39, 7
    %p261 = por %p259, %p260
    %p262 = scmp.ne.s32.totalorder %s253, %s254
    %p263 = scmp.eq.s32.totalorder %s39, 0
    %p264 = por %p262, %p263
    %p265 = scmp.ne.s32.totalorder %s253, %s254
    %p266 = scmp.eq.s32.totalorder %s40, 7
    %p267 = por %p265, %p266
    %p269 = scmp.ne.s32.totalorder %s254, %s268
    %p270 = scmp.eq.s32.totalorder %s40, 0
    %p271 = por %p269, %p270
    %s273 = sadd.s32 %s272, 1
    %p276 = scmp.eq.s32.totalorder %s34, 7
    %p277 = scmp.ne.s32.totalorder %s272, %s274
    %p278 = scmp.eq.s32.totalorder %s34, 0
    %p279 = por %p277, %p278
    %p280 = scmp.ne.s32.totalorder %s272, %s274
    %p281 = scmp.eq.s32.totalorder %s39, 7
    %p282 = por %p280, %p281
    %p283 = scmp.ne.s32.totalorder %s274, %s275
    %p284 = scmp.eq.s32.totalorder %s39, 0
    %p285 = por %p283, %p284
    %p286 = scmp.ne.s32.totalorder %s274, %s275
    %p287 = scmp.eq.s32.totalorder %s40, 7
    %p288 = por %p286, %p287
    %p290 = scmp.ne.s32.totalorder %s275, %s289
    %p291 = scmp.eq.s32.totalorder %s40, 0
    %p292 = por %p290, %p291
    %s294 = sadd.s32 %s293, 1
    %p297 = scmp.eq.s32.totalorder %s34, 7
    %p298 = scmp.ne.s32.totalorder %s293, %s295
    %p299 = scmp.eq.s32.totalorder %s34, 0
    %p300 = por %p298, %p299
    %p301 = scmp.ne.s32.totalorder %s293, %s295
    %p302 = scmp.eq.s32.totalorder %s39, 7
    %p303 = por %p301, %p302
    %p304 = scmp.ne.s32.totalorder %s295, %s296
    %p305 = scmp.eq.s32.totalorder %s39, 0
    %p306 = por %p304, %p305
    %p307 = scmp.ne.s32.totalorder %s295, %s296
    %p308 = scmp.eq.s32.totalorder %s40, 7
    %p309 = por %p307, %p308
    %p311 = scmp.ne.s32.totalorder %s296, %s310
    %p312 = scmp.eq.s32.totalorder %s40, 0
    %p313 = por %p311, %p312
    %s315 = sadd.s32 %s314, 1
    %p318 = scmp.eq.s32.totalorder %s34, 7
    %p319 = scmp.ne.s32.totalorder %s314, %s316
    %p320 = scmp.eq.s32.totalorder %s34, 0
    %p321 = por %p319, %p320
    %p322 = scmp.ne.s32.totalorder %s314, %s316
    %p323 = scmp.eq.s32.totalorder %s39, 7
    %p324 = por %p322, %p323
    %p325 = scmp.ne.s32.totalorder %s316, %s317
    %p326 = scmp.eq.s32.totalorder %s39, 0
    %p327 = por %p325, %p326
    %p328 = scmp.ne.s32.totalorder %s316, %s317
    %p329 = scmp.eq.s32.totalorder %s40, 7
    %p330 = por %p328, %p329
    %p332 = scmp.ne.s32.totalorder %s317, %s331
    %p333 = scmp.eq.s32.totalorder %s40, 0
    %p334 = por %p332, %p333
    %s336 = sadd.s32 %s335, 1
    %p339 = scmp.eq.s32.totalorder %s34, 7
    %p340 = scmp.ne.s32.totalorder %s335, %s337
    %p341 = scmp.eq.s32.totalorder %s34, 0
    %p342 = por %p340, %p341
    %p343 = scmp.ne.s32.totalorder %s335, %s337
    %p344 = scmp.eq.s32.totalorder %s39, 7
    %p345 = por %p343, %p344
    %p346 = scmp.ne.s32.totalorder %s337, %s338
    %p347 = scmp.eq.s32.totalorder %s39, 0
    %p348 = por %p346, %p347
    %p349 = scmp.ne.s32.totalorder %s337, %s338
    %p350 = scmp.eq.s32.totalorder %s40, 7
    %p351 = por %p349, %p350
    %p353 = scmp.ne.s32.totalorder %s338, %s352
    %p354 = scmp.eq.s32.totalorder %s40, 0
    %p355 = por %p353, %p354
    %s357 = sadd.s32 %s356, 1
    %p360 = scmp.eq.s32.totalorder %s34, 7
    %p361 = scmp.ne.s32.totalorder %s356, %s358
    %p362 = scmp.eq.s32.totalorder %s34, 0
    %p363 = por %p361, %p362
    %p364 = scmp.ne.s32.totalorder %s356, %s358
    %p365 = scmp.eq.s32.totalorder %s39, 7
    %p366 = por %p364, %p365
    %p367 = scmp.ne.s32.totalorder %s358, %s359
    %p368 = scmp.eq.s32.totalorder %s39, 0
    %p369 = por %p367, %p368
    %p370 = scmp.ne.s32.totalorder %s358, %s359
    %p371 = scmp.eq.s32.totalorder %s40, 7
    %p372 = por %p370, %p371
    %p374 = scmp.ne.s32.totalorder %s359, %s373
    %p375 = scmp.eq.s32.totalorder %s40, 0
    %p376 = por %p374, %p375
    %s378 = sadd.s32 %s377, 1
    %p381 = scmp.eq.s32.totalorder %s34, 7
    %p382 = scmp.ne.s32.totalorder %s377, %s379
    %p383 = scmp.eq.s32.totalorder %s34, 0
    %p384 = por %p382, %p383
    %p385 = scmp.ne.s32.totalorder %s377, %s379
    %p386 = scmp.eq.s32.totalorder %s39, 7
    %p387 = por %p385, %p386
    %p388 = scmp.ne.s32.totalorder %s379, %s380
    %p389 = scmp.eq.s32.totalorder %s39, 0
    %p390 = por %p388, %p389
    %p391 = scmp.ne.s32.totalorder %s379, %s380
    %p392 = scmp.eq.s32.totalorder %s40, 7
    %p393 = por %p391, %p392
    %p395 = scmp.ne.s32.totalorder %s380, %s394
    %p396 = scmp.eq.s32.totalorder %s40, 0
    %p397 = por %p395, %p396
    %s399 = sadd.s32 %s398, 1
    %p402 = scmp.eq.s32.totalorder %s34, 7
    %p403 = scmp.ne.s32.totalorder %s398, %s400
    %p404 = scmp.eq.s32.totalorder %s34, 0
    %p405 = por %p403, %p404
    %p406 = scmp.ne.s32.totalorder %s398, %s400
    %p407 = scmp.eq.s32.totalorder %s39, 7
    %p408 = por %p406, %p407
    %p409 = scmp.ne.s32.totalorder %s400, %s401
    %p410 = scmp.eq.s32.totalorder %s39, 0
    %p411 = por %p409, %p410
    %p412 = scmp.ne.s32.totalorder %s400, %s401
    %p413 = scmp.eq.s32.totalorder %s40, 7
    %p414 = por %p412, %p413
    %p416 = scmp.ne.s32.totalorder %s401, %s415
    %p417 = scmp.eq.s32.totalorder %s40, 0
    %p418 = por %p416, %p417
    %s420 = sadd.s32 %s419, 1
    %p423 = scmp.eq.s32.totalorder %s34, 7
    %p424 = scmp.ne.s32.totalorder %s419, %s421
    %p425 = scmp.eq.s32.totalorder %s34, 0
    %p426 = por %p424, %p425
    %p427 = scmp.ne.s32.totalorder %s419, %s421
    %p428 = scmp.eq.s32.totalorder %s39, 7
    %p429 = por %p427, %p428
    %p430 = scmp.ne.s32.totalorder %s421, %s422
    %p431 = scmp.eq.s32.totalorder %s39, 0
    %p432 = por %p430, %p431
    %p433 = scmp.ne.s32.totalorder %s421, %s422
    %p434 = scmp.eq.s32.totalorder %s40, 7
    %p435 = por %p433, %p434
    %p437 = scmp.ne.s32.totalorder %s422, %s436
    %p438 = scmp.eq.s32.totalorder %s40, 0
    %p439 = por %p437, %p438
    %s441 = sadd.s32 %s440, 1
    %p444 = scmp.eq.s32.totalorder %s34, 7
    %p445 = scmp.ne.s32.totalorder %s440, %s442
    %p446 = scmp.eq.s32.totalorder %s34, 0
    %p447 = por %p445, %p446
    %p448 = scmp.ne.s32.totalorder %s440, %s442
    %p449 = scmp.eq.s32.totalorder %s39, 7
    %p450 = por %p448, %p449
    %p451 = scmp.ne.s32.totalorder %s442, %s443
    %p452 = scmp.eq.s32.totalorder %s39, 0
    %p453 = por %p451, %p452
    %p454 = scmp.ne.s32.totalorder %s442, %s443
    %p455 = scmp.eq.s32.totalorder %s40, 7
    %p456 = por %p454, %p455
    %p458 = scmp.ne.s32.totalorder %s443, %s457
    %p459 = scmp.eq.s32.totalorder %s40, 0
    %p460 = por %p458, %p459
    %s462 = sadd.s32 %s461, 1
    %p465 = scmp.eq.s32.totalorder %s34, 7
    %p466 = scmp.ne.s32.totalorder %s461, %s463
    %p467 = scmp.eq.s32.totalorder %s34, 0
    %p468 = por %p466, %p467
    %p469 = scmp.ne.s32.totalorder %s461, %s463
    %p470 = scmp.eq.s32.totalorder %s39, 7
    %p471 = por %p469, %p470
    %p472 = scmp.ne.s32.totalorder %s463, %s464
    %p473 = scmp.eq.s32.totalorder %s39, 0
    %p474 = por %p472, %p473
    %p475 = scmp.ne.s32.totalorder %s463, %s464
    %p476 = scmp.eq.s32.totalorder %s40, 7
    %p477 = por %p475, %p476
    %p479 = scmp.ne.s32.totalorder %s464, %s478
    %p480 = scmp.eq.s32.totalorder %s40, 0
    %p481 = por %p479, %p480
    %s483 = sadd.s32 %s482, 1
    %p486 = scmp.eq.s32.totalorder %s34, 7
    %p487 = scmp.ne.s32.totalorder %s482, %s484
    %p488 = scmp.eq.s32.totalorder %s34, 0
    %p489 = por %p487, %p488
    %p490 = scmp.ne.s32.totalorder %s482, %s484
    %p491 = scmp.eq.s32.totalorder %s39, 7
    %p492 = por %p490, %p491
    %p493 = scmp.ne.s32.totalorder %s484, %s485
    %p494 = scmp.eq.s32.totalorder %s39, 0
    %p495 = por %p493, %p494
    %p496 = scmp.ne.s32.totalorder %s484, %s485
    %p497 = scmp.eq.s32.totalorder %s40, 7
    %p498 = por %p496, %p497
    %p500 = scmp.ne.s32.totalorder %s485, %s499
    %p501 = scmp.eq.s32.totalorder %s40, 0
    %p502 = por %p500, %p501
    %s504 = sadd.s32 %s503, 1
    %p507 = scmp.eq.s32.totalorder %s34, 7
    %p508 = scmp.ne.s32.totalorder %s503, %s505
    %p509 = scmp.eq.s32.totalorder %s34, 0
    %p510 = por %p508, %p509
    %p511 = scmp.ne.s32.totalorder %s503, %s505
    %p512 = scmp.eq.s32.totalorder %s39, 7
    %p513 = por %p511, %p512
    %p514 = scmp.ne.s32.totalorder %s505, %s506
    %p515 = scmp.eq.s32.totalorder %s39, 0
    %p516 = por %p514, %p515
    %p517 = scmp.ne.s32.totalorder %s505, %s506
    %p518 = scmp.eq.s32.totalorder %s40, 7
    %p519 = por %p517, %p518
    %p521 = scmp.ne.s32.totalorder %s506, %s520
    %p522 = scmp.eq.s32.totalorder %s40, 0
    %p523 = por %p521, %p522
    %s525 = sadd.s32 %s524, 1
    %p528 = scmp.eq.s32.totalorder %s34, 7
    %p529 = scmp.ne.s32.totalorder %s524, %s526
    %p530 = scmp.eq.s32.totalorder %s34, 0
    %p531 = por %p529, %p530
    %p532 = scmp.ne.s32.totalorder %s524, %s526
    %p533 = scmp.eq.s32.totalorder %s39, 7
    %p534 = por %p532, %p533
    %p535 = scmp.ne.s32.totalorder %s526, %s527
    %p536 = scmp.eq.s32.totalorder %s39, 0
    %p537 = por %p535, %p536
    %p538 = scmp.ne.s32.totalorder %s526, %s527
    %p539 = scmp.eq.s32.totalorder %s40, 7
    %p540 = por %p538, %p539
    %p542 = scmp.ne.s32.totalorder %s527, %s541
    %p543 = scmp.eq.s32.totalorder %s40, 0
    %p544 = por %p542, %p543
    %s546 = sadd.s32 %s545, 1
    %p549 = scmp.eq.s32.totalorder %s34, 7
    %p550 = scmp.ne.s32.totalorder %s545, %s547
    %p551 = scmp.eq.s32.totalorder %s34, 0
    %p552 = por %p550, %p551
    %p553 = scmp.ne.s32.totalorder %s545, %s547
    %p554 = scmp.eq.s32.totalorder %s39, 7
    %p555 = por %p553, %p554
    %p556 = scmp.ne.s32.totalorder %s547, %s548
    %p557 = scmp.eq.s32.totalorder %s39, 0
    %p558 = por %p556, %p557
    %p559 = scmp.ne.s32.totalorder %s547, %s548
    %p560 = scmp.eq.s32.totalorder %s40, 7
    %p561 = por %p559, %p560
    %p563 = scmp.ne.s32.totalorder %s548, %s562
    %p564 = scmp.eq.s32.totalorder %s40, 0
    %p565 = por %p563, %p564
    %s567 = sadd.s32 %s566, 1
    %p570 = scmp.eq.s32.totalorder %s34, 7
    %p571 = scmp.ne.s32.totalorder %s566, %s568
    %p572 = scmp.eq.s32.totalorder %s34, 0
    %p573 = por %p571, %p572
    %p574 = scmp.ne.s32.totalorder %s566, %s568
    %p575 = scmp.eq.s32.totalorder %s39, 7
    %p576 = por %p574, %p575
    %p577 = scmp.ne.s32.totalorder %s568, %s569
    %p578 = scmp.eq.s32.totalorder %s39, 0
    %p579 = por %p577, %p578
    %p580 = scmp.ne.s32.totalorder %s568, %s569
    %p581 = scmp.eq.s32.totalorder %s40, 7
    %p582 = por %p580, %p581
    %p584 = scmp.ne.s32.totalorder %s569, %s583
    %p585 = scmp.eq.s32.totalorder %s40, 0
    %p586 = por %p584, %p585
    %s588 = sadd.s32 %s587, 1
    %p591 = scmp.eq.s32.totalorder %s34, 7
    %p592 = scmp.ne.s32.totalorder %s587, %s589
    %p593 = scmp.eq.s32.totalorder %s34, 0
    %p594 = por %p592, %p593
    %p595 = scmp.ne.s32.totalorder %s587, %s589
    %p596 = scmp.eq.s32.totalorder %s39, 7
    %p597 = por %p595, %p596
    %p598 = scmp.ne.s32.totalorder %s589, %s590
    %p599 = scmp.eq.s32.totalorder %s39, 0
    %p600 = por %p598, %p599
    %p601 = scmp.ne.s32.totalorder %s589, %s590
    %p602 = scmp.eq.s32.totalorder %s40, 7
    %p603 = por %p601, %p602
    %p605 = scmp.ne.s32.totalorder %s590, %s604
    %p606 = scmp.eq.s32.totalorder %s40, 0
    %p607 = por %p605, %p606
    %s609 = sadd.s32 %s608, 1
    %p612 = scmp.eq.s32.totalorder %s34, 7
    %p613 = scmp.ne.s32.totalorder %s608, %s610
    %p614 = scmp.eq.s32.totalorder %s34, 0
    %p615 = por %p613, %p614
    %p616 = scmp.ne.s32.totalorder %s608, %s610
    %p617 = scmp.eq.s32.totalorder %s39, 7
    %p618 = por %p616, %p617
    %p619 = scmp.ne.s32.totalorder %s610, %s611
    %p620 = scmp.eq.s32.totalorder %s39, 0
    %p621 = por %p619, %p620
    %p622 = scmp.ne.s32.totalorder %s610, %s611
    %p623 = scmp.eq.s32.totalorder %s40, 7
    %p624 = por %p622, %p623
    %p626 = scmp.ne.s32.totalorder %s611, %s625
    %p627 = scmp.eq.s32.totalorder %s40, 0
    %p628 = por %p626, %p627
    %s630 = sadd.s32 %s629, 1
    %p633 = scmp.eq.s32.totalorder %s34, 7
    %p634 = scmp.ne.s32.totalorder %s629, %s631
    %p635 = scmp.eq.s32.totalorder %s34, 0
    %p636 = por %p634, %p635
    %p637 = scmp.ne.s32.totalorder %s629, %s631
    %p638 = scmp.eq.s32.totalorder %s39, 7
    %p639 = por %p637, %p638
    %p640 = scmp.ne.s32.totalorder %s631, %s632
    %p641 = scmp.eq.s32.totalorder %s39, 0
    %p642 = por %p640, %p641
    %p643 = scmp.ne.s32.totalorder %s631, %s632
    %p644 = scmp.eq.s32.totalorder %s40, 7
    %p645 = por %p643, %p644
    %p647 = scmp.ne.s32.totalorder %s632, %s646
    %p648 = scmp.eq.s32.totalorder %s40, 0
    %p649 = por %p647, %p648
    %s651 = sadd.s32 %s650, 1
    %p654 = scmp.eq.s32.totalorder %s34, 7
    %p655 = scmp.ne.s32.totalorder %s650, %s652
    %p656 = scmp.eq.s32.totalorder %s34, 0
    %p657 = por %p655, %p656
    %p658 = scmp.ne.s32.totalorder %s650, %s652
    %p659 = scmp.eq.s32.totalorder %s39, 7
    %p660 = por %p658, %p659
    %p661 = scmp.ne.s32.totalorder %s652, %s653
    %p662 = scmp.eq.s32.totalorder %s39, 0
    %p663 = por %p661, %p662
    %p664 = scmp.ne.s32.totalorder %s652, %s653
    %p665 = scmp.eq.s32.totalorder %s40, 7
    %p666 = por %p664, %p665
    %p668 = scmp.ne.s32.totalorder %s653, %s667
    %p669 = scmp.eq.s32.totalorder %s40, 0
    %p670 = por %p668, %p669
    %s671 = ssub.s32 %s41, %s53
    %p672 = scmp.eq.s32.totalorder %s671, 0
    %s674 = sadd.s32 %s673, 1
    %s675 = scalar_select %p672, %s673, %s674
    %p678 = pneg %p672
    %p679 = scmp.eq.s32.totalorder %s34, 7
    %p680 = por %p678, %p679
    %p681 = scmp.ne.s32.totalorder %s673, %s676
    %p682 = scmp.eq.s32.totalorder %s34, 0
    %p683 = por %p681, %p682
    %p684 = scmp.ne.s32.totalorder %s673, %s676
    %p685 = scmp.eq.s32.totalorder %s39, 7
    %p686 = por %p684, %p685
    %p687 = scmp.ne.s32.totalorder %s676, %s677
    %p688 = scmp.eq.s32.totalorder %s39, 0
    %p689 = por %p687, %p688
    %p690 = scmp.ne.s32.totalorder %s676, %s677
    %p691 = scmp.eq.s32.totalorder %s40, 7
    %p692 = por %p690, %p691
    %p694 = scmp.ne.s32.totalorder %s677, %s693
    %p695 = scmp.eq.s32.totalorder %s40, 0
    %p696 = por %p694, %p695
    %p697 = scmp.le.s32.totalorder 1, %s34
    %p698 = scmp.lt.s32.totalorder %s34, 9
    %p699 = pnand %p697, %p698
    %p700 = pneg %p699
    // Predicated region
    $region9: #{forward.3} parent=5 // pred_check
      _
    $region10: #{forward.3} parent=5 // pred_check_branch
      %702 = sbr.rel (%p699) target = $region12
    $region11: #{forward.3} parent=5 // pred_region
      %s703 = ssub.s32 %s34, 1
      // Predicated region
      $region13: #{forward.3} parent=11 // pred_check
        %p704 = pneg %p201
      $region14: #{forward.3} parent=11 // pred_check_branch
        %706 = sbr.rel (%p704) target = $region16
      $region15: #{forward.3} parent=11 // pred_region
        _
      $region16: #{forward.3} parent=11 // pred_fallthru
        _
      // Predicated region
      $region17: #{forward.3} parent=11 // pred_check
        %p707 = pneg %p222
      $region18: #{forward.3} parent=11 // pred_check_branch
        %709 = sbr.rel (%p707) target = $region20
      $region19: #{forward.3} parent=11 // pred_region
        _
      $region20: #{forward.3} parent=11 // pred_fallthru
        _
      // Predicated region
      $region21: #{forward.3} parent=11 // pred_check
        %p710 = pneg %p243
      $region22: #{forward.3} parent=11 // pred_check_branch
        %712 = sbr.rel (%p710) target = $region24
      $region23: #{forward.3} parent=11 // pred_region
        _
      $region24: #{forward.3} parent=11 // pred_fallthru
        _
      // Predicated region
      $region25: #{forward.3} parent=11 // pred_check
        %p713 = pneg %p264
      $region26: #{forward.3} parent=11 // pred_check_branch
        %715 = sbr.rel (%p713) target = $region28
      $region27: #{forward.3} parent=11 // pred_region
        _
      $region28: #{forward.3} parent=11 // pred_fallthru
        _
      // Predicated region
      $region29: #{forward.3} parent=11 // pred_check
        %p716 = pneg %p285
      $region30: #{forward.3} parent=11 // pred_check_branch
        %718 = sbr.rel (%p716) target = $region32
      $region31: #{forward.3} parent=11 // pred_region
        _
      $region32: #{forward.3} parent=11 // pred_fallthru
        _
      // Predicated region
      $region33: #{forward.3} parent=11 // pred_check
        %p719 = pneg %p306
      $region34: #{forward.3} parent=11 // pred_check_branch
        %721 = sbr.rel (%p719) target = $region36
      $region35: #{forward.3} parent=11 // pred_region
        _
      $region36: #{forward.3} parent=11 // pred_fallthru
        _
      // Predicated region
      $region37: #{forward.3} parent=11 // pred_check
        %p722 = pneg %p327
      $region38: #{forward.3} parent=11 // pred_check_branch
        %724 = sbr.rel (%p722) target = $region40
      $region39: #{forward.3} parent=11 // pred_region
        _
      $region40: #{forward.3} parent=11 // pred_fallthru
        _
      // Predicated region
      $region41: #{forward.3} parent=11 // pred_check
        %p725 = pneg %p348
      $region42: #{forward.3} parent=11 // pred_check_branch
        %727 = sbr.rel (%p725) target = $region44
      $region43: #{forward.3} parent=11 // pred_region
        _
      $region44: #{forward.3} parent=11 // pred_fallthru
        _
      // Predicated region
      $region45: #{forward.3} parent=11 // pred_check
        %p728 = pneg %p369
      $region46: #{forward.3} parent=11 // pred_check_branch
        %730 = sbr.rel (%p728) target = $region48
      $region47: #{forward.3} parent=11 // pred_region
        _
      $region48: #{forward.3} parent=11 // pred_fallthru
        _
      // Predicated region
      $region49: #{forward.3} parent=11 // pred_check
        %p731 = pneg %p390
      $region50: #{forward.3} parent=11 // pred_check_branch
        %733 = sbr.rel (%p731) target = $region52
      $region51: #{forward.3} parent=11 // pred_region
        _
      $region52: #{forward.3} parent=11 // pred_fallthru
        _
      // Predicated region
      $region53: #{forward.3} parent=11 // pred_check
        %p734 = pneg %p411
      $region54: #{forward.3} parent=11 // pred_check_branch
        %736 = sbr.rel (%p734) target = $region56
      $region55: #{forward.3} parent=11 // pred_region
        _
      $region56: #{forward.3} parent=11 // pred_fallthru
        _
      // Predicated region
      $region57: #{forward.3} parent=11 // pred_check
        %p737 = pneg %p432
      $region58: #{forward.3} parent=11 // pred_check_branch
        %739 = sbr.rel (%p737) target = $region60
      $region59: #{forward.3} parent=11 // pred_region
        _
      $region60: #{forward.3} parent=11 // pred_fallthru
        _
      // Predicated region
      $region61: #{forward.3} parent=11 // pred_check
        %p740 = pneg %p453
      $region62: #{forward.3} parent=11 // pred_check_branch
        %742 = sbr.rel (%p740) target = $region64
      $region63: #{forward.3} parent=11 // pred_region
        _
      $region64: #{forward.3} parent=11 // pred_fallthru
        _
      // Predicated region
      $region65: #{forward.3} parent=11 // pred_check
        %p743 = pneg %p474
      $region66: #{forward.3} parent=11 // pred_check_branch
        %745 = sbr.rel (%p743) target = $region68
      $region67: #{forward.3} parent=11 // pred_region
        _
      $region68: #{forward.3} parent=11 // pred_fallthru
        _
      // Predicated region
      $region69: #{forward.3} parent=11 // pred_check
        %p746 = pneg %p495
      $region70: #{forward.3} parent=11 // pred_check_branch
        %748 = sbr.rel (%p746) target = $region72
      $region71: #{forward.3} parent=11 // pred_region
        _
      $region72: #{forward.3} parent=11 // pred_fallthru
        _
      // Predicated region
      $region73: #{forward.3} parent=11 // pred_check
        %p749 = pneg %p516
      $region74: #{forward.3} parent=11 // pred_check_branch
        %751 = sbr.rel (%p749) target = $region76
      $region75: #{forward.3} parent=11 // pred_region
        _
      $region76: #{forward.3} parent=11 // pred_fallthru
        _
      // Predicated region
      $region77: #{forward.3} parent=11 // pred_check
        %p752 = pneg %p537
      $region78: #{forward.3} parent=11 // pred_check_branch
        %754 = sbr.rel (%p752) target = $region80
      $region79: #{forward.3} parent=11 // pred_region
        _
      $region80: #{forward.3} parent=11 // pred_fallthru
        _
      // Predicated region
      $region81: #{forward.3} parent=11 // pred_check
        %p755 = pneg %p558
      $region82: #{forward.3} parent=11 // pred_check_branch
        %757 = sbr.rel (%p755) target = $region84
      $region83: #{forward.3} parent=11 // pred_region
        _
      $region84: #{forward.3} parent=11 // pred_fallthru
        _
      // Predicated region
      $region85: #{forward.3} parent=11 // pred_check
        %p758 = pneg %p579
      $region86: #{forward.3} parent=11 // pred_check_branch
        %760 = sbr.rel (%p758) target = $region88
      $region87: #{forward.3} parent=11 // pred_region
        _
      $region88: #{forward.3} parent=11 // pred_fallthru
        _
      // Predicated region
      $region89: #{forward.3} parent=11 // pred_check
        %p761 = pneg %p600
      $region90: #{forward.3} parent=11 // pred_check_branch
        %763 = sbr.rel (%p761) target = $region92
      $region91: #{forward.3} parent=11 // pred_region
        _
      $region92: #{forward.3} parent=11 // pred_fallthru
        _
      // Predicated region
      $region93: #{forward.3} parent=11 // pred_check
        %p764 = pneg %p621
      $region94: #{forward.3} parent=11 // pred_check_branch
        %766 = sbr.rel (%p764) target = $region96
      $region95: #{forward.3} parent=11 // pred_region
        _
      $region96: #{forward.3} parent=11 // pred_fallthru
        _
      // Predicated region
      $region97: #{forward.3} parent=11 // pred_check
        %p767 = pneg %p642
      $region98: #{forward.3} parent=11 // pred_check_branch
        %769 = sbr.rel (%p767) target = $region100
      $region99: #{forward.3} parent=11 // pred_region
        _
      $region100: #{forward.3} parent=11 // pred_fallthru
        _
      // Predicated region
      $region101: #{forward.3} parent=11 // pred_check
        %p770 = pneg %p663
      $region102: #{forward.3} parent=11 // pred_check_branch
        %772 = sbr.rel (%p770) target = $region104
      $region103: #{forward.3} parent=11 // pred_region
        _
      $region104: #{forward.3} parent=11 // pred_fallthru
        _
    $region12: #{forward.3} parent=5 // pred_fallthru
      _
    %p773 = scmp.lt.s32.totalorder %s34, 8
    // Predicated region
    $region105: #{forward.3} parent=5 // pred_check
      %p774 = pneg %p773
    $region106: #{forward.3} parent=5 // pred_check_branch
      %776 = sbr.rel (%p774) target = $region108
    $region107: #{forward.3} parent=5 // pred_region
      // Predicated region
      $region109: #{forward.3} parent=107 // pred_check
        %p777 = pneg %p66
      $region110: #{forward.3} parent=107 // pred_check_branch
        %779 = sbr.rel (%p777) target = $region112
      $region111: #{forward.3} parent=107 // pred_region
        %p780 = scmp.lt.s32.totalorder %s41, 1
        %s781 = scalar_select %p780, %s41, 1
        %s782 = smul.addr %s781, 2
        %s783 = smul.addr %s782, 4
        %s784 = scalar_lea.vmem %s0, %s783
      $region112: #{forward.3} parent=107 // pred_fallthru
        _
      // Predicated region
      $region113: #{forward.3} parent=107 // pred_check
        %p785 = pneg %p92
      $region114: #{forward.3} parent=107 // pred_check_branch
        %787 = sbr.rel (%p785) target = $region116
      $region115: #{forward.3} parent=107 // pred_region
        %p788 = scmp.lt.s32.totalorder %s41, 1
        %s789 = scalar_select %p788, %s41, 1
        %s790 = scalar_lea.vmem %s1, %s789
      $region116: #{forward.3} parent=107 // pred_fallthru
        _
      // Predicated region
      $region117: #{forward.3} parent=107 // pred_check
        %p791 = pneg %p118
      $region118: #{forward.3} parent=107 // pred_check_branch
        %793 = sbr.rel (%p791) target = $region120
      $region119: #{forward.3} parent=107 // pred_region
        %p794 = scmp.lt.s32.totalorder %s41, 1
        %s795 = scalar_select %p794, %s41, 1
        %s796 = scalar_lea.vmem %s2, %s795
      $region120: #{forward.3} parent=107 // pred_fallthru
        _
      // Predicated region
      $region121: #{forward.3} parent=107 // pred_check
        %p797 = pneg %p146
      $region122: #{forward.3} parent=107 // pred_check_branch
        %799 = sbr.rel (%p797) target = $region124
      $region123: #{forward.3} parent=107 // pred_region
        %p800 = scmp.lt.s32.totalorder %s41, 1
        %s801 = scalar_select %p800, %s41, 1
        %p802 = scmp.lt.s32.totalorder %s42, 3
        %s803 = scalar_select %p802, %s42, 3
        %s804 = smul.addr %s801, 4
        %s805 = sadd.s32 %s803, %s804
        %s806 = scalar_lea.vmem %s3, %s805
      $region124: #{forward.3} parent=107 // pred_fallthru
        _
      // Predicated region
      $region125: #{forward.3} parent=107 // pred_check
        %p807 = pneg %p174
      $region126: #{forward.3} parent=107 // pred_check_branch
        %809 = sbr.rel (%p807) target = $region128
      $region127: #{forward.3} parent=107 // pred_region
        %p810 = scmp.lt.s32.totalorder %s41, 1
        %s811 = scalar_select %p810, %s41, 1
        %p812 = scmp.lt.s32.totalorder %s42, 3
        %s813 = scalar_select %p812, %s42, 3
        %s814 = smul.addr %s811, 4
        %s815 = sadd.s32 %s813, %s814
        %s816 = smul.addr %s815, 4
        %s817 = scalar_lea.vmem %s4, %s816
      $region128: #{forward.3} parent=107 // pred_fallthru
        _
    $region108: #{forward.3} parent=5 // pred_fallthru
      _
    %p818 = scmp.le.s32.totalorder 1, %s34
    %p819 = scmp.lt.s32.totalorder %s34, 9
    %p820 = pnand %p818, %p819
    %p821 = pneg %p820
    // Predicated region
    $region129: #{forward.3} parent=5 // pred_check
      _
    $region130: #{forward.3} parent=5 // pred_check_branch
      %823 = sbr.rel (%p820) target = $region132
    $region131: #{forward.3} parent=5 // pred_region
      %s824 = ssub.s32 %s34, 1
      %p825 = scmp.lt.s32.totalorder %s43, 1
      %s826 = scalar_select %p825, %s43, 1
      %s827 = smul.addr %s826, 2
      %s828 = smul.addr %s827, 4
      %s829 = scalar_lea.vmem %s0, %s828
      %p830 = pneg %p72
      %p831 = pneg %p69
      %p832 = scmp.lt.s32.totalorder %s43, 1
      %s833 = scalar_select %p832, %s43, 1
      %s834 = scalar_lea.vmem %s1, %s833
      %p835 = pneg %p98
      %p836 = pneg %p95
      %p837 = scmp.lt.s32.totalorder %s43, 1
      %s838 = scalar_select %p837, %s43, 1
      %s839 = scalar_lea.vmem %s2, %s838
      %p840 = pneg %p124
      %p841 = pneg %p121
      %p842 = scmp.lt.s32.totalorder %s43, 1
      %s843 = scalar_select %p842, %s43, 1
      %p844 = scmp.lt.s32.totalorder %s44, 3
      %s845 = scalar_select %p844, %s44, 3
      %s846 = smul.addr %s843, 4
      %s847 = sadd.s32 %s845, %s846
      %s848 = scalar_lea.vmem %s3, %s847
      %p849 = pneg %p152
      %p850 = pneg %p149
      %p851 = scmp.lt.s32.totalorder %s43, 1
      %s852 = scalar_select %p851, %s43, 1
      %p853 = scmp.lt.s32.totalorder %s44, 3
      %s854 = scalar_select %p853, %s44, 3
      %s855 = smul.addr %s852, 4
      %s856 = sadd.s32 %s854, %s855
      %s857 = smul.addr %s856, 4
      %s858 = scalar_lea.vmem %s4, %s857
      %p859 = pneg %p180
      %p860 = pneg %p177
      %p861 = pneg %p201
      %p862 = pneg %p198
      %p863 = pneg %p222
      %p864 = pneg %p219
      %p865 = pneg %p243
      %p866 = pneg %p240
      %p867 = pneg %p264
      %p868 = pneg %p261
      %p869 = pneg %p285
      %p870 = pneg %p282
      %p871 = pneg %p306
      %p872 = pneg %p303
      %p873 = pneg %p327
      %p874 = pneg %p324
      %p875 = pneg %p348
      %p876 = pneg %p345
      %p877 = pneg %p369
      %p878 = pneg %p366
      %p879 = pneg %p390
      %p880 = pneg %p387
      %p881 = pneg %p411
      %p882 = pneg %p408
      %p883 = pneg %p432
      %p884 = pneg %p429
      %p885 = pneg %p453
      %p886 = pneg %p450
      %p887 = pneg %p474
      %p888 = pneg %p471
      %p889 = pneg %p495
      %p890 = pneg %p492
      %p891 = pneg %p516
      %p892 = pneg %p513
      %p893 = pneg %p537
      %p894 = pneg %p534
      %p895 = pneg %p558
      %p896 = pneg %p555
      %p897 = pneg %p579
      %p898 = pneg %p576
      %p899 = pneg %p600
      %p900 = pneg %p597
      %p901 = pneg %p621
      %p902 = pneg %p618
      %p903 = pneg %p642
      %p904 = pneg %p639
      %p905 = pneg %p663
      %p906 = pneg %p660
      %p907 = pneg %p689
      %p908 = pneg %p686
      %p909 = scmp.lt.s32.totalorder %s43, 1
      %s910 = scalar_select %p909, %s43, 1
      %s911 = smul.addr %s910, 4
      %s912 = scalar_lea.vmem %s28, %s911
      %p913 = scmp.lt.s32.totalorder %s43, 1
      %s914 = scalar_select %p913, %s43, 1
      %s915 = smul.addr %s914, 2
      %s916 = smul.addr %s915, 4
      %s917 = scalar_lea.vmem %s0, %s916
      %p918 = scmp.lt.s32.totalorder %s43, 1
      %s919 = scalar_select %p918, %s43, 1
      %s920 = scalar_lea.vmem %s1, %s919
      %p921 = scmp.lt.s32.totalorder %s43, 1
      %s922 = scalar_select %p921, %s43, 1
      %s923 = scalar_lea.vmem %s2, %s922
      %p924 = scmp.lt.s32.totalorder %s43, 1
      %s925 = scalar_select %p924, %s43, 1
      %p926 = scmp.lt.s32.totalorder %s44, 3
      %s927 = scalar_select %p926, %s44, 3
      %s928 = smul.addr %s925, 4
      %s929 = sadd.s32 %s927, %s928
      %s930 = scalar_lea.vmem %s3, %s929
      %p931 = scmp.lt.s32.totalorder %s43, 1
      %s932 = scalar_select %p931, %s43, 1
      %p933 = scmp.lt.s32.totalorder %s44, 3
      %s934 = scalar_select %p933, %s44, 3
      %s935 = smul.addr %s932, 4
      %s936 = sadd.s32 %s934, %s935
      %s937 = smul.addr %s936, 4
      %s938 = scalar_lea.vmem %s4, %s937
      %p939 = scmp.lt.s32.totalorder %s43, 1
      %s940 = scalar_select %p939, %s43, 1
      %s941 = smul.addr %s940, 4
      %s942 = scalar_lea.vmem %s28, %s941
      %p944 = scmp.eq.s32.totalorder %s44, 0
      // Predicated region
      $region133: #{forward.3} parent=131 // pred_check
        %p945 = pneg %p944
      $region134: #{forward.3} parent=131 // pred_check_branch
        %947 = sbr.rel (%p945) target = $region136
      $region135: #{forward.3} parent=131 // pred_region
        %v948 = vld [vmem:[%s923] sm:$0x1]
        %v950 = vperm.slane %v948, 0
        %vm952 = vcmask 116736
        %953 = vst.msk [vmem:[#allocation2] sm:$0x7] %vm952, %v950
      $region136: #{forward.3} parent=131 // pred_fallthru
        _
      %v954 = vld [vmem:[#allocation2] sm:$0x7]
      %v955 = vld [vmem:[%s920] sm:$0x1]
      %v956 = vlaneseq
      %v957 = vand.u32 %v956, 127
      %v958 = vld [vmem:[%s5] sm:$0x7]
      %s959 = sadd.s32 %s44, 10
      %v960 = vstv %s959
      %vm961 = vcmp.eq.s32.totalorder %v957, %v960
      %v962 = vsel %vm961, 1, 0
      %v963 = vcvt.s32.f32 %v962
      %v964 = vmul.f32 %v954, %v963
      %vm965 = vcmask 116736
      %v966 = vsel %vm965, %v964, 0.0
      %967 = vadd.xlane.f32.xlu0 %v966
      %v968 = vpop.xlane.xlu0 %967
      %v969 = vperm.slane %v958, 0
      %v970 = vmul.f32 %v968, %v969
      %s971 = sadd.s32 %s44, 9
      %v972 = vstv %s971
      %vm973 = vcmp.eq.s32.totalorder %v957, %v972
      %v974 = vsel %vm973, 1, 0
      %v975 = vcvt.s32.f32 %v974
      %v976 = vmul.f32 %v954, %v975
      %v977 = vsel %vm965, %v976, 0.0
      %978 = vadd.xlane.f32.xlu0 %v977
      %v979 = vpop.xlane.xlu0 %978
      %v980 = vperm.slane %v958, 1
      %v981 = vmul.f32 %v979, %v980
      %v982 = vadd.f32 %v970, %v981
      %s983 = sadd.s32 %s44, 8
      %v984 = vstv %s983
      %vm985 = vcmp.eq.s32.totalorder %v957, %v984
      %v986 = vsel %vm985, 1, 0
      %v987 = vcvt.s32.f32 %v986
      %v988 = vmul.f32 %v954, %v987
      %v989 = vsel %vm965, %v988, 0.0
      %990 = vadd.xlane.f32.xlu0 %v989
      %v991 = vpop.xlane.xlu0 %990
      %v992 = vperm.slane %v958, 2
      %v993 = vmul.f32 %v991, %v992
      %v994 = vadd.f32 %v982, %v993
      %v996 = vperm.slane %v955, 0
      %997 = vset.pattern.permute.xlu0 0
      %998 = vperm.xlu0 %997, %v996
      %v999 = vpop.permute.xlu0 %998
      %v1001 = vrcp.pop %v999
      %v1002 = vmul.f32 %v999, %v1001
      %v1003 = vsub.f32 1.0, %v1002
      %v1004 = vmul.f32 %v1001, %v1003
      %v1005 = vadd.f32 %v1001, %v1004
      %vm1006 = vweird.f32 %v999
      %vm1007 = vweird.f32 %v1001
      %vm1008 = vmor %vm1006, %vm1007
      %v1009 = vsel %vm1008, %v1001, %v1005
      %v1010 = vand.u32 2147483647, %v999
      %vm1011 = vcmp.eq.f32.partialorder %v1010, 8.507059e+37
      %v1012 = vand.u32 %v999, 2147483648
      %v1013 = vor.u32 1.1754944e-38, %v1012
      %v1014 = vsel %vm1011, %v1013, %v1009
      %v1015 = vmul.f32 %v994, %v1014
      %v1016 = vld [vmem:[%s930] sm:$0x1]
      %v1018 = vperm.slane %v1016, 0
      %v1020 = vadd.f32 %v1015, %v1018
      %v1021 = vld [vmem:[%s6] sm:$0xf]
      %v1022 = vld [vmem:[%s6 + $0x4] sm:$0xf]
      %v1023 = vpack.c.bf16 %v1020, %v1020
      %v1024 = vld [vmem:[%s7] sm:$0x1]
      %v1026 = vperm.slane %v1024, 0
      %v1030 = vunpack.c.l.b16 %v1021
      %v1031 = vunpack.c.l.b16 %v1022
      %v1032 = vpack.c.b16 %v1031, %v1030
      %vm1034 = vcmask 130048
      %v1036 = vsel %vm1034, %v1023, 0
      %1038 = vmatpush.bf16.msra.mxu0 0
      %1039 = vmatpush.bf16.msra.mxu0 0
      %1040 = vmatpush.bf16.msra.mxu0 0
      %1041 = vmatpush.bf16.msra.mxu0 0
      %1042 = vmatpush.bf16.msra.mxu0 0
      %1043 = vmatpush.bf16.msra.mxu0 0
      %1044 = vmatpush.bf16.msra.mxu0 0
      %1045 = vmatpush.bf16.msra.mxu0 %v1032
      %1046 = vmatmul.bf16.gmra.mxu0 %v1036
      %v1047 = vpop.f32.mrf.mxu0
      %v1048 = vadd.f32 %v1026, %v1047
      %v1049 = vpop.f32.mrf.mxu0
      %1050 = vdwg.mxu0
      %v1051 = vld [vmem:[%s8] sm:$0xf]
      %v1052 = vld [vmem:[%s8 + $0x4] sm:$0xf]
      %v1053 = vpack.c.bf16 %v1048, %v1048
      %v1054 = vld [vmem:[%s9] sm:$0x1]
      %v1056 = vperm.slane %v1054, 0
      %v1060 = vunpack.c.l.b16 %v1051
      %v1061 = vunpack.c.l.b16 %v1052
      %v1062 = vpack.c.b16 %v1061, %v1060
      %v1065 = vsel %vm1034, %v1053, 0
      %1067 = vmatpush.bf16.msra.mxu0 0
      %1068 = vmatpush.bf16.msra.mxu0 0
      %1069 = vmatpush.bf16.msra.mxu0 0
      %1070 = vmatpush.bf16.msra.mxu0 0
      %1071 = vmatpush.bf16.msra.mxu0 0
      %1072 = vmatpush.bf16.msra.mxu0 0
      %1073 = vmatpush.bf16.msra.mxu0 0
      %1074 = vmatpush.bf16.msra.mxu0 %v1062
      %1075 = vmatmul.bf16.gmra.mxu0 %v1065
      %v1076 = vpop.f32.mrf.mxu0
      %v1077 = vadd.f32 %v1056, %v1076
      %v1078 = vpop.f32.mrf.mxu0
      %1079 = vdwg.mxu0
      %v1080 = vadd.f32 %v1020, %v1077
      %v1081 = vld [vmem:[%s14] sm:$0x1]
      %v1082 = vld [vmem:[%s15] sm:$0x1]
      %vm1083 = vcmask 124928
      %v1084 = vsel %vm1083, %v1080, 0.0
      %1085 = vadd.xlane.f32.xlu0 %v1084
      %v1086 = vpop.xlane.xlu0 %1085
      %v1087 = vrcp.pop 16.0
      %v1088 = vmul.f32 16.0, %v1087
      %v1089 = vsub.f32 1.0, %v1088
      %v1090 = vmul.f32 %v1087, %v1089
      %v1091 = vadd.f32 %v1087, %v1090
      %vm1092 = vweird.f32 %v1087
      %v1093 = vsel %vm1092, %v1087, %v1091
      %v1094 = vmul.f32 %v1086, %v1093
      %v1095 = vsub.f32 %v1080, %v1094
      %v1096 = vmul.f32 %v1095, %v1095
      %v1097 = vsel %vm1083, %v1096, 0.0
      %1098 = vadd.xlane.f32.xlu0 %v1097
      %v1099 = vpop.xlane.xlu0 %1098
      %v1100 = vmul.f32 %v1099, %v1093
      %v1101 = vadd.f32 %v1100, 1e-05
      %v1102 = vrsqrt.pop %v1101
      %v1103 = vmul.f32 %v1102, %v1101
      %v1104 = vmul.f32 %v1103, %v1102
      %v1105 = vmul.f32 0.5, %v1104
      %v1106 = vsub.f32 1.5, %v1105
      %v1107 = vmul.f32 %v1102, %v1106
      %vm1108 = vweird.f32 %v1101
      %vm1109 = vweird.f32 %v1102
      %vm1110 = vmor %vm1108, %vm1109
      %v1111 = vsel %vm1110, %v1102, %v1107
      %v1112 = vmul.f32 %v1095, %v1111
      %v1114 = vperm.slane %v1081, 0
      %v1116 = vmul.f32 %v1112, %v1114
      %v1118 = vperm.slane %v1082, 0
      %v1120 = vadd.f32 %v1116, %v1118
      %v1121 = vld [vmem:[%s10] sm:$0xf]
      %v1122 = vld [vmem:[%s10 + $0x4] sm:$0xf]
      %v1123 = vpack.c.bf16 %v1120, %v1120
      %v1124 = vld [vmem:[%s11] sm:$0x1]
      %v1126 = vperm.slane %v1124, 0
      %v1130 = vunpack.c.l.b16 %v1121
      %v1131 = vunpack.c.l.b16 %v1122
      %v1132 = vpack.c.b16 %v1131, %v1130
      %v1135 = vsel %vm1034, %v1123, 0
      %1137 = vmatpush.bf16.msra.mxu0 0
      %1138 = vmatpush.bf16.msra.mxu0 0
      %1139 = vmatpush.bf16.msra.mxu0 0
      %1140 = vmatpush.bf16.msra.mxu0 0
      %1141 = vmatpush.bf16.msra.mxu0 0
      %1142 = vmatpush.bf16.msra.mxu0 0
      %1143 = vmatpush.bf16.msra.mxu0 0
      %1144 = vmatpush.bf16.msra.mxu0 %v1132
      %1145 = vmatmul.bf16.gmra.mxu0 %v1135
      %v1146 = vpop.f32.mrf.mxu0
      %v1147 = vadd.f32 %v1126, %v1146
      %v1148 = vpop.f32.mrf.mxu0
      %1149 = vdwg.mxu0
      %v1150 = vmul.f32 %v1147, 0.35355338
      %v1151 = vld [vmem:[%s917] sm:$0xf]
      %v1152 = vpack.c.bf16 %v1150, %v1150
      %vm1153 = vcmask 64512
      %v1155 = vsel %vm1153, %v1152, 0
      %v1158 = vsel %vm1153, %v1151, 0
      %1160 = vmatpush.bf16.xpose.msra.mxu0 0
      %1161 = vmatpush.bf16.xpose.msra.mxu0 0
      %1162 = vmatpush.bf16.xpose.msra.mxu0 0
      %1163 = vmatpush.bf16.xpose.msra.mxu0 0
      %1164 = vmatpush.bf16.xpose.msra.mxu0 0
      %1165 = vmatpush.bf16.xpose.msra.mxu0 0
      %1166 = vmatpush.bf16.xpose.msra.mxu0 0
      %1167 = vmatpush.bf16.xpose.msra.mxu0 %v1158
      %1168 = vmatmul.bf16.gmra.mxu0 %v1155
      %v1169 = vpop.f32.mrf.mxu0
      %v1170 = vadd.f32 0.0, %v1169
      %v1171 = vpop.f32.mrf.mxu0
      %1172 = vdwg.mxu0
      %vm1173 = vcmask 59392
      %v1174 = vsel %vm1173, %v1170, -inf
      %1175 = vmax.xlane.f32.xlu0 %v1174
      %v1176 = vpop.xlane.xlu0 %1175
      %v1177 = vsub.f32 %v1170, %v1176
      %v1178 = vmul.f32 %v1177, 1.442695
      %v1179 = vpow.pop %v1178
      %v1180 = vsel %vm1173, %v1179, 0.0
      %1181 = vadd.xlane.f32.xlu0 %v1180
      %v1182 = vpop.xlane.xlu0 %1181
      %v1183 = vrcp.pop %v1182
      %v1184 = vmul.f32 %v1179, %v1183
      %v1185 = vpack.c.bf16 %v1184, %v1184
      %v1187 = vunpack.c.l.b16 %v1151
      %v1188 = vpack.c.b16 %v1187, %v1187
      %1189 = vrot.lane.b32.xlu0 %v1188, 112
      %v1190 = vpop.permute.xlu0 %1189
      %v1192 = vsel %vm1153, %v1185, 0
      %vm1194 = vcmask 1043456
      %v1196 = vsel %vm1194, %v1190, 0
      %1198 = vmatpush.bf16.msra.mxu0 0
      %1199 = vmatpush.bf16.msra.mxu0 0
      %1200 = vmatpush.bf16.msra.mxu0 0
      %1201 = vmatpush.bf16.msra.mxu0 0
      %1202 = vmatpush.bf16.msra.mxu0 0
      %1203 = vmatpush.bf16.msra.mxu0 0
      %1204 = vmatpush.bf16.msra.mxu0 0
      %1205 = vmatpush.bf16.msra.mxu0 %v1196
      %1206 = vmatmul.bf16.gmra.mxu0 %v1192
      %v1207 = vpop.f32.mrf.mxu0
      %v1208 = vadd.f32 0.0, %v1207
      %v1209 = vpop.f32.mrf.mxu0
      %1210 = vdwg.mxu0
      %1212 = vrot.lane.b32.xlu0 %v1152, 120
      %v1213 = vpop.permute.xlu0 %1212
      %1214 = vrot.lane.b32.xlu0 %v1188, 120
      %v1215 = vpop.permute.xlu0 %1214
      %v1217 = vsel %vm1153, %v1213, 0
      %v1220 = vsel %vm1153, %v1215, 0
      %1222 = vmatpush.bf16.xpose.msra.mxu0 0
      %1223 = vmatpush.bf16.xpose.msra.mxu0 0
      %1224 = vmatpush.bf16.xpose.msra.mxu0 0
      %1225 = vmatpush.bf16.xpose.msra.mxu0 0
      %1226 = vmatpush.bf16.xpose.msra.mxu0 0
      %1227 = vmatpush.bf16.xpose.msra.mxu0 0
      %1228 = vmatpush.bf16.xpose.msra.mxu0 0
      %1229 = vmatpush.bf16.xpose.msra.mxu0 %v1220
      %1230 = vmatmul.bf16.gmra.mxu0 %v1217
      %v1231 = vpop.f32.mrf.mxu0
      %v1232 = vadd.f32 0.0, %v1231
      %v1233 = vpop.f32.mrf.mxu0
      %1234 = vdwg.mxu0
      %v1235 = vsel %vm1173, %v1232, -inf
      %1236 = vmax.xlane.f32.xlu0 %v1235
      %v1237 = vpop.xlane.xlu0 %1236
      %v1238 = vsub.f32 %v1232, %v1237
      %v1239 = vmul.f32 %v1238, 1.442695
      %v1240 = vpow.pop %v1239
      %v1241 = vsel %vm1173, %v1240, 0.0
      %1242 = vadd.xlane.f32.xlu0 %v1241
      %v1243 = vpop.xlane.xlu0 %1242
      %v1244 = vrcp.pop %v1243
      %v1245 = vmul.f32 %v1240, %v1244
      %v1246 = vpack.c.bf16 %v1245, %v1245
      %1247 = vrot.lane.b32.xlu0 %v1188, 104
      %v1248 = vpop.permute.xlu0 %1247
      %v1250 = vsel %vm1153, %v1246, 0
      %v1253 = vsel %vm1194, %v1248, 0
      %1255 = vmatpush.bf16.msra.mxu0 0
      %1256 = vmatpush.bf16.msra.mxu0 0
      %1257 = vmatpush.bf16.msra.mxu0 0
      %1258 = vmatpush.bf16.msra.mxu0 0
      %1259 = vmatpush.bf16.msra.mxu0 0
      %1260 = vmatpush.bf16.msra.mxu0 0
      %1261 = vmatpush.bf16.msra.mxu0 0
      %1262 = vmatpush.bf16.msra.mxu0 %v1253
      %1263 = vmatmul.bf16.gmra.mxu0 %v1250
      %v1264 = vpop.f32.mrf.mxu0
      %v1265 = vadd.f32 0.0, %v1264
      %v1266 = vpop.f32.mrf.mxu0
      %1267 = vdwg.mxu0
      %1269 = vrot.lane.b32.xlu0 %v1265, 8
      %v1270 = vpop.permute.xlu0 %1269
      %v1272 = vsel %vm1153, %v1208, %v1270
      %v1273 = vld [vmem:[%s12] sm:$0xf]
      %v1274 = vld [vmem:[%s12 + $0x4] sm:$0xf]
      %v1275 = vpack.c.bf16 %v1272, %v1272
      %v1276 = vld [vmem:[%s13] sm:$0x1]
      %v1278 = vperm.slane %v1276, 0
      %v1282 = vunpack.c.l.b16 %v1273
      %v1283 = vunpack.c.l.b16 %v1274
      %v1284 = vpack.c.b16 %v1283, %v1282
      %v1287 = vsel %vm1034, %v1275, 0
      %1289 = vmatpush.bf16.msra.mxu0 0
      %1290 = vmatpush.bf16.msra.mxu0 0
      %1291 = vmatpush.bf16.msra.mxu0 0
      %1292 = vmatpush.bf16.msra.mxu0 0
      %1293 = vmatpush.bf16.msra.mxu0 0
      %1294 = vmatpush.bf16.msra.mxu0 0
      %1295 = vmatpush.bf16.msra.mxu0 0
      %1296 = vmatpush.bf16.msra.mxu0 %v1284
      %1297 = vmatmul.bf16.gmra.mxu0 %v1287
      %v1298 = vpop.f32.mrf.mxu0
      %v1299 = vadd.f32 %v1278, %v1298
      %v1300 = vpop.f32.mrf.mxu0
      %1301 = vdwg.mxu0
      %v1302 = vadd.f32 %v1120, %v1299
      %v1303 = vld [vmem:[%s16] sm:$0x1]
      %v1304 = vld [vmem:[%s17] sm:$0x1]
      %v1305 = vsel %vm1083, %v1302, 0.0
      %1306 = vadd.xlane.f32.xlu0 %v1305
      %v1307 = vpop.xlane.xlu0 %1306
      %v1308 = vmul.f32 %v1307, %v1093
      %v1309 = vsub.f32 %v1302, %v1308
      %v1310 = vmul.f32 %v1309, %v1309
      %v1311 = vsel %vm1083, %v1310, 0.0
      %1312 = vadd.xlane.f32.xlu0 %v1311
      %v1313 = vpop.xlane.xlu0 %1312
      %v1314 = vmul.f32 %v1313, %v1093
      %v1315 = vadd.f32 %v1314, 1e-05
      %v1316 = vrsqrt.pop %v1315
      %v1317 = vmul.f32 %v1316, %v1315
      %v1318 = vmul.f32 %v1317, %v1316
      %v1319 = vmul.f32 0.5, %v1318
      %v1320 = vsub.f32 1.5, %v1319
      %v1321 = vmul.f32 %v1316, %v1320
      %vm1322 = vweird.f32 %v1315
      %vm1323 = vweird.f32 %v1316
      %vm1324 = vmor %vm1322, %vm1323
      %v1325 = vsel %vm1324, %v1316, %v1321
      %v1326 = vmul.f32 %v1309, %v1325
      %v1328 = vperm.slane %v1303, 0
      %v1330 = vmul.f32 %v1326, %v1328
      %v1332 = vperm.slane %v1304, 0
      %v1334 = vadd.f32 %v1330, %v1332
      %v1335 = vld [vmem:[%s20] sm:$0xf]
      %v1336 = vld [vmem:[%s20 + $0x4] sm:$0xf]
      %v1337 = vpack.c.bf16 %v1334, %v1334
      %v1338 = vld [vmem:[%s21] sm:$0x1]
      %v1340 = vperm.slane %v1338, 0
      %v1344 = vunpack.c.l.b16 %v1335
      %v1345 = vunpack.c.l.b16 %v1336
      %v1346 = vpack.c.b16 %v1345, %v1344
      %v1349 = vsel %vm1034, %v1337, 0
      %1351 = vmatpush.bf16.msra.mxu0 0
      %1352 = vmatpush.bf16.msra.mxu0 0
      %1353 = vmatpush.bf16.msra.mxu0 0
      %1354 = vmatpush.bf16.msra.mxu0 0
      %1355 = vmatpush.bf16.msra.mxu0 0
      %1356 = vmatpush.bf16.msra.mxu0 0
      %1357 = vmatpush.bf16.msra.mxu0 0
      %1358 = vmatpush.bf16.msra.mxu0 %v1346
      %1359 = vmatmul.bf16.gmra.mxu0 %v1349
      %v1360 = vpop.f32.mrf.mxu0
      %v1361 = vadd.f32 %v1340, %v1360
      %v1362 = vpop.f32.mrf.mxu0
      %1363 = vdwg.mxu0
      %v1364 = vmax.f32 %v1361, 0.0
      %v1365 = vld [vmem:[%s22] sm:$0xf]
      %v1366 = vld [vmem:[%s22 + $0x4] sm:$0xf]
      %v1367 = vld [vmem:[%s22 + $0x8] sm:$0xf]
      %v1368 = vld [vmem:[%s22 + $0xc] sm:$0xf]
      %v1369 = vpack.c.bf16 %v1364, %v1364
      %v1370 = vld [vmem:[%s23] sm:$0x1]
      %v1372 = vperm.slane %v1370, 0
      %v1378 = vunpack.c.l.b16 %v1365
      %v1379 = vunpack.c.l.b16 %v1366
      %v1380 = vunpack.c.l.b16 %v1367
      %v1381 = vunpack.c.l.b16 %v1368
      %v1382 = vpack.c.b16 %v1379, %v1378
      %v1383 = vpack.c.b16 %v1381, %v1380
      %vm1386 = vcmask 261120
      %v1388 = vsel %vm1386, %v1369, 0
      %1390 = vmatpush.bf16.msra.mxu0 0
      %1391 = vmatpush.bf16.msra.mxu0 0
      %1392 = vmatpush.bf16.msra.mxu0 0
      %1393 = vmatpush.bf16.msra.mxu0 0
      %1394 = vmatpush.bf16.msra.mxu0 0
      %1395 = vmatpush.bf16.msra.mxu0 0
      %1396 = vmatpush.bf16.msra.mxu0 %v1383
      %1397 = vmatpush.bf16.msra.mxu0 %v1382
      %1398 = vmatmul.bf16.gmra.mxu0 %v1388
      %v1399 = vpop.f32.mrf.mxu0
      %v1400 = vadd.f32 %v1372, %v1399
      %v1401 = vpop.f32.mrf.mxu0
      %1402 = vdwg.mxu0
      %v1403 = vadd.f32 %v1334, %v1400
      %v1404 = vld [vmem:[%s18] sm:$0x1]
      %v1405 = vld [vmem:[%s19] sm:$0x1]
      %v1406 = vsel %vm1083, %v1403, 0.0
      %1407 = vadd.xlane.f32.xlu0 %v1406
      %v1408 = vpop.xlane.xlu0 %1407
      %v1409 = vmul.f32 %v1408, %v1093
      %v1410 = vsub.f32 %v1403, %v1409
      %v1411 = vmul.f32 %v1410, %v1410
      %v1412 = vsel %vm1083, %v1411, 0.0
      %1413 = vadd.xlane.f32.xlu0 %v1412
      %v1414 = vpop.xlane.xlu0 %1413
      %v1415 = vmul.f32 %v1414, %v1093
      %v1416 = vadd.f32 %v1415, 1e-05
      %v1417 = vrsqrt.pop %v1416
      %v1418 = vmul.f32 %v1417, %v1416
      %v1419 = vmul.f32 %v1418, %v1417
      %v1420 = vmul.f32 0.5, %v1419
      %v1421 = vsub.f32 1.5, %v1420
      %v1422 = vmul.f32 %v1417, %v1421
      %vm1423 = vweird.f32 %v1416
      %vm1424 = vweird.f32 %v1417
      %vm1425 = vmor %vm1423, %vm1424
      %v1426 = vsel %vm1425, %v1417, %v1422
      %v1427 = vmul.f32 %v1410, %v1426
      %v1429 = vperm.slane %v1404, 0
      %v1431 = vmul.f32 %v1427, %v1429
      %v1433 = vperm.slane %v1405, 0
      %v1435 = vadd.f32 %v1431, %v1433
      %s1436 = scalar_lea.vmem %s6, 8
      %v1437 = vld [vmem:[%s1436] sm:$0xf]
      %v1438 = vld [vmem:[%s1436 + $0x4] sm:$0xf]
      %v1439 = vpack.c.bf16 %v1435, %v1435
      %s1440 = scalar_lea.vmem %s7, 1
      %v1441 = vld [vmem:[%s1440] sm:$0x1]
      %v1443 = vperm.slane %v1441, 0
      %v1447 = vunpack.c.l.b16 %v1437
      %v1448 = vunpack.c.l.b16 %v1438
      %v1449 = vpack.c.b16 %v1448, %v1447
      %v1452 = vsel %vm1034, %v1439, 0
      %1454 = vmatpush.bf16.msra.mxu0 0
      %1455 = vmatpush.bf16.msra.mxu0 0
      %1456 = vmatpush.bf16.msra.mxu0 0
      %1457 = vmatpush.bf16.msra.mxu0 0
      %1458 = vmatpush.bf16.msra.mxu0 0
      %1459 = vmatpush.bf16.msra.mxu0 0
      %1460 = vmatpush.bf16.msra.mxu0 0
      %1461 = vmatpush.bf16.msra.mxu0 %v1449
      %1462 = vmatmul.bf16.gmra.mxu0 %v1452
      %v1463 = vpop.f32.mrf.mxu0
      %v1464 = vadd.f32 %v1443, %v1463
      %v1465 = vpop.f32.mrf.mxu0
      %1466 = vdwg.mxu0
      %s1467 = scalar_lea.vmem %s8, 8
      %v1468 = vld [vmem:[%s1467] sm:$0xf]
      %v1469 = vld [vmem:[%s1467 + $0x4] sm:$0xf]
      %v1470 = vpack.c.bf16 %v1464, %v1464
      %s1471 = scalar_lea.vmem %s9, 1
      %v1472 = vld [vmem:[%s1471] sm:$0x1]
      %v1474 = vperm.slane %v1472, 0
      %v1478 = vunpack.c.l.b16 %v1468
      %v1479 = vunpack.c.l.b16 %v1469
      %v1480 = vpack.c.b16 %v1479, %v1478
      %v1483 = vsel %vm1034, %v1470, 0
      %1485 = vmatpush.bf16.msra.mxu0 0
      %1486 = vmatpush.bf16.msra.mxu0 0
      %1487 = vmatpush.bf16.msra.mxu0 0
      %1488 = vmatpush.bf16.msra.mxu0 0
      %1489 = vmatpush.bf16.msra.mxu0 0
      %1490 = vmatpush.bf16.msra.mxu0 0
      %1491 = vmatpush.bf16.msra.mxu0 0
      %1492 = vmatpush.bf16.msra.mxu0 %v1480
      %1493 = vmatmul.bf16.gmra.mxu0 %v1483
      %v1494 = vpop.f32.mrf.mxu0
      %v1495 = vadd.f32 %v1474, %v1494
      %v1496 = vpop.f32.mrf.mxu0
      %1497 = vdwg.mxu0
      %v1498 = vadd.f32 %v1435, %v1495
      %s1499 = scalar_lea.vmem %s14, 1
      %v1500 = vld [vmem:[%s1499] sm:$0x1]
      %s1501 = scalar_lea.vmem %s15, 1
      %v1502 = vld [vmem:[%s1501] sm:$0x1]
      %v1503 = vsel %vm1083, %v1498, 0.0
      %1504 = vadd.xlane.f32.xlu0 %v1503
      %v1505 = vpop.xlane.xlu0 %1504
      %v1506 = vmul.f32 %v1505, %v1093
      %v1507 = vsub.f32 %v1498, %v1506
      %v1508 = vmul.f32 %v1507, %v1507
      %v1509 = vsel %vm1083, %v1508, 0.0
      %1510 = vadd.xlane.f32.xlu0 %v1509
      %v1511 = vpop.xlane.xlu0 %1510
      %v1512 = vmul.f32 %v1511, %v1093
      %v1513 = vadd.f32 %v1512, 1e-05
      %v1514 = vrsqrt.pop %v1513
      %v1515 = vmul.f32 %v1514, %v1513
      %v1516 = vmul.f32 %v1515, %v1514
      %v1517 = vmul.f32 0.5, %v1516
      %v1518 = vsub.f32 1.5, %v1517
      %v1519 = vmul.f32 %v1514, %v1518
      %vm1520 = vweird.f32 %v1513
      %vm1521 = vweird.f32 %v1514
      %vm1522 = vmor %vm1520, %vm1521
      %v1523 = vsel %vm1522, %v1514, %v1519
      %v1524 = vmul.f32 %v1507, %v1523
      %v1526 = vperm.slane %v1500, 0
      %v1528 = vmul.f32 %v1524, %v1526
      %v1530 = vperm.slane %v1502, 0
      %v1532 = vadd.f32 %v1528, %v1530
      %s1533 = scalar_lea.vmem %s10, 8
      %v1534 = vld [vmem:[%s1533] sm:$0xf]
      %v1535 = vld [vmem:[%s1533 + $0x4] sm:$0xf]
      %v1536 = vpack.c.bf16 %v1532, %v1532
      %s1537 = scalar_lea.vmem %s11, 1
      %v1538 = vld [vmem:[%s1537] sm:$0x1]
      %v1540 = vperm.slane %v1538, 0
      %v1544 = vunpack.c.l.b16 %v1534
      %v1545 = vunpack.c.l.b16 %v1535
      %v1546 = vpack.c.b16 %v1545, %v1544
      %v1549 = vsel %vm1034, %v1536, 0
      %1551 = vmatpush.bf16.msra.mxu0 0
      %1552 = vmatpush.bf16.msra.mxu0 0
      %1553 = vmatpush.bf16.msra.mxu0 0
      %1554 = vmatpush.bf16.msra.mxu0 0
      %1555 = vmatpush.bf16.msra.mxu0 0
      %1556 = vmatpush.bf16.msra.mxu0 0
      %1557 = vmatpush.bf16.msra.mxu0 0
      %1558 = vmatpush.bf16.msra.mxu0 %v1546
      %1559 = vmatmul.bf16.gmra.mxu0 %v1549
      %v1560 = vpop.f32.mrf.mxu0
      %v1561 = vadd.f32 %v1540, %v1560
      %v1562 = vpop.f32.mrf.mxu0
      %1563 = vdwg.mxu0
      %v1564 = vmul.f32 %v1561, 0.35355338
      %s1565 = scalar_lea.vmem %s917, 4
      %v1566 = vld [vmem:[%s1565] sm:$0xf]
      %v1567 = vpack.c.bf16 %v1564, %v1564
      %v1569 = vsel %vm1153, %v1567, 0
      %v1572 = vsel %vm1153, %v1566, 0
      %1574 = vmatpush.bf16.xpose.msra.mxu0 0
      %1575 = vmatpush.bf16.xpose.msra.mxu0 0
      %1576 = vmatpush.bf16.xpose.msra.mxu0 0
      %1577 = vmatpush.bf16.xpose.msra.mxu0 0
      %1578 = vmatpush.bf16.xpose.msra.mxu0 0
      %1579 = vmatpush.bf16.xpose.msra.mxu0 0
      %1580 = vmatpush.bf16.xpose.msra.mxu0 0
      %1581 = vmatpush.bf16.xpose.msra.mxu0 %v1572
      %1582 = vmatmul.bf16.gmra.mxu0 %v1569
      %v1583 = vpop.f32.mrf.mxu0
      %v1584 = vadd.f32 0.0, %v1583
      %v1585 = vpop.f32.mrf.mxu0
      %1586 = vdwg.mxu0
      %v1587 = vsel %vm1173, %v1584, -inf
      %1588 = vmax.xlane.f32.xlu0 %v1587
      %v1589 = vpop.xlane.xlu0 %1588
      %v1590 = vsub.f32 %v1584, %v1589
      %v1591 = vmul.f32 %v1590, 1.442695
      %v1592 = vpow.pop %v1591
      %v1593 = vsel %vm1173, %v1592, 0.0
      %1594 = vadd.xlane.f32.xlu0 %v1593
      %v1595 = vpop.xlane.xlu0 %1594
      %v1596 = vrcp.pop %v1595
      %v1597 = vmul.f32 %v1592, %v1596
      %v1598 = vpack.c.bf16 %v1597, %v1597
      %v1600 = vunpack.c.l.b16 %v1566
      %v1601 = vpack.c.b16 %v1600, %v1600
      %1602 = vrot.lane.b32.xlu0 %v1601, 112
      %v1603 = vpop.permute.xlu0 %1602
      %v1605 = vsel %vm1153, %v1598, 0
      %v1608 = vsel %vm1194, %v1603, 0
      %1610 = vmatpush.bf16.msra.mxu0 0
      %1611 = vmatpush.bf16.msra.mxu0 0
      %1612 = vmatpush.bf16.msra.mxu0 0
      %1613 = vmatpush.bf16.msra.mxu0 0
      %1614 = vmatpush.bf16.msra.mxu0 0
      %1615 = vmatpush.bf16.msra.mxu0 0
      %1616 = vmatpush.bf16.msra.mxu0 0
      %1617 = vmatpush.bf16.msra.mxu0 %v1608
      %1618 = vmatmul.bf16.gmra.mxu0 %v1605
      %v1619 = vpop.f32.mrf.mxu0
      %v1620 = vadd.f32 0.0, %v1619
      %v1621 = vpop.f32.mrf.mxu0
      %1622 = vdwg.mxu0
      %1624 = vrot.lane.b32.xlu0 %v1567, 120
      %v1625 = vpop.permute.xlu0 %1624
      %1626 = vrot.lane.b32.xlu0 %v1601, 120
      %v1627 = vpop.permute.xlu0 %1626
      %v1629 = vsel %vm1153, %v1625, 0
      %v1632 = vsel %vm1153, %v1627, 0
      %1634 = vmatpush.bf16.xpose.msra.mxu0 0
      %1635 = vmatpush.bf16.xpose.msra.mxu0 0
      %1636 = vmatpush.bf16.xpose.msra.mxu0 0
      %1637 = vmatpush.bf16.xpose.msra.mxu0 0
      %1638 = vmatpush.bf16.xpose.msra.mxu0 0
      %1639 = vmatpush.bf16.xpose.msra.mxu0 0
      %1640 = vmatpush.bf16.xpose.msra.mxu0 0
      %1641 = vmatpush.bf16.xpose.msra.mxu0 %v1632
      %1642 = vmatmul.bf16.gmra.mxu0 %v1629
      %v1643 = vpop.f32.mrf.mxu0
      %v1644 = vadd.f32 0.0, %v1643
      %v1645 = vpop.f32.mrf.mxu0
      %1646 = vdwg.mxu0
      %v1647 = vsel %vm1173, %v1644, -inf
      %1648 = vmax.xlane.f32.xlu0 %v1647
      %v1649 = vpop.xlane.xlu0 %1648
      %v1650 = vsub.f32 %v1644, %v1649
      %v1651 = vmul.f32 %v1650, 1.442695
      %v1652 = vpow.pop %v1651
      %v1653 = vsel %vm1173, %v1652, 0.0
      %1654 = vadd.xlane.f32.xlu0 %v1653
      %v1655 = vpop.xlane.xlu0 %1654
      %v1656 = vrcp.pop %v1655
      %v1657 = vmul.f32 %v1652, %v1656
      %v1658 = vpack.c.bf16 %v1657, %v1657
      %1659 = vrot.lane.b32.xlu0 %v1601, 104
      %v1660 = vpop.permute.xlu0 %1659
      %v1662 = vsel %vm1153, %v1658, 0
      %v1665 = vsel %vm1194, %v1660, 0
      %1667 = vmatpush.bf16.msra.mxu0 0
      %1668 = vmatpush.bf16.msra.mxu0 0
      %1669 = vmatpush.bf16.msra.mxu0 0
      %1670 = vmatpush.bf16.msra.mxu0 0
      %1671 = vmatpush.bf16.msra.mxu0 0
      %1672 = vmatpush.bf16.msra.mxu0 0
      %1673 = vmatpush.bf16.msra.mxu0 0
      %1674 = vmatpush.bf16.msra.mxu0 %v1665
      %1675 = vmatmul.bf16.gmra.mxu0 %v1662
      %v1676 = vpop.f32.mrf.mxu0
      %v1677 = vadd.f32 0.0, %v1676
      %v1678 = vpop.f32.mrf.mxu0
      %1679 = vdwg.mxu0
      %1681 = vrot.lane.b32.xlu0 %v1677, 8
      %v1682 = vpop.permute.xlu0 %1681
      %v1684 = vsel %vm1153, %v1620, %v1682
      %s1685 = scalar_lea.vmem %s12, 8
      %v1686 = vld [vmem:[%s1685] sm:$0xf]
      %v1687 = vld [vmem:[%s1685 + $0x4] sm:$0xf]
      %v1688 = vpack.c.bf16 %v1684, %v1684
      %s1689 = scalar_lea.vmem %s13, 1
      %v1690 = vld [vmem:[%s1689] sm:$0x1]
      %v1692 = vperm.slane %v1690, 0
      %v1696 = vunpack.c.l.b16 %v1686
      %v1697 = vunpack.c.l.b16 %v1687
      %v1698 = vpack.c.b16 %v1697, %v1696
      %v1701 = vsel %vm1034, %v1688, 0
      %1703 = vmatpush.bf16.msra.mxu0 0
      %1704 = vmatpush.bf16.msra.mxu0 0
      %1705 = vmatpush.bf16.msra.mxu0 0
      %1706 = vmatpush.bf16.msra.mxu0 0
      %1707 = vmatpush.bf16.msra.mxu0 0
      %1708 = vmatpush.bf16.msra.mxu0 0
      %1709 = vmatpush.bf16.msra.mxu0 0
      %1710 = vmatpush.bf16.msra.mxu0 %v1698
      %1711 = vmatmul.bf16.gmra.mxu0 %v1701
      %v1712 = vpop.f32.mrf.mxu0
      %v1713 = vadd.f32 %v1692, %v1712
      %v1714 = vpop.f32.mrf.mxu0
      %1715 = vdwg.mxu0
      %v1716 = vadd.f32 %v1532, %v1713
      %s1717 = scalar_lea.vmem %s16, 1
      %v1718 = vld [vmem:[%s1717] sm:$0x1]
      %s1719 = scalar_lea.vmem %s17, 1
      %v1720 = vld [vmem:[%s1719] sm:$0x1]
      %v1721 = vsel %vm1083, %v1716, 0.0
      %1722 = vadd.xlane.f32.xlu0 %v1721
      %v1723 = vpop.xlane.xlu0 %1722
      %v1724 = vmul.f32 %v1723, %v1093
      %v1725 = vsub.f32 %v1716, %v1724
      %v1726 = vmul.f32 %v1725, %v1725
      %v1727 = vsel %vm1083, %v1726, 0.0
      %1728 = vadd.xlane.f32.xlu0 %v1727
      %v1729 = vpop.xlane.xlu0 %1728
      %v1730 = vmul.f32 %v1729, %v1093
      %v1731 = vadd.f32 %v1730, 1e-05
      %v1732 = vrsqrt.pop %v1731
      %v1733 = vmul.f32 %v1732, %v1731
      %v1734 = vmul.f32 %v1733, %v1732
      %v1735 = vmul.f32 0.5, %v1734
      %v1736 = vsub.f32 1.5, %v1735
      %v1737 = vmul.f32 %v1732, %v1736
      %vm1738 = vweird.f32 %v1731
      %vm1739 = vweird.f32 %v1732
      %vm1740 = vmor %vm1738, %vm1739
      %v1741 = vsel %vm1740, %v1732, %v1737
      %v1742 = vmul.f32 %v1725, %v1741
      %v1744 = vperm.slane %v1718, 0
      %v1746 = vmul.f32 %v1742, %v1744
      %v1748 = vperm.slane %v1720, 0
      %v1750 = vadd.f32 %v1746, %v1748
      %s1751 = scalar_lea.vmem %s20, 8
      %v1752 = vld [vmem:[%s1751] sm:$0xf]
      %v1753 = vld [vmem:[%s1751 + $0x4] sm:$0xf]
      %v1754 = vpack.c.bf16 %v1750, %v1750
      %s1755 = scalar_lea.vmem %s21, 1
      %v1756 = vld [vmem:[%s1755] sm:$0x1]
      %v1758 = vperm.slane %v1756, 0
      %v1762 = vunpack.c.l.b16 %v1752
      %v1763 = vunpack.c.l.b16 %v1753
      %v1764 = vpack.c.b16 %v1763, %v1762
      %v1767 = vsel %vm1034, %v1754, 0
      %1769 = vmatpush.bf16.msra.mxu0 0
      %1770 = vmatpush.bf16.msra.mxu0 0
      %1771 = vmatpush.bf16.msra.mxu0 0
      %1772 = vmatpush.bf16.msra.mxu0 0
      %1773 = vmatpush.bf16.msra.mxu0 0
      %1774 = vmatpush.bf16.msra.mxu0 0
      %1775 = vmatpush.bf16.msra.mxu0 0
      %1776 = vmatpush.bf16.msra.mxu0 %v1764
      %1777 = vmatmul.bf16.gmra.mxu0 %v1767
      %v1778 = vpop.f32.mrf.mxu0
      %v1779 = vadd.f32 %v1758, %v1778
      %v1780 = vpop.f32.mrf.mxu0
      %1781 = vdwg.mxu0
      %v1782 = vmax.f32 %v1779, 0.0
      %s1783 = scalar_lea.vmem %s22, 16
      %v1784 = vld [vmem:[%s1783] sm:$0xf]
      %v1785 = vld [vmem:[%s1783 + $0x4] sm:$0xf]
      %v1786 = vld [vmem:[%s1783 + $0x8] sm:$0xf]
      %v1787 = vld [vmem:[%s1783 + $0xc] sm:$0xf]
      %v1788 = vpack.c.bf16 %v1782, %v1782
      %s1789 = scalar_lea.vmem %s23, 1
      %v1790 = vld [vmem:[%s1789] sm:$0x1]
      %v1792 = vperm.slane %v1790, 0
      %v1798 = vunpack.c.l.b16 %v1784
      %v1799 = vunpack.c.l.b16 %v1785
      %v1800 = vunpack.c.l.b16 %v1786
      %v1801 = vunpack.c.l.b16 %v1787
      %v1802 = vpack.c.b16 %v1799, %v1798
      %v1803 = vpack.c.b16 %v1801, %v1800
      %v1807 = vsel %vm1386, %v1788, 0
      %1809 = vmatpush.bf16.msra.mxu0 0
      %1810 = vmatpush.bf16.msra.mxu0 0
      %1811 = vmatpush.bf16.msra.mxu0 0
      %1812 = vmatpush.bf16.msra.mxu0 0
      %1813 = vmatpush.bf16.msra.mxu0 0
      %1814 = vmatpush.bf16.msra.mxu0 0
      %1815 = vmatpush.bf16.msra.mxu0 %v1803
      %1816 = vmatpush.bf16.msra.mxu0 %v1802
      %1817 = vmatmul.bf16.gmra.mxu0 %v1807
      %v1818 = vpop.f32.mrf.mxu0
      %v1819 = vadd.f32 %v1792, %v1818
      %v1820 = vpop.f32.mrf.mxu0
      %1821 = vdwg.mxu0
      %v1822 = vadd.f32 %v1750, %v1819
      %s1823 = scalar_lea.vmem %s18, 1
      %v1824 = vld [vmem:[%s1823] sm:$0x1]
      %s1825 = scalar_lea.vmem %s19, 1
      %v1826 = vld [vmem:[%s1825] sm:$0x1]
      %v1827 = vsel %vm1083, %v1822, 0.0
      %1828 = vadd.xlane.f32.xlu0 %v1827
      %v1829 = vpop.xlane.xlu0 %1828
      %v1830 = vmul.f32 %v1829, %v1093
      %v1831 = vsub.f32 %v1822, %v1830
      %v1832 = vmul.f32 %v1831, %v1831
      %v1833 = vsel %vm1083, %v1832, 0.0
      %1834 = vadd.xlane.f32.xlu0 %v1833
      %v1835 = vpop.xlane.xlu0 %1834
      %v1836 = vmul.f32 %v1835, %v1093
      %v1837 = vadd.f32 %v1836, 1e-05
      %v1838 = vrsqrt.pop %v1837
      %v1839 = vmul.f32 %v1838, %v1837
      %v1840 = vmul.f32 %v1839, %v1838
      %v1841 = vmul.f32 0.5, %v1840
      %v1842 = vsub.f32 1.5, %v1841
      %v1843 = vmul.f32 %v1838, %v1842
      %vm1844 = vweird.f32 %v1837
      %vm1845 = vweird.f32 %v1838
      %vm1846 = vmor %vm1844, %vm1845
      %v1847 = vsel %vm1846, %v1838, %v1843
      %v1848 = vmul.f32 %v1831, %v1847
      %v1850 = vperm.slane %v1824, 0
      %v1852 = vmul.f32 %v1848, %v1850
      %v1854 = vperm.slane %v1826, 0
      %v1856 = vadd.f32 %v1852, %v1854
      %v1857 = vld [vmem:[%s24] sm:$0x1]
      %v1858 = vld [vmem:[%s25] sm:$0x1]
      %v1859 = vsel %vm1083, %v1856, 0.0
      %1860 = vadd.xlane.f32.xlu0 %v1859
      %v1861 = vpop.xlane.xlu0 %1860
      %v1862 = vmul.f32 %v1861, %v1093
      %v1863 = vsub.f32 %v1856, %v1862
      %v1864 = vmul.f32 %v1863, %v1863
      %v1865 = vsel %vm1083, %v1864, 0.0
      %1866 = vadd.xlane.f32.xlu0 %v1865
      %v1867 = vpop.xlane.xlu0 %1866
      %v1868 = vmul.f32 %v1867, %v1093
      %v1869 = vadd.f32 %v1868, 1e-05
      %v1870 = vrsqrt.pop %v1869
      %v1871 = vmul.f32 %v1870, %v1869
      %v1872 = vmul.f32 %v1871, %v1870
      %v1873 = vmul.f32 0.5, %v1872
      %v1874 = vsub.f32 1.5, %v1873
      %v1875 = vmul.f32 %v1870, %v1874
      %vm1876 = vweird.f32 %v1869
      %vm1877 = vweird.f32 %v1870
      %vm1878 = vmor %vm1876, %vm1877
      %v1879 = vsel %vm1878, %v1870, %v1875
      %v1880 = vmul.f32 %v1863, %v1879
      %v1882 = vperm.slane %v1857, 0
      %v1884 = vmul.f32 %v1880, %v1882
      %v1886 = vperm.slane %v1858, 0
      %v1888 = vadd.f32 %v1884, %v1886
      %v1889 = vld [vmem:[%s26] sm:$0xf]
      %v1890 = vld [vmem:[%s26 + $0x4] sm:$0xf]
      %v1891 = vpack.c.bf16 %v1888, %v1888
      %v1892 = vld [vmem:[%s27] sm:$0x1]
      %v1894 = vperm.slane %v1892, 0
      %v1898 = vunpack.c.l.b16 %v1889
      %v1899 = vunpack.c.l.b16 %v1890
      %v1900 = vpack.c.b16 %v1899, %v1898
      %v1903 = vsel %vm1034, %v1891, 0
      %1905 = vmatpush.bf16.msra.mxu0 0
      %1906 = vmatpush.bf16.msra.mxu0 0
      %1907 = vmatpush.bf16.msra.mxu0 0
      %1908 = vmatpush.bf16.msra.mxu0 0
      %1909 = vmatpush.bf16.msra.mxu0 0
      %1910 = vmatpush.bf16.msra.mxu0 0
      %1911 = vmatpush.bf16.msra.mxu0 0
      %1912 = vmatpush.bf16.msra.mxu0 %v1900
      %1913 = vmatmul.bf16.gmra.mxu0 %v1903
      %v1914 = vpop.f32.mrf.mxu0
      %v1915 = vadd.f32 %v1894, %v1914
      %v1916 = vpop.f32.mrf.mxu0
      %1917 = vdwg.mxu0
      %v1918 = vmax.f32 %v1915, 0.0
      %v1919 = vand.u32 2147483647, %v1915
      %v1920 = vsub.f32 0.0, %v1919
      %v1921 = vmul.f32 %v1920, 1.442695
      %v1922 = vpow.pop %v1921
      %v1923 = vadd.f32 %v1922, 1.0
      %v1924 = vlog2.pop %v1923
      %v1925 = vmul.f32 %v1924, 0.6931472
      %v1926 = vadd.f32 %v1918, %v1925
      %v1927 = vld [vmem:[%s938] sm:$0x7]
      %1929 = vrot.lane.b32.xlu0 %v1927, 1
      %v1930 = vpop.permute.xlu0 %1929
      %v1932 = vmul.f32 %v1926, %v1930
      %1934 = vrot.lane.b32.xlu0 %v1932, 127
      %v1935 = vpop.permute.xlu0 %1934
      %v1937 = vadd.f32 %v1915, %v1935
      %v1939 = vmul.f32 %v1937, %v996
      %s1940 = sadd.s32 %s44, 11
      %v1941 = vstv %s1940
      %vm1942 = vcmp.eq.s32.totalorder %v957, %v1941
      %1944 = vset.pattern.permute.xlu0 0
      %1945 = vperm.xlu0 %1944, %v1939
      %v1946 = vpop.permute.xlu0 %1945
      %v1948 = vsel %vm1942, %v1946, %v954
      %1949 = vst.msk [vmem:[#allocation2] sm:$0x7] %vm965, %v1948
      %p1950 = scmp.eq.s32.totalorder %s44, 3
      // Predicated region
      $region137: #{forward.3} parent=131 // pred_check
        %p1951 = pneg %p1950
      $region138: #{forward.3} parent=131 // pred_check_branch
        %1953 = sbr.rel (%p1951) target = $region140
      $region139: #{forward.3} parent=131 // pred_region
        %1955 = vrot.lane.b32.xlu0 %v1948, 117
        %v1956 = vpop.permute.xlu0 %1955
        %vm1958 = vcmask 26624
        %1959 = vst.msk [vmem:[%s942] sm:$0x7] %vm1958, %v1956
      $region140: #{forward.3} parent=131 // pred_fallthru
        _
      %p1960 = scmp.lt.s32.totalorder %s43, 1
      %s1961 = scalar_select %p1960, %s43, 1
      %s1962 = smul.addr %s1961, 4
      %s1963 = scalar_lea.vmem %s28, %s1962
      // Predicated region
      $region141: #{forward.3} parent=131 // pred_check
        %p1964 = pneg %p686
      $region142: #{forward.3} parent=131 // pred_check_branch
        %1966 = sbr.rel (%p1964) target = $region144
      $region143: #{forward.3} parent=131 // pred_region
        _
      $region144: #{forward.3} parent=131 // pred_fallthru
        _
    $region132: #{forward.3} parent=5 // pred_fallthru
      _
    %p1967 = scmp.le.s32.totalorder 2, %s34
    // Predicated region
    $region145: #{forward.3} parent=5 // pred_check
      %p1968 = pneg %p1967
    $region146: #{forward.3} parent=5 // pred_check_branch
      %1970 = sbr.rel (%p1968) target = $region148
    $region147: #{forward.3} parent=5 // pred_region
      %s1971 = ssub.s32 %s34, 2
      // Predicated region
      $region149: #{forward.3} parent=147 // pred_check
        %p1972 = pneg %p692
      $region150: #{forward.3} parent=147 // pred_check_branch
        %1974 = sbr.rel (%p1972) target = $region152
      $region151: #{forward.3} parent=147 // pred_region
        %p1975 = scmp.lt.s32.totalorder %s45, 1
        %s1976 = scalar_select %p1975, %s45, 1
        %s1977 = smul.addr %s1976, 4
        %s1978 = scalar_lea.vmem %s28, %s1977
      $region152: #{forward.3} parent=147 // pred_fallthru
        _
    $region148: #{forward.3} parent=5 // pred_fallthru
      _
  $region6: #{forward.3} parent=0 // loop_footer
    %s38 = sadd.s32 1, %s34
  $region7: #{forward.3} parent=0 // loop_footer_branch
    %33 = sbr.rel target = $region3
  $region8: #{forward.3} parent=0 // loop_exit
    _

</llo_original>
